<compile_context>
chip_gen: v7x
topology: tpu7x:2x2x1
jax: 0.10.0
libtpu: 0.0.40
codegen_flags: <defaults>
</compile_context>

<pallas_src>
import jax
import jax.numpy as jnp
from jax.experimental import pallas as pl
from jax.experimental.pallas import tpu as pltpu

# ----------------- config (small synthetic shapes) -----------------
B, H, W = 2, 8, 8
HW = H * W
D = 32            # emb_size == visudim == textdim (forward asserts Dvisu == Dlang)
N = 8             # number of word tokens
DH = D // 2       # emb_size // 2 (attn_map output channels)
COORD = 8         # fcoord channels
NFILM = 2
EPS_IN = 1e-5     # InstanceNorm2d eps

# ----------------- packed per-hop weight canvas layout (rows x PW lanes) -----------------
PW = 64                       # widest sub-matrix (w_gd) is 2*D = 64 lanes
R_WAM, R_BAM = 0, 64          # attn_map  Conv1d(2D -> DH, k=1): weight (64,16), bias (1,16)
R_WAS, R_BAS = 72, 88         # attn_score Conv1d(DH -> 1, k=1): weight (16,1),  bias (1,1)
R_WGD, R_BGD = 96, 128        # gamme_decode Linear(D -> 2D):    weight (32,64), bias (1,64)
R_WC1V, R_WC1C, R_BC1 = 136, 168, 176   # conv1 Conv2d(D+8 -> D, k=1): visual / coord / bias
WPK_ROWS = 184                # multiple of 8; all row offsets are sublane-aligned

W3_ROWS = 9 * D               # 288: conv3x3 weight, rows [t*D:(t+1)*D] = tap t=(dy+1)*3+(dx+1)
W3PK_ROWS = W3_ROWS + 8       # bias stored in row 288


def _two_tensorcores():
    """True on chips with 2 TensorCores per chip (v7x) where batch-parallel grid wins."""
    try:
        kind = jax.devices()[0].device_kind.lower().replace(' ', '')
    except Exception:
        return False
    return ('v7' in kind) or ('tpu7' in kind)


# v7x: grid=(B,) so the two batch elements land on the two TensorCores.
# v5e/v6e (1 TC): collapse the batch into one grid step (no per-step overhead, M=128 matmuls).
BATCH_PER_STEP = 1 if _two_tensorcores() else B


# ----------------- fused multihop kernel -----------------
def _multihop_kernel(fv_ref, fw_ref, fc_ref, m2_ref, wpk_ref, w3pk_ref,
                     x_out_ref, score_out_ref):
    BB = fv_ref.shape[0] // HW          # batch elements handled by this grid step
    BHW = BB * HW
    BN = BB * N

    fw = fw_ref[...]                    # (BN, D)   word features (flat over batch)
    m2 = m2_ref[...]                    # (BN, 1)   word mask with CLS/SEP already zeroed
    fc16 = fc_ref[...].astype(jnp.bfloat16)   # (BHW, COORD) coord half of conv1 (cast once)

    # Single resident iota: per-row position within its image (handles the batch-collapsed
    # layout; all 3x3-tap boundary masks derive from it with cheap compares, no per-tap div/mod).
    pos = jax.lax.broadcasted_iota(jnp.int32, (BHW, 1), 0) % HW

    def film_hop(x, context_score, h):
        # x: (BHW, D) f32 visual map; context_score: (BN, 1); h: hop index (static)

        # ---- language attention (fusion='cat'), fused into ONE (BN,2D)x(2D,DH) MXU dot ----
        visu_tiles = []
        for b in range(BB):
            vm = jnp.mean(x[b * HW:(b + 1) * HW], axis=0, keepdims=True)     # (1, D) tile_visu
            visu_tiles.append(jnp.broadcast_to(vm, (N, D)))
        visu_tile = visu_tiles[0] if BB == 1 else jnp.concatenate(visu_tiles, axis=0)
        ctile = jnp.concatenate([visu_tile, fw * context_score], axis=1)     # (BN, 2D)
        feat = jnp.tanh(
            jnp.dot(ctile, wpk_ref[h, R_WAM:R_WAM + 2 * D, 0:DH],
                    preferred_element_type=jnp.float32)
            + wpk_ref[h, R_BAM:R_BAM + 1, 0:DH])                             # (BN, DH)
        score = (jnp.dot(feat, wpk_ref[h, R_WAS:R_WAS + DH, 0:1],
                         preferred_element_type=jnp.float32)
                 + wpk_ref[h, R_BAS:R_BAS + 1, 0:1])                         # (BN, 1)

        # ---- mask_softmax (temperature=10, clssep=False, lstm=False) + attended language ----
        ms_parts, lang_parts = [], []
        for b in range(BB):
            sl = slice(b * N, (b + 1) * N)
            sc = score[sl] * 10.0
            sc = sc - jnp.max(sc, axis=0, keepdims=True)
            e = jnp.exp(sc)
            sm = e / jnp.sum(e, axis=0, keepdims=True)                       # softmax over tokens
            msb = sm * m2[sl]
            msb = msb / (jnp.sum(msb, axis=0, keepdims=True) + 1e-8)         # (N, 1)
            ms_parts.append(msb)
            lang_parts.append(jnp.sum(fw[sl] * msb, axis=0, keepdims=True))  # (1, D) attn_lang
        ms = ms_parts[0] if BB == 1 else jnp.concatenate(ms_parts, axis=0)       # (BN, 1)
        attn_lang = lang_parts[0] if BB == 1 else jnp.concatenate(lang_parts, axis=0)  # (BB, D)

        # ---- gamma_decode (Linear D -> 2D), batched over BB rows ----
        fp = (jnp.dot(attn_lang, wpk_ref[h, R_WGD:R_WGD + D, 0:2 * D],
                      preferred_element_type=jnp.float32)
              + wpk_ref[h, R_BGD:R_BGD + 1, 0:2 * D])                        # (BB, 2D)
        gam = jnp.tanh(fp[:, :D])                                            # (BB, D)
        bet = jnp.tanh(fp[:, D:])                                            # (BB, D)

        # ---- conv1 (1x1, visual + coord halves): bf16 MXU operands, f32 accumulation ----
        y = (jnp.dot(x.astype(jnp.bfloat16),
                     wpk_ref[h, R_WC1V:R_WC1V + D, 0:D].astype(jnp.bfloat16),
                     preferred_element_type=jnp.float32)
             + jnp.dot(fc16,
                       wpk_ref[h, R_WC1C:R_WC1C + COORD, 0:D].astype(jnp.bfloat16),
                       preferred_element_type=jnp.float32)
             + wpk_ref[h, R_BC1:R_BC1 + 1, 0:D])                             # (BHW, D)

        # ---- per-batch InstanceNorm + FiLM + ReLU + residual (static sublane slices) ----
        outs = []
        for b in range(BB):
            sl = slice(b * HW, (b + 1) * HW)
            yb = y[sl]
            mu = jnp.mean(yb, axis=0, keepdims=True)                         # per-channel over HW
            var = jnp.mean(jnp.square(yb - mu), axis=0, keepdims=True)
            yn = (yb - mu) * jax.lax.rsqrt(var + EPS_IN)
            f = jnp.maximum(gam[b:b + 1] * yn + bet[b:b + 1], 0.0)           # FiLM + ReLU
            outs.append(x[sl] + f)                                           # residual (weight=None)
        xo = outs[0] if BB == 1 else jnp.concatenate(outs, axis=0)           # (BHW, D)
        return xo, score, ms

    # ---------------- hop 0 (context_score = ones) ----------------
    fv = fv_ref[...]                                                         # (BHW, D)
    x1, score0, ms0 = film_hop(fv, jnp.ones((BN, 1), jnp.float32), 0)

    # ---------------- 3x3 conv (pad=1) + ReLU between hops: per-tap MXU accumulation ---------
    # Each tap = sublane roll + boundary mask, immediately accumulated via one small bf16 dot.
    # Rolls wrapping across the batch/array boundary are always zeroed by the boundary masks.
    acc = None
    t = 0
    for dy in (-1, 0, 1):
        for dx in (-1, 0, 1):
            off = dy * W + dx
            shifted = x1 if off == 0 else pltpu.roll(x1, shift=(-off) % BHW, axis=0)
            checks = []
            if dy == -1:
                checks.append(pos >= W)
            elif dy == 1:
                checks.append(pos < HW - W)
            if dx != 0:
                rxw = pos % W
                checks.append(rxw > 0 if dx == -1 else rxw < W - 1)
            if checks:
                valid = checks[0]
                for c in checks[1:]:
                    valid = valid & c
                tap = jnp.where(valid, shifted, 0.0)
            else:
                tap = shifted
            contrib = jnp.dot(tap.astype(jnp.bfloat16),
                              w3pk_ref[t * D:(t + 1) * D, 0:D].astype(jnp.bfloat16),
                              preferred_element_type=jnp.float32)
            acc = contrib if acc is None else acc + contrib
            t += 1
    acc = acc + w3pk_ref[W3_ROWS:W3_ROWS + 1, 0:D]                           # conv3x3 bias
    # TODO(synk): ConvBatchNormReLU undefined in source; Conv3x3 + identity BN (eval) + ReLU.
    xc = jnp.maximum(acc, 0.0)                                               # (BHW, D)

    # ---------------- hop 1 (context_score = 1 - clamp(mask_softmax(score0), 0, 1)) ----------
    cs1 = 1.0 - jnp.clip(ms0, 0.0, 1.0)                                      # (BN, 1)
    x2, score1, _ = film_hop(xc, cs1, 1)

    x_out_ref[...] = x2                                                      # (BHW, D)
    score_out_ref[...] = jnp.concatenate([score0, score1], axis=1)           # (BN, NFILM)


def _multihop_pallas(fvisu, fword, fcoord, m2, wpk, w3pk):
    bb = BATCH_PER_STEP
    return pl.pallas_call(
        _multihop_kernel,
        out_shape=(jax.ShapeDtypeStruct((B * HW, D), jnp.float32),
                   jax.ShapeDtypeStruct((B * N, NFILM), jnp.float32)),
        grid=(B // bb,),
        in_specs=[
            pl.BlockSpec((bb * HW, D), lambda b: (b, 0)),                    # fvisu (flat)
            pl.BlockSpec((bb * N, D), lambda b: (b, 0)),                     # fword (flat)
            pl.BlockSpec((bb * HW, COORD), lambda b: (b, 0)),                # fcoord (flat)
            pl.BlockSpec((bb * N, 1), lambda b: (b, 0)),                     # m2 (masked word mask)
            pl.BlockSpec((NFILM, WPK_ROWS, PW), lambda b: (0, 0, 0)),        # packed per-hop weights
            pl.BlockSpec((W3PK_ROWS, D), lambda b: (0, 0)),                  # packed conv3x3 w+b
        ],
        out_specs=(pl.BlockSpec((bb * HW, D), lambda b: (b, 0)),
                   pl.BlockSpec((bb * N, NFILM), lambda b: (b, 0))),
        compiler_params=pltpu.CompilerParams(
            dimension_semantics=("parallel",)),
    )(fvisu, fword, fcoord, m2, wpk, w3pk)


# ----------------- jitted forward (glue is one XLA dispatch) -----------------
@jax.jit
def multihop_forward(fvisu_nchw, fword, fcoord_nchw, word_mask, wpk, w3pk):
    fvisu = jnp.transpose(fvisu_nchw, (0, 2, 3, 1)).reshape(B * HW, D)
    fcoord = jnp.transpose(fcoord_nchw, (0, 2, 3, 1)).reshape(B * HW, COORD)
    fword_flat = fword.reshape(B * N, D)

    # mask_softmax preprocessing (clssep=False, lstm=False): zero CLS (idx 0), then zero the
    # SEP position (index == remaining count of 1s).  Depends only on word_mask -> hoisted here.
    m = word_mask[:, :N].astype(jnp.float32)
    m0 = m.at[:, 0].set(0.0)
    sep_idx = jnp.sum(m0, axis=1).astype(jnp.int32)
    m2 = (m0 * (1.0 - jax.nn.one_hot(sep_idx, N, dtype=jnp.float32))).reshape(B * N, 1)

    x, scores = _multihop_pallas(fvisu, fword_flat, fcoord, m2, wpk, w3pk)

    intmd_feat = [jnp.transpose(x.reshape(B, H, W, D), (0, 3, 1, 2))]        # back to NCHW
    sc = scores.reshape(B, N, NFILM)
    attnscore_list = [sc[:, :, i].reshape(B, N, 1, 1) for i in range(NFILM)]
    return intmd_feat, attnscore_list


# ----------------- one-time parameter packing (outside jit) -----------------
def pack_params(params):
    def pack_hop(p):
        c = jnp.zeros((WPK_ROWS, PW), jnp.float32)
        c = c.at[R_WAM:R_WAM + 2 * D, 0:DH].set(p['w_am'])
        c = c.at[R_BAM, 0:DH].set(p['b_am'][0])
        c = c.at[R_WAS:R_WAS + DH, 0:1].set(p['w_as'])
        c = c.at[R_BAS, 0:1].set(p['b_as'][0])
        c = c.at[R_WGD:R_WGD + D, 0:2 * D].set(p['w_gd'])
        c = c.at[R_BGD, 0:2 * D].set(p['b_gd'][0])
        c = c.at[R_WC1V:R_WC1V + D, 0:D].set(p['w_c1v'])
        c = c.at[R_WC1C:R_WC1C + COORD, 0:D].set(p['w_c1c'])
        c = c.at[R_BC1, 0:D].set(p['b_c1'][0])
        return c

    wpk = jnp.stack([pack_hop(params['film0']), pack_hop(params['film1'])], axis=0)
    w3pk = jnp.zeros((W3PK_ROWS, D), jnp.float32)
    w3pk = w3pk.at[0:W3_ROWS, :].set(params['conv1']['w'])
    w3pk = w3pk.at[W3_ROWS, :].set(params['conv1']['b'][0])
    return wpk, w3pk


# ----------------- deterministic parameter init -----------------
def kaiming_uniform(key, shape, fan_in):
    bound = (6.0 / fan_in) ** 0.5
    return jax.random.uniform(key, shape, jnp.float32, -bound, bound)


def init_film_params(key):
    ks = jax.random.split(key, 9)
    return dict(
        w_am=kaiming_uniform(ks[0], (2 * D, DH), 2 * D),          # attn_map Conv1d(2D -> DH, k=1)
        b_am=jax.random.uniform(ks[1], (1, DH), jnp.float32, -0.1, 0.1),
        w_as=kaiming_uniform(ks[2], (DH, 1), DH),                 # attn_score Conv1d(DH -> 1, k=1)
        b_as=jax.random.uniform(ks[3], (1, 1), jnp.float32, -0.1, 0.1),
        w_gd=kaiming_uniform(ks[4], (D, 2 * D), D),               # gamme_decode Linear(D -> 2D)
        b_gd=jax.random.uniform(ks[5], (1, 2 * D), jnp.float32, -0.1, 0.1),
        w_c1v=kaiming_uniform(ks[6], (D, D), D + COORD),          # conv1 Conv2d(D+8 -> D): visual half
        w_c1c=kaiming_uniform(ks[7], (COORD, D), D + COORD),      # conv1 Conv2d(D+8 -> D): coord half
        b_c1=jax.random.uniform(ks[8], (1, D), jnp.float32, -0.1, 0.1),
    )


if __name__ == "__main__":
    key = jax.random.PRNGKey(0)
    kv, kw, kc, kp = jax.random.split(key, 4)
    fvisu = jax.random.normal(kv, (B, D, H, W), jnp.float32)        # NCHW, Dvisu == emb_size
    fword = jax.random.normal(kw, (B, N, D), jnp.float32)           # (B, N, Dlang)
    fcoord = jax.random.normal(kc, (B, COORD, H, W), jnp.float32)   # NCHW, 8 coord channels
    word_mask = jnp.array([[1, 1, 1, 1, 1, 1, 0, 0],
                           [1, 1, 1, 1, 1, 1, 1, 1]], jnp.int32)

    kp0, kp1, kp2 = jax.random.split(kp, 3)
    params = {
        'film0': init_film_params(kp0),
        # 3x3 conv weight pre-flattened to (9*D, D): rows [t*D:(t+1)*D] are tap t=(dy+1)*3+(dx+1).
        'conv1': {'w': kaiming_uniform(kp1, (9 * D, D), 9 * D),
                  'b': jnp.zeros((1, D), jnp.float32)},
        'film1': init_film_params(kp2),
    }
    wpk, w3pk = pack_params(params)

    intmd_feat, attnscore_list = multihop_forward(fvisu, fword, fcoord, word_mask, wpk, w3pk)
    jax.block_until_ready(intmd_feat[0])
    jax.block_until_ready(attnscore_list[-1])
    assert intmd_feat[0].shape == (B, D, H, W)
    assert attnscore_list[0].shape == (B, N, 1, 1)
    print("KERNEL_OK")
</pallas_src>

<mosaic_0001>
module attributes {stable_mosaic.version = 11 : i64} {
  func.func @_multihop_kernel(%arg0: i32, %arg1: memref<128x32xf32, #tpu.memory_space<vmem>>, %arg2: memref<16x32xf32, #tpu.memory_space<vmem>>, %arg3: memref<128x8xf32, #tpu.memory_space<vmem>>, %arg4: memref<16x1xf32, #tpu.memory_space<vmem>>, %arg5: memref<2x184x64xf32, #tpu.memory_space<vmem>>, %arg6: memref<296x32xf32, #tpu.memory_space<vmem>>, %arg7: memref<128x32xf32, #tpu.memory_space<vmem>>, %arg8: memref<16x2xf32, #tpu.memory_space<vmem>>) attributes {dimension_semantics = [#tpu.dimension_semantics<parallel>], iteration_bounds = array<i64: 1>, scalar_prefetch = 0 : i64, scratch_operands = 0 : i64, tpu.core_type = #tpu.core_type<tc>, window_params = [{transform_indices = @transform_0, window_bounds = array<i64: 128, 32>}, {transform_indices = @transform_1, window_bounds = array<i64: 16, 32>}, {transform_indices = @transform_2, window_bounds = array<i64: 128, 8>}, {transform_indices = @transform_3, window_bounds = array<i64: 16, 1>}, {pipeline_mode = #tpu.pipeline_mode<synchronous>, transform_indices = @transform_4, window_bounds = array<i64: 2, 184, 64>}, {pipeline_mode = #tpu.pipeline_mode<synchronous>, transform_indices = @transform_5, window_bounds = array<i64: 296, 32>}, {transform_indices = @transform_6, window_bounds = array<i64: 128, 32>}, {transform_indices = @transform_7, window_bounds = array<i64: 16, 2>}]} {
    %c0 = arith.constant 0 : index
    %c0_0 = arith.constant 0 : index
    %0 = vector.load %arg2[%c0, %c0_0] : memref<16x32xf32, #tpu.memory_space<vmem>>, vector<16x32xf32>
    %c0_1 = arith.constant 0 : index
    %c0_2 = arith.constant 0 : index
    %1 = vector.load %arg4[%c0_1, %c0_2] : memref<16x1xf32, #tpu.memory_space<vmem>>, vector<16x1xf32>
    %c0_3 = arith.constant 0 : index
    %c0_4 = arith.constant 0 : index
    %2 = vector.load %arg3[%c0_3, %c0_4] : memref<128x8xf32, #tpu.memory_space<vmem>>, vector<128x8xf32>
    %3 = arith.truncf %2 : vector<128x8xf32> to vector<128x8xbf16>
    %4 = tpu.iota {dimensions = array<i32: 0>} : vector<128x1xi32>
    %c64_i32 = arith.constant 64 : i32
    %c0_i32 = arith.constant 0 : i32
    %5 = arith.cmpi eq, %c64_i32, %c0_i32 : i32
    %c1_i32 = arith.constant 1 : i32
    %6 = arith.select %5, %c1_i32, %c64_i32 : i32
    %7 = vector.broadcast %6 : i32 to vector<128x1xi32>
    %8 = arith.remsi %4, %7 : vector<128x1xi32>
    %c0_i32_5 = arith.constant 0 : i32
    %9 = vector.broadcast %c0_i32_5 : i32 to vector<128x1xi32>
    %10 = arith.cmpi ne, %8, %9 : vector<128x1xi32>
    %c0_i32_6 = arith.constant 0 : i32
    %11 = vector.broadcast %c0_i32_6 : i32 to vector<128x1xi32>
    %12 = arith.cmpi slt, %8, %11 : vector<128x1xi32>
    %c0_i32_7 = arith.constant 0 : i32
    %13 = arith.cmpi slt, %6, %c0_i32_7 : i32
    %14 = vector.broadcast %13 : i1 to vector<128x1xi1>
    %15 = vector.broadcast %14 : vector<128x1xi1> to vector<128x1xi1>
    %16 = arith.xori %12, %15 : vector<128x1xi1>
    %17 = arith.andi %16, %10 : vector<128x1xi1>
    %18 = vector.broadcast %6 : i32 to vector<128x1xi32>
    %19 = arith.addi %8, %18 : vector<128x1xi32>
    %20 = arith.select %17, %19, %8 : vector<128x1xi1>, vector<128x1xi32>
    %c0_8 = arith.constant 0 : index
    %c0_9 = arith.constant 0 : index
    %21 = vector.load %arg1[%c0_8, %c0_9] : memref<128x32xf32, #tpu.memory_space<vmem>>, vector<128x32xf32>
    %cst = arith.constant 1.000000e+00 : f32
    %22 = vector.broadcast %cst : f32 to vector<16x1xf32>
    %23 = vector.extract_strided_slice %21 {offsets = [0, 0], sizes = [64, 32], strides = [1, 1]} : vector<128x32xf32> to vector<64x32xf32>
    %cst_10 = arith.constant dense<0.000000e+00> : vector<32xf32>
    %24 = vector.multi_reduction <add>, %23, %cst_10 [0] : vector<64x32xf32> to vector<32xf32>
    %25 = vector.shape_cast %24 : vector<32xf32> to vector<1x32xf32>
    %cst_11 = arith.constant 6.400000e+01 : f32
    %26 = vector.broadcast %cst_11 : f32 to vector<1x32xf32>
    %27 = arith.divf %25, %26 : vector<1x32xf32>
    %28 = vector.shape_cast %27 : vector<1x32xf32> to vector<1x32xf32>
    %29 = vector.broadcast %28 : vector<1x32xf32> to vector<8x32xf32>
    %30 = vector.extract_strided_slice %21 {offsets = [64, 0], sizes = [64, 32], strides = [1, 1]} : vector<128x32xf32> to vector<64x32xf32>
    %cst_12 = arith.constant dense<0.000000e+00> : vector<32xf32>
    %31 = vector.multi_reduction <add>, %30, %cst_12 [0] : vector<64x32xf32> to vector<32xf32>
    %32 = vector.shape_cast %31 : vector<32xf32> to vector<1x32xf32>
    %cst_13 = arith.constant 6.400000e+01 : f32
    %33 = vector.broadcast %cst_13 : f32 to vector<1x32xf32>
    %34 = arith.divf %32, %33 : vector<1x32xf32>
    %35 = vector.shape_cast %34 : vector<1x32xf32> to vector<1x32xf32>
    %36 = vector.broadcast %35 : vector<1x32xf32> to vector<8x32xf32>
    %37 = tpu.concatenate %29, %36 in 0 : vector<8x32xf32>, vector<8x32xf32> -> vector<16x32xf32>
    %38 = vector.broadcast %22 : vector<16x1xf32> to vector<16x32xf32>
    %39 = arith.mulf %0, %38 : vector<16x32xf32>
    %40 = tpu.concatenate %37, %39 in 1 : vector<16x32xf32>, vector<16x32xf32> -> vector<16x64xf32>
    %c0_14 = arith.constant 0 : index
    %c0_15 = arith.constant 0 : index
    %c0_16 = arith.constant 0 : index
    %41 = vector.load %arg5[%c0_14, %c0_15, %c0_16] : memref<2x184x64xf32, #tpu.memory_space<vmem>>, vector<1x64x16xf32>
    %42 = vector.shape_cast %41 : vector<1x64x16xf32> to vector<64x16xf32>
    %cst_17 = arith.constant dense<0.000000e+00> : vector<16x16xf32>
    %43 = tpu.matmul %40, %42, %cst_17 {dimension_numbers = #tpu.dot_dimension_numbers<[1], [0], [0], [1], [0, 0, 1, 1], [], []>} : vector<16x64xf32>, vector<64x16xf32>, vector<16x16xf32> -> vector<16x16xf32>
    %c0_18 = arith.constant 0 : index
    %c64 = arith.constant 64 : index
    %c0_19 = arith.constant 0 : index
    %44 = vector.load %arg5[%c0_18, %c64, %c0_19] : memref<2x184x64xf32, #tpu.memory_space<vmem>>, vector<1x1x16xf32>
    %45 = vector.shape_cast %44 : vector<1x1x16xf32> to vector<1x16xf32>
    %46 = vector.broadcast %45 : vector<1x16xf32> to vector<16x16xf32>
    %47 = arith.addf %43, %46 : vector<16x16xf32>
    %48 = math.tanh %47 : vector<16x16xf32>
    %c0_20 = arith.constant 0 : index
    %c72 = arith.constant 72 : index
    %c0_21 = arith.constant 0 : index
    %49 = vector.load %arg5[%c0_20, %c72, %c0_21] : memref<2x184x64xf32, #tpu.memory_space<vmem>>, vector<1x16x1xf32>
    %50 = vector.shape_cast %49 : vector<1x16x1xf32> to vector<16x1xf32>
    %cst_22 = arith.constant dense<0.000000e+00> : vector<16x1xf32>
    %51 = tpu.matmul %48, %50, %cst_22 {dimension_numbers = #tpu.dot_dimension_numbers<[1], [0], [0], [1], [0, 0, 1, 1], [], []>} : vector<16x16xf32>, vector<16x1xf32>, vector<16x1xf32> -> vector<16x1xf32>
    %c0_23 = arith.constant 0 : index
    %c88 = arith.constant 88 : index
    %c0_24 = arith.constant 0 : index
    %52 = vector.load %arg5[%c0_23, %c88, %c0_24] : memref<2x184x64xf32, #tpu.memory_space<vmem>>, vector<1x1x1xf32>
    %53 = vector.shape_cast %52 : vector<1x1x1xf32> to vector<1x1xf32>
    %54 = vector.broadcast %53 : vector<1x1xf32> to vector<16x1xf32>
    %55 = arith.addf %51, %54 : vector<16x1xf32>
    %56 = vector.extract_strided_slice %55 {offsets = [0, 0], sizes = [8, 1], strides = [1, 1]} : vector<16x1xf32> to vector<8x1xf32>
    %cst_25 = arith.constant 1.000000e+01 : f32
    %57 = vector.broadcast %cst_25 : f32 to vector<8x1xf32>
    %58 = arith.mulf %56, %57 : vector<8x1xf32>
    %cst_26 = arith.constant dense<0xFF800000> : vector<1xf32>
    %59 = vector.multi_reduction <maximumf>, %58, %cst_26 [0] : vector<8x1xf32> to vector<1xf32>
    %60 = vector.shape_cast %59 : vector<1xf32> to vector<1x1xf32>
    %61 = vector.broadcast %60 : vector<1x1xf32> to vector<8x1xf32>
    %62 = arith.subf %58, %61 : vector<8x1xf32>
    %63 = math.exp %62 : vector<8x1xf32>
    %cst_27 = arith.constant dense<0.000000e+00> : vector<1xf32>
    %64 = vector.multi_reduction <add>, %63, %cst_27 [0] : vector<8x1xf32> to vector<1xf32>
    %65 = vector.shape_cast %64 : vector<1xf32> to vector<1x1xf32>
    %66 = vector.broadcast %65 : vector<1x1xf32> to vector<8x1xf32>
    %67 = arith.divf %63, %66 : vector<8x1xf32>
    %68 = vector.extract_strided_slice %1 {offsets = [0, 0], sizes = [8, 1], strides = [1, 1]} : vector<16x1xf32> to vector<8x1xf32>
    %69 = arith.mulf %67, %68 : vector<8x1xf32>
    %cst_28 = arith.constant dense<0.000000e+00> : vector<1xf32>
    %70 = vector.multi_reduction <add>, %69, %cst_28 [0] : vector<8x1xf32> to vector<1xf32>
    %71 = vector.shape_cast %70 : vector<1xf32> to vector<1x1xf32>
    %cst_29 = arith.constant 9.99999993E-9 : f32
    %72 = vector.broadcast %cst_29 : f32 to vector<1x1xf32>
    %73 = arith.addf %71, %72 : vector<1x1xf32>
    %74 = vector.broadcast %73 : vector<1x1xf32> to vector<8x1xf32>
    %75 = arith.divf %69, %74 : vector<8x1xf32>
    %76 = vector.extract_strided_slice %0 {offsets = [0, 0], sizes = [8, 32], strides = [1, 1]} : vector<16x32xf32> to vector<8x32xf32>
    %77 = vector.broadcast %75 : vector<8x1xf32> to vector<8x32xf32>
    %78 = arith.mulf %76, %77 : vector<8x32xf32>
    %cst_30 = arith.constant dense<0.000000e+00> : vector<32xf32>
    %79 = vector.multi_reduction <add>, %78, %cst_30 [0] : vector<8x32xf32> to vector<32xf32>
    %80 = vector.shape_cast %79 : vector<32xf32> to vector<1x32xf32>
    %81 = vector.extract_strided_slice %55 {offsets = [8, 0], sizes = [8, 1], strides = [1, 1]} : vector<16x1xf32> to vector<8x1xf32>
    %cst_31 = arith.constant 1.000000e+01 : f32
    %82 = vector.broadcast %cst_31 : f32 to vector<8x1xf32>
    %83 = arith.mulf %81, %82 : vector<8x1xf32>
    %cst_32 = arith.constant dense<0xFF800000> : vector<1xf32>
    %84 = vector.multi_reduction <maximumf>, %83, %cst_32 [0] : vector<8x1xf32> to vector<1xf32>
    %85 = vector.shape_cast %84 : vector<1xf32> to vector<1x1xf32>
    %86 = vector.broadcast %85 : vector<1x1xf32> to vector<8x1xf32>
    %87 = arith.subf %83, %86 : vector<8x1xf32>
    %88 = math.exp %87 : vector<8x1xf32>
    %cst_33 = arith.constant dense<0.000000e+00> : vector<1xf32>
    %89 = vector.multi_reduction <add>, %88, %cst_33 [0] : vector<8x1xf32> to vector<1xf32>
    %90 = vector.shape_cast %89 : vector<1xf32> to vector<1x1xf32>
    %91 = vector.broadcast %90 : vector<1x1xf32> to vector<8x1xf32>
    %92 = arith.divf %88, %91 : vector<8x1xf32>
    %93 = vector.extract_strided_slice %1 {offsets = [8, 0], sizes = [8, 1], strides = [1, 1]} : vector<16x1xf32> to vector<8x1xf32>
    %94 = arith.mulf %92, %93 : vector<8x1xf32>
    %cst_34 = arith.constant dense<0.000000e+00> : vector<1xf32>
    %95 = vector.multi_reduction <add>, %94, %cst_34 [0] : vector<8x1xf32> to vector<1xf32>
    %96 = vector.shape_cast %95 : vector<1xf32> to vector<1x1xf32>
    %cst_35 = arith.constant 9.99999993E-9 : f32
    %97 = vector.broadcast %cst_35 : f32 to vector<1x1xf32>
    %98 = arith.addf %96, %97 : vector<1x1xf32>
    %99 = vector.broadcast %98 : vector<1x1xf32> to vector<8x1xf32>
    %100 = arith.divf %94, %99 : vector<8x1xf32>
    %101 = vector.extract_strided_slice %0 {offsets = [8, 0], sizes = [8, 32], strides = [1, 1]} : vector<16x32xf32> to vector<8x32xf32>
    %102 = vector.broadcast %100 : vector<8x1xf32> to vector<8x32xf32>
    %103 = arith.mulf %101, %102 : vector<8x32xf32>
    %cst_36 = arith.constant dense<0.000000e+00> : vector<32xf32>
    %104 = vector.multi_reduction <add>, %103, %cst_36 [0] : vector<8x32xf32> to vector<32xf32>
    %105 = vector.shape_cast %104 : vector<32xf32> to vector<1x32xf32>
    %106 = tpu.concatenate %75, %100 in 0 : vector<8x1xf32>, vector<8x1xf32> -> vector<16x1xf32>
    %107 = tpu.concatenate %80, %105 in 0 : vector<1x32xf32>, vector<1x32xf32> -> vector<2x32xf32>
    %c0_37 = arith.constant 0 : index
    %c96 = arith.constant 96 : index
    %c0_38 = arith.constant 0 : index
    %108 = vector.load %arg5[%c0_37, %c96, %c0_38] : memref<2x184x64xf32, #tpu.memory_space<vmem>>, vector<1x32x64xf32>
    %109 = vector.shape_cast %108 : vector<1x32x64xf32> to vector<32x64xf32>
    %cst_39 = arith.constant dense<0.000000e+00> : vector<2x64xf32>
    %110 = tpu.matmul %107, %109, %cst_39 {dimension_numbers = #tpu.dot_dimension_numbers<[1], [0], [0], [1], [0, 0, 1, 1], [], []>} : vector<2x32xf32>, vector<32x64xf32>, vector<2x64xf32> -> vector<2x64xf32>
    %c0_40 = arith.constant 0 : index
    %c128 = arith.constant 128 : index
    %c0_41 = arith.constant 0 : index
    %111 = vector.load %arg5[%c0_40, %c128, %c0_41] : memref<2x184x64xf32, #tpu.memory_space<vmem>>, vector<1x1x64xf32>
    %112 = vector.shape_cast %111 : vector<1x1x64xf32> to vector<1x64xf32>
    %113 = vector.broadcast %112 : vector<1x64xf32> to vector<2x64xf32>
    %114 = arith.addf %110, %113 : vector<2x64xf32>
    %115 = vector.extract_strided_slice %114 {offsets = [0, 0], sizes = [2, 32], strides = [1, 1]} : vector<2x64xf32> to vector<2x32xf32>
    %116 = math.tanh %115 : vector<2x32xf32>
    %117 = vector.extract_strided_slice %114 {offsets = [0, 32], sizes = [2, 32], strides = [1, 1]} : vector<2x64xf32> to vector<2x32xf32>
    %118 = math.tanh %117 : vector<2x32xf32>
    %119 = arith.truncf %21 : vector<128x32xf32> to vector<128x32xbf16>
    %c0_42 = arith.constant 0 : index
    %c136 = arith.constant 136 : index
    %c0_43 = arith.constant 0 : index
    %120 = vector.load %arg5[%c0_42, %c136, %c0_43] : memref<2x184x64xf32, #tpu.memory_space<vmem>>, vector<1x32x32xf32>
    %121 = vector.shape_cast %120 : vector<1x32x32xf32> to vector<32x32xf32>
    %122 = arith.truncf %121 : vector<32x32xf32> to vector<32x32xbf16>
    %cst_44 = arith.constant dense<0.000000e+00> : vector<128x32xf32>
    %123 = tpu.matmul %119, %122, %cst_44 {dimension_numbers = #tpu.dot_dimension_numbers<[1], [0], [0], [1], [0, 0, 1, 1], [], []>} : vector<128x32xbf16>, vector<32x32xbf16>, vector<128x32xf32> -> vector<128x32xf32>
    %c0_45 = arith.constant 0 : index
    %c168 = arith.constant 168 : index
    %c0_46 = arith.constant 0 : index
    %124 = vector.load %arg5[%c0_45, %c168, %c0_46] : memref<2x184x64xf32, #tpu.memory_space<vmem>>, vector<1x8x32xf32>
    %125 = vector.shape_cast %124 : vector<1x8x32xf32> to vector<8x32xf32>
    %126 = arith.truncf %125 : vector<8x32xf32> to vector<8x32xbf16>
    %cst_47 = arith.constant dense<0.000000e+00> : vector<128x32xf32>
    %127 = tpu.matmul %3, %126, %cst_47 {dimension_numbers = #tpu.dot_dimension_numbers<[1], [0], [0], [1], [0, 0, 1, 1], [], []>} : vector<128x8xbf16>, vector<8x32xbf16>, vector<128x32xf32> -> vector<128x32xf32>
    %128 = arith.addf %123, %127 : vector<128x32xf32>
    %c0_48 = arith.constant 0 : index
    %c176 = arith.constant 176 : index
    %c0_49 = arith.constant 0 : index
    %129 = vector.load %arg5[%c0_48, %c176, %c0_49] : memref<2x184x64xf32, #tpu.memory_space<vmem>>, vector<1x1x32xf32>
    %130 = vector.shape_cast %129 : vector<1x1x32xf32> to vector<1x32xf32>
    %131 = vector.broadcast %130 : vector<1x32xf32> to vector<128x32xf32>
    %132 = arith.addf %128, %131 : vector<128x32xf32>
    %133 = vector.extract_strided_slice %132 {offsets = [0, 0], sizes = [64, 32], strides = [1, 1]} : vector<128x32xf32> to vector<64x32xf32>
    %cst_50 = arith.constant dense<0.000000e+00> : vector<32xf32>
    %134 = vector.multi_reduction <add>, %133, %cst_50 [0] : vector<64x32xf32> to vector<32xf32>
    %135 = vector.shape_cast %134 : vector<32xf32> to vector<1x32xf32>
    %cst_51 = arith.constant 6.400000e+01 : f32
    %136 = vector.broadcast %cst_51 : f32 to vector<1x32xf32>
    %137 = arith.divf %135, %136 : vector<1x32xf32>
    %138 = vector.broadcast %137 : vector<1x32xf32> to vector<64x32xf32>
    %139 = arith.subf %133, %138 : vector<64x32xf32>
    %140 = arith.mulf %139, %139 : vector<64x32xf32>
    %cst_52 = arith.constant dense<0.000000e+00> : vector<32xf32>
    %141 = vector.multi_reduction <add>, %140, %cst_52 [0] : vector<64x32xf32> to vector<32xf32>
    %142 = vector.shape_cast %141 : vector<32xf32> to vector<1x32xf32>
    %cst_53 = arith.constant 6.400000e+01 : f32
    %143 = vector.broadcast %cst_53 : f32 to vector<1x32xf32>
    %144 = arith.divf %142, %143 : vector<1x32xf32>
    %145 = vector.broadcast %137 : vector<1x32xf32> to vector<64x32xf32>
    %146 = arith.subf %133, %145 : vector<64x32xf32>
    %cst_54 = arith.constant 9.99999974E-6 : f32
    %147 = vector.broadcast %cst_54 : f32 to vector<1x32xf32>
    %148 = arith.addf %144, %147 : vector<1x32xf32>
    %149 = math.rsqrt %148 : vector<1x32xf32>
    %150 = vector.broadcast %149 : vector<1x32xf32> to vector<64x32xf32>
    %151 = arith.mulf %146, %150 : vector<64x32xf32>
    %152 = vector.extract_strided_slice %116 {offsets = [0, 0], sizes = [1, 32], strides = [1, 1]} : vector<2x32xf32> to vector<1x32xf32>
    %153 = vector.broadcast %152 : vector<1x32xf32> to vector<64x32xf32>
    %154 = arith.mulf %153, %151 : vector<64x32xf32>
    %155 = vector.extract_strided_slice %118 {offsets = [0, 0], sizes = [1, 32], strides = [1, 1]} : vector<2x32xf32> to vector<1x32xf32>
    %156 = vector.broadcast %155 : vector<1x32xf32> to vector<64x32xf32>
    %157 = arith.addf %154, %156 : vector<64x32xf32>
    %cst_55 = arith.constant 0.000000e+00 : f32
    %158 = vector.broadcast %cst_55 : f32 to vector<64x32xf32>
    %159 = arith.maximumf %157, %158 : vector<64x32xf32>
    %160 = vector.extract_strided_slice %21 {offsets = [0, 0], sizes = [64, 32], strides = [1, 1]} : vector<128x32xf32> to vector<64x32xf32>
    %161 = arith.addf %160, %159 : vector<64x32xf32>
    %162 = vector.extract_strided_slice %132 {offsets = [64, 0], sizes = [64, 32], strides = [1, 1]} : vector<128x32xf32> to vector<64x32xf32>
    %cst_56 = arith.constant dense<0.000000e+00> : vector<32xf32>
    %163 = vector.multi_reduction <add>, %162, %cst_56 [0] : vector<64x32xf32> to vector<32xf32>
    %164 = vector.shape_cast %163 : vector<32xf32> to vector<1x32xf32>
    %cst_57 = arith.constant 6.400000e+01 : f32
    %165 = vector.broadcast %cst_57 : f32 to vector<1x32xf32>
    %166 = arith.divf %164, %165 : vector<1x32xf32>
    %167 = vector.broadcast %166 : vector<1x32xf32> to vector<64x32xf32>
    %168 = arith.subf %162, %167 : vector<64x32xf32>
    %169 = arith.mulf %168, %168 : vector<64x32xf32>
    %cst_58 = arith.constant dense<0.000000e+00> : vector<32xf32>
    %170 = vector.multi_reduction <add>, %169, %cst_58 [0] : vector<64x32xf32> to vector<32xf32>
    %171 = vector.shape_cast %170 : vector<32xf32> to vector<1x32xf32>
    %cst_59 = arith.constant 6.400000e+01 : f32
    %172 = vector.broadcast %cst_59 : f32 to vector<1x32xf32>
    %173 = arith.divf %171, %172 : vector<1x32xf32>
    %174 = vector.broadcast %166 : vector<1x32xf32> to vector<64x32xf32>
    %175 = arith.subf %162, %174 : vector<64x32xf32>
    %cst_60 = arith.constant 9.99999974E-6 : f32
    %176 = vector.broadcast %cst_60 : f32 to vector<1x32xf32>
    %177 = arith.addf %173, %176 : vector<1x32xf32>
    %178 = math.rsqrt %177 : vector<1x32xf32>
    %179 = vector.broadcast %178 : vector<1x32xf32> to vector<64x32xf32>
    %180 = arith.mulf %175, %179 : vector<64x32xf32>
    %181 = vector.extract_strided_slice %116 {offsets = [1, 0], sizes = [1, 32], strides = [1, 1]} : vector<2x32xf32> to vector<1x32xf32>
    %182 = vector.broadcast %181 : vector<1x32xf32> to vector<64x32xf32>
    %183 = arith.mulf %182, %180 : vector<64x32xf32>
    %184 = vector.extract_strided_slice %118 {offsets = [1, 0], sizes = [1, 32], strides = [1, 1]} : vector<2x32xf32> to vector<1x32xf32>
    %185 = vector.broadcast %184 : vector<1x32xf32> to vector<64x32xf32>
    %186 = arith.addf %183, %185 : vector<64x32xf32>
    %cst_61 = arith.constant 0.000000e+00 : f32
    %187 = vector.broadcast %cst_61 : f32 to vector<64x32xf32>
    %188 = arith.maximumf %186, %187 : vector<64x32xf32>
    %189 = vector.extract_strided_slice %21 {offsets = [64, 0], sizes = [64, 32], strides = [1, 1]} : vector<128x32xf32> to vector<64x32xf32>
    %190 = arith.addf %189, %188 : vector<64x32xf32>
    %191 = tpu.concatenate %161, %190 in 0 : vector<64x32xf32>, vector<64x32xf32> -> vector<128x32xf32>
    %c9_i32 = arith.constant 9 : i32
    %192 = tpu.dynamic_rotate %191 by %c9_i32 dim 0 : vector<128x32xf32>, i32 -> vector<128x32xf32>
    %c8_i32 = arith.constant 8 : i32
    %193 = vector.broadcast %c8_i32 : i32 to vector<128x1xi32>
    %194 = arith.cmpi sge, %20, %193 : vector<128x1xi32>
    %c8_i32_62 = arith.constant 8 : i32
    %c0_i32_63 = arith.constant 0 : i32
    %195 = arith.cmpi eq, %c8_i32_62, %c0_i32_63 : i32
    %c1_i32_64 = arith.constant 1 : i32
    %196 = arith.select %195, %c1_i32_64, %c8_i32_62 : i32
    %197 = vector.broadcast %196 : i32 to vector<128x1xi32>
    %198 = arith.remsi %20, %197 : vector<128x1xi32>
    %c0_i32_65 = arith.constant 0 : i32
    %199 = vector.broadcast %c0_i32_65 : i32 to vector<128x1xi32>
    %200 = arith.cmpi ne, %198, %199 : vector<128x1xi32>
    %c0_i32_66 = arith.constant 0 : i32
    %201 = vector.broadcast %c0_i32_66 : i32 to vector<128x1xi32>
    %202 = arith.cmpi slt, %198, %201 : vector<128x1xi32>
    %c0_i32_67 = arith.constant 0 : i32
    %203 = arith.cmpi slt, %196, %c0_i32_67 : i32
    %204 = vector.broadcast %203 : i1 to vector<128x1xi1>
    %205 = vector.broadcast %204 : vector<128x1xi1> to vector<128x1xi1>
    %206 = arith.xori %202, %205 : vector<128x1xi1>
    %207 = arith.andi %206, %200 : vector<128x1xi1>
    %208 = vector.broadcast %196 : i32 to vector<128x1xi32>
    %209 = arith.addi %198, %208 : vector<128x1xi32>
    %210 = arith.select %207, %209, %198 : vector<128x1xi1>, vector<128x1xi32>
    %c0_i32_68 = arith.constant 0 : i32
    %211 = vector.broadcast %c0_i32_68 : i32 to vector<128x1xi32>
    %212 = arith.cmpi sgt, %210, %211 : vector<128x1xi32>
    %213 = arith.andi %194, %212 : vector<128x1xi1>
    %cst_69 = arith.constant 0.000000e+00 : f32
    %214 = vector.shape_cast %213 : vector<128x1xi1> to vector<128x1xi1>
    %215 = vector.broadcast %214 : vector<128x1xi1> to vector<128x32xi1>
    %216 = vector.broadcast %cst_69 : f32 to vector<128x32xf32>
    %217 = arith.select %215, %192, %216 : vector<128x32xi1>, vector<128x32xf32>
    %218 = arith.truncf %217 : vector<128x32xf32> to vector<128x32xbf16>
    %c0_70 = arith.constant 0 : index
    %c0_71 = arith.constant 0 : index
    %219 = vector.load %arg6[%c0_70, %c0_71] : memref<296x32xf32, #tpu.memory_space<vmem>>, vector<32x32xf32>
    %220 = arith.truncf %219 : vector<32x32xf32> to vector<32x32xbf16>
    %cst_72 = arith.constant dense<0.000000e+00> : vector<128x32xf32>
    %221 = tpu.matmul %218, %220, %cst_72 {dimension_numbers = #tpu.dot_dimension_numbers<[1], [0], [0], [1], [0, 0, 1, 1], [], []>} : vector<128x32xbf16>, vector<32x32xbf16>, vector<128x32xf32> -> vector<128x32xf32>
    %c8_i32_73 = arith.constant 8 : i32
    %222 = tpu.dynamic_rotate %191 by %c8_i32_73 dim 0 : vector<128x32xf32>, i32 -> vector<128x32xf32>
    %c8_i32_74 = arith.constant 8 : i32
    %223 = vector.broadcast %c8_i32_74 : i32 to vector<128x1xi32>
    %224 = arith.cmpi sge, %20, %223 : vector<128x1xi32>
    %cst_75 = arith.constant 0.000000e+00 : f32
    %225 = vector.shape_cast %224 : vector<128x1xi1> to vector<128x1xi1>
    %226 = vector.broadcast %225 : vector<128x1xi1> to vector<128x32xi1>
    %227 = vector.broadcast %cst_75 : f32 to vector<128x32xf32>
    %228 = arith.select %226, %222, %227 : vector<128x32xi1>, vector<128x32xf32>
    %229 = arith.truncf %228 : vector<128x32xf32> to vector<128x32xbf16>
    %c32 = arith.constant 32 : index
    %c0_76 = arith.constant 0 : index
    %230 = vector.load %arg6[%c32, %c0_76] : memref<296x32xf32, #tpu.memory_space<vmem>>, vector<32x32xf32>
    %231 = arith.truncf %230 : vector<32x32xf32> to vector<32x32xbf16>
    %cst_77 = arith.constant dense<0.000000e+00> : vector<128x32xf32>
    %232 = tpu.matmul %229, %231, %cst_77 {dimension_numbers = #tpu.dot_dimension_numbers<[1], [0], [0], [1], [0, 0, 1, 1], [], []>} : vector<128x32xbf16>, vector<32x32xbf16>, vector<128x32xf32> -> vector<128x32xf32>
    %233 = arith.addf %221, %232 : vector<128x32xf32>
    %c7_i32 = arith.constant 7 : i32
    %234 = tpu.dynamic_rotate %191 by %c7_i32 dim 0 : vector<128x32xf32>, i32 -> vector<128x32xf32>
    %c8_i32_78 = arith.constant 8 : i32
    %235 = vector.broadcast %c8_i32_78 : i32 to vector<128x1xi32>
    %236 = arith.cmpi sge, %20, %235 : vector<128x1xi32>
    %c8_i32_79 = arith.constant 8 : i32
    %c0_i32_80 = arith.constant 0 : i32
    %237 = arith.cmpi eq, %c8_i32_79, %c0_i32_80 : i32
    %c1_i32_81 = arith.constant 1 : i32
    %238 = arith.select %237, %c1_i32_81, %c8_i32_79 : i32
    %239 = vector.broadcast %238 : i32 to vector<128x1xi32>
    %240 = arith.remsi %20, %239 : vector<128x1xi32>
    %c0_i32_82 = arith.constant 0 : i32
    %241 = vector.broadcast %c0_i32_82 : i32 to vector<128x1xi32>
    %242 = arith.cmpi ne, %240, %241 : vector<128x1xi32>
    %c0_i32_83 = arith.constant 0 : i32
    %243 = vector.broadcast %c0_i32_83 : i32 to vector<128x1xi32>
    %244 = arith.cmpi slt, %240, %243 : vector<128x1xi32>
    %c0_i32_84 = arith.constant 0 : i32
    %245 = arith.cmpi slt, %238, %c0_i32_84 : i32
    %246 = vector.broadcast %245 : i1 to vector<128x1xi1>
    %247 = vector.broadcast %246 : vector<128x1xi1> to vector<128x1xi1>
    %248 = arith.xori %244, %247 : vector<128x1xi1>
    %249 = arith.andi %248, %242 : vector<128x1xi1>
    %250 = vector.broadcast %238 : i32 to vector<128x1xi32>
    %251 = arith.addi %240, %250 : vector<128x1xi32>
    %252 = arith.select %249, %251, %240 : vector<128x1xi1>, vector<128x1xi32>
    %c7_i32_85 = arith.constant 7 : i32
    %253 = vector.broadcast %c7_i32_85 : i32 to vector<128x1xi32>
    %254 = arith.cmpi slt, %252, %253 : vector<128x1xi32>
    %255 = arith.andi %236, %254 : vector<128x1xi1>
    %cst_86 = arith.constant 0.000000e+00 : f32
    %256 = vector.shape_cast %255 : vector<128x1xi1> to vector<128x1xi1>
    %257 = vector.broadcast %256 : vector<128x1xi1> to vector<128x32xi1>
    %258 = vector.broadcast %cst_86 : f32 to vector<128x32xf32>
    %259 = arith.select %257, %234, %258 : vector<128x32xi1>, vector<128x32xf32>
    %260 = arith.truncf %259 : vector<128x32xf32> to vector<128x32xbf16>
    %c64_87 = arith.constant 64 : index
    %c0_88 = arith.constant 0 : index
    %261 = vector.load %arg6[%c64_87, %c0_88] : memref<296x32xf32, #tpu.memory_space<vmem>>, vector<32x32xf32>
    %262 = arith.truncf %261 : vector<32x32xf32> to vector<32x32xbf16>
    %cst_89 = arith.constant dense<0.000000e+00> : vector<128x32xf32>
    %263 = tpu.matmul %260, %262, %cst_89 {dimension_numbers = #tpu.dot_dimension_numbers<[1], [0], [0], [1], [0, 0, 1, 1], [], []>} : vector<128x32xbf16>, vector<32x32xbf16>, vector<128x32xf32> -> vector<128x32xf32>
    %264 = arith.addf %233, %263 : vector<128x32xf32>
    %c1_i32_90 = arith.constant 1 : i32
    %265 = tpu.dynamic_rotate %191 by %c1_i32_90 dim 0 : vector<128x32xf32>, i32 -> vector<128x32xf32>
    %c8_i32_91 = arith.constant 8 : i32
    %c0_i32_92 = arith.constant 0 : i32
    %266 = arith.cmpi eq, %c8_i32_91, %c0_i32_92 : i32
    %c1_i32_93 = arith.constant 1 : i32
    %267 = arith.select %266, %c1_i32_93, %c8_i32_91 : i32
    %268 = vector.broadcast %267 : i32 to vector<128x1xi32>
    %269 = arith.remsi %20, %268 : vector<128x1xi32>
    %c0_i32_94 = arith.constant 0 : i32
    %270 = vector.broadcast %c0_i32_94 : i32 to vector<128x1xi32>
    %271 = arith.cmpi ne, %269, %270 : vector<128x1xi32>
    %c0_i32_95 = arith.constant 0 : i32
    %272 = vector.broadcast %c0_i32_95 : i32 to vector<128x1xi32>
    %273 = arith.cmpi slt, %269, %272 : vector<128x1xi32>
    %c0_i32_96 = arith.constant 0 : i32
    %274 = arith.cmpi slt, %267, %c0_i32_96 : i32
    %275 = vector.broadcast %274 : i1 to vector<128x1xi1>
    %276 = vector.broadcast %275 : vector<128x1xi1> to vector<128x1xi1>
    %277 = arith.xori %273, %276 : vector<128x1xi1>
    %278 = arith.andi %277, %271 : vector<128x1xi1>
    %279 = vector.broadcast %267 : i32 to vector<128x1xi32>
    %280 = arith.addi %269, %279 : vector<128x1xi32>
    %281 = arith.select %278, %280, %269 : vector<128x1xi1>, vector<128x1xi32>
    %c0_i32_97 = arith.constant 0 : i32
    %282 = vector.broadcast %c0_i32_97 : i32 to vector<128x1xi32>
    %283 = arith.cmpi sgt, %281, %282 : vector<128x1xi32>
    %cst_98 = arith.constant 0.000000e+00 : f32
    %284 = vector.shape_cast %283 : vector<128x1xi1> to vector<128x1xi1>
    %285 = vector.broadcast %284 : vector<128x1xi1> to vector<128x32xi1>
    %286 = vector.broadcast %cst_98 : f32 to vector<128x32xf32>
    %287 = arith.select %285, %265, %286 : vector<128x32xi1>, vector<128x32xf32>
    %288 = arith.truncf %287 : vector<128x32xf32> to vector<128x32xbf16>
    %c96_99 = arith.constant 96 : index
    %c0_100 = arith.constant 0 : index
    %289 = vector.load %arg6[%c96_99, %c0_100] : memref<296x32xf32, #tpu.memory_space<vmem>>, vector<32x32xf32>
    %290 = arith.truncf %289 : vector<32x32xf32> to vector<32x32xbf16>
    %cst_101 = arith.constant dense<0.000000e+00> : vector<128x32xf32>
    %291 = tpu.matmul %288, %290, %cst_101 {dimension_numbers = #tpu.dot_dimension_numbers<[1], [0], [0], [1], [0, 0, 1, 1], [], []>} : vector<128x32xbf16>, vector<32x32xbf16>, vector<128x32xf32> -> vector<128x32xf32>
    %292 = arith.addf %264, %291 : vector<128x32xf32>
    %293 = arith.truncf %191 : vector<128x32xf32> to vector<128x32xbf16>
    %c128_102 = arith.constant 128 : index
    %c0_103 = arith.constant 0 : index
    %294 = vector.load %arg6[%c128_102, %c0_103] : memref<296x32xf32, #tpu.memory_space<vmem>>, vector<32x32xf32>
    %295 = arith.truncf %294 : vector<32x32xf32> to vector<32x32xbf16>
    %cst_104 = arith.constant dense<0.000000e+00> : vector<128x32xf32>
    %296 = tpu.matmul %293, %295, %cst_104 {dimension_numbers = #tpu.dot_dimension_numbers<[1], [0], [0], [1], [0, 0, 1, 1], [], []>} : vector<128x32xbf16>, vector<32x32xbf16>, vector<128x32xf32> -> vector<128x32xf32>
    %297 = arith.addf %292, %296 : vector<128x32xf32>
    %c127_i32 = arith.constant 127 : i32
    %298 = tpu.dynamic_rotate %191 by %c127_i32 dim 0 : vector<128x32xf32>, i32 -> vector<128x32xf32>
    %c8_i32_105 = arith.constant 8 : i32
    %c0_i32_106 = arith.constant 0 : i32
    %299 = arith.cmpi eq, %c8_i32_105, %c0_i32_106 : i32
    %c1_i32_107 = arith.constant 1 : i32
    %300 = arith.select %299, %c1_i32_107, %c8_i32_105 : i32
    %301 = vector.broadcast %300 : i32 to vector<128x1xi32>
    %302 = arith.remsi %20, %301 : vector<128x1xi32>
    %c0_i32_108 = arith.constant 0 : i32
    %303 = vector.broadcast %c0_i32_108 : i32 to vector<128x1xi32>
    %304 = arith.cmpi ne, %302, %303 : vector<128x1xi32>
    %c0_i32_109 = arith.constant 0 : i32
    %305 = vector.broadcast %c0_i32_109 : i32 to vector<128x1xi32>
    %306 = arith.cmpi slt, %302, %305 : vector<128x1xi32>
    %c0_i32_110 = arith.constant 0 : i32
    %307 = arith.cmpi slt, %300, %c0_i32_110 : i32
    %308 = vector.broadcast %307 : i1 to vector<128x1xi1>
    %309 = vector.broadcast %308 : vector<128x1xi1> to vector<128x1xi1>
    %310 = arith.xori %306, %309 : vector<128x1xi1>
    %311 = arith.andi %310, %304 : vector<128x1xi1>
    %312 = vector.broadcast %300 : i32 to vector<128x1xi32>
    %313 = arith.addi %302, %312 : vector<128x1xi32>
    %314 = arith.select %311, %313, %302 : vector<128x1xi1>, vector<128x1xi32>
    %c7_i32_111 = arith.constant 7 : i32
    %315 = vector.broadcast %c7_i32_111 : i32 to vector<128x1xi32>
    %316 = arith.cmpi slt, %314, %315 : vector<128x1xi32>
    %cst_112 = arith.constant 0.000000e+00 : f32
    %317 = vector.shape_cast %316 : vector<128x1xi1> to vector<128x1xi1>
    %318 = vector.broadcast %317 : vector<128x1xi1> to vector<128x32xi1>
    %319 = vector.broadcast %cst_112 : f32 to vector<128x32xf32>
    %320 = arith.select %318, %298, %319 : vector<128x32xi1>, vector<128x32xf32>
    %321 = arith.truncf %320 : vector<128x32xf32> to vector<128x32xbf16>
    %c160 = arith.constant 160 : index
    %c0_113 = arith.constant 0 : index
    %322 = vector.load %arg6[%c160, %c0_113] : memref<296x32xf32, #tpu.memory_space<vmem>>, vector<32x32xf32>
    %323 = arith.truncf %322 : vector<32x32xf32> to vector<32x32xbf16>
    %cst_114 = arith.constant dense<0.000000e+00> : vector<128x32xf32>
    %324 = tpu.matmul %321, %323, %cst_114 {dimension_numbers = #tpu.dot_dimension_numbers<[1], [0], [0], [1], [0, 0, 1, 1], [], []>} : vector<128x32xbf16>, vector<32x32xbf16>, vector<128x32xf32> -> vector<128x32xf32>
    %325 = arith.addf %297, %324 : vector<128x32xf32>
    %c121_i32 = arith.constant 121 : i32
    %326 = tpu.dynamic_rotate %191 by %c121_i32 dim 0 : vector<128x32xf32>, i32 -> vector<128x32xf32>
    %c56_i32 = arith.constant 56 : i32
    %327 = vector.broadcast %c56_i32 : i32 to vector<128x1xi32>
    %328 = arith.cmpi slt, %20, %327 : vector<128x1xi32>
    %c8_i32_115 = arith.constant 8 : i32
    %c0_i32_116 = arith.constant 0 : i32
    %329 = arith.cmpi eq, %c8_i32_115, %c0_i32_116 : i32
    %c1_i32_117 = arith.constant 1 : i32
    %330 = arith.select %329, %c1_i32_117, %c8_i32_115 : i32
    %331 = vector.broadcast %330 : i32 to vector<128x1xi32>
    %332 = arith.remsi %20, %331 : vector<128x1xi32>
    %c0_i32_118 = arith.constant 0 : i32
    %333 = vector.broadcast %c0_i32_118 : i32 to vector<128x1xi32>
    %334 = arith.cmpi ne, %332, %333 : vector<128x1xi32>
    %c0_i32_119 = arith.constant 0 : i32
    %335 = vector.broadcast %c0_i32_119 : i32 to vector<128x1xi32>
    %336 = arith.cmpi slt, %332, %335 : vector<128x1xi32>
    %c0_i32_120 = arith.constant 0 : i32
    %337 = arith.cmpi slt, %330, %c0_i32_120 : i32
    %338 = vector.broadcast %337 : i1 to vector<128x1xi1>
    %339 = vector.broadcast %338 : vector<128x1xi1> to vector<128x1xi1>
    %340 = arith.xori %336, %339 : vector<128x1xi1>
    %341 = arith.andi %340, %334 : vector<128x1xi1>
    %342 = vector.broadcast %330 : i32 to vector<128x1xi32>
    %343 = arith.addi %332, %342 : vector<128x1xi32>
    %344 = arith.select %341, %343, %332 : vector<128x1xi1>, vector<128x1xi32>
    %c0_i32_121 = arith.constant 0 : i32
    %345 = vector.broadcast %c0_i32_121 : i32 to vector<128x1xi32>
    %346 = arith.cmpi sgt, %344, %345 : vector<128x1xi32>
    %347 = arith.andi %328, %346 : vector<128x1xi1>
    %cst_122 = arith.constant 0.000000e+00 : f32
    %348 = vector.shape_cast %347 : vector<128x1xi1> to vector<128x1xi1>
    %349 = vector.broadcast %348 : vector<128x1xi1> to vector<128x32xi1>
    %350 = vector.broadcast %cst_122 : f32 to vector<128x32xf32>
    %351 = arith.select %349, %326, %350 : vector<128x32xi1>, vector<128x32xf32>
    %352 = arith.truncf %351 : vector<128x32xf32> to vector<128x32xbf16>
    %c192 = arith.constant 192 : index
    %c0_123 = arith.constant 0 : index
    %353 = vector.load %arg6[%c192, %c0_123] : memref<296x32xf32, #tpu.memory_space<vmem>>, vector<32x32xf32>
    %354 = arith.truncf %353 : vector<32x32xf32> to vector<32x32xbf16>
    %cst_124 = arith.constant dense<0.000000e+00> : vector<128x32xf32>
    %355 = tpu.matmul %352, %354, %cst_124 {dimension_numbers = #tpu.dot_dimension_numbers<[1], [0], [0], [1], [0, 0, 1, 1], [], []>} : vector<128x32xbf16>, vector<32x32xbf16>, vector<128x32xf32> -> vector<128x32xf32>
    %356 = arith.addf %325, %355 : vector<128x32xf32>
    %c120_i32 = arith.constant 120 : i32
    %357 = tpu.dynamic_rotate %191 by %c120_i32 dim 0 : vector<128x32xf32>, i32 -> vector<128x32xf32>
    %c56_i32_125 = arith.constant 56 : i32
    %358 = vector.broadcast %c56_i32_125 : i32 to vector<128x1xi32>
    %359 = arith.cmpi slt, %20, %358 : vector<128x1xi32>
    %cst_126 = arith.constant 0.000000e+00 : f32
    %360 = vector.shape_cast %359 : vector<128x1xi1> to vector<128x1xi1>
    %361 = vector.broadcast %360 : vector<128x1xi1> to vector<128x32xi1>
    %362 = vector.broadcast %cst_126 : f32 to vector<128x32xf32>
    %363 = arith.select %361, %357, %362 : vector<128x32xi1>, vector<128x32xf32>
    %364 = arith.truncf %363 : vector<128x32xf32> to vector<128x32xbf16>
    %c224 = arith.constant 224 : index
    %c0_127 = arith.constant 0 : index
    %365 = vector.load %arg6[%c224, %c0_127] : memref<296x32xf32, #tpu.memory_space<vmem>>, vector<32x32xf32>
    %366 = arith.truncf %365 : vector<32x32xf32> to vector<32x32xbf16>
    %cst_128 = arith.constant dense<0.000000e+00> : vector<128x32xf32>
    %367 = tpu.matmul %364, %366, %cst_128 {dimension_numbers = #tpu.dot_dimension_numbers<[1], [0], [0], [1], [0, 0, 1, 1], [], []>} : vector<128x32xbf16>, vector<32x32xbf16>, vector<128x32xf32> -> vector<128x32xf32>
    %368 = arith.addf %356, %367 : vector<128x32xf32>
    %c119_i32 = arith.constant 119 : i32
    %369 = tpu.dynamic_rotate %191 by %c119_i32 dim 0 : vector<128x32xf32>, i32 -> vector<128x32xf32>
    %c56_i32_129 = arith.constant 56 : i32
    %370 = vector.broadcast %c56_i32_129 : i32 to vector<128x1xi32>
    %371 = arith.cmpi slt, %20, %370 : vector<128x1xi32>
    %c8_i32_130 = arith.constant 8 : i32
    %c0_i32_131 = arith.constant 0 : i32
    %372 = arith.cmpi eq, %c8_i32_130, %c0_i32_131 : i32
    %c1_i32_132 = arith.constant 1 : i32
    %373 = arith.select %372, %c1_i32_132, %c8_i32_130 : i32
    %374 = vector.broadcast %373 : i32 to vector<128x1xi32>
    %375 = arith.remsi %20, %374 : vector<128x1xi32>
    %c0_i32_133 = arith.constant 0 : i32
    %376 = vector.broadcast %c0_i32_133 : i32 to vector<128x1xi32>
    %377 = arith.cmpi ne, %375, %376 : vector<128x1xi32>
    %c0_i32_134 = arith.constant 0 : i32
    %378 = vector.broadcast %c0_i32_134 : i32 to vector<128x1xi32>
    %379 = arith.cmpi slt, %375, %378 : vector<128x1xi32>
    %c0_i32_135 = arith.constant 0 : i32
    %380 = arith.cmpi slt, %373, %c0_i32_135 : i32
    %381 = vector.broadcast %380 : i1 to vector<128x1xi1>
    %382 = vector.broadcast %381 : vector<128x1xi1> to vector<128x1xi1>
    %383 = arith.xori %379, %382 : vector<128x1xi1>
    %384 = arith.andi %383, %377 : vector<128x1xi1>
    %385 = vector.broadcast %373 : i32 to vector<128x1xi32>
    %386 = arith.addi %375, %385 : vector<128x1xi32>
    %387 = arith.select %384, %386, %375 : vector<128x1xi1>, vector<128x1xi32>
    %c7_i32_136 = arith.constant 7 : i32
    %388 = vector.broadcast %c7_i32_136 : i32 to vector<128x1xi32>
    %389 = arith.cmpi slt, %387, %388 : vector<128x1xi32>
    %390 = arith.andi %371, %389 : vector<128x1xi1>
    %cst_137 = arith.constant 0.000000e+00 : f32
    %391 = vector.shape_cast %390 : vector<128x1xi1> to vector<128x1xi1>
    %392 = vector.broadcast %391 : vector<128x1xi1> to vector<128x32xi1>
    %393 = vector.broadcast %cst_137 : f32 to vector<128x32xf32>
    %394 = arith.select %392, %369, %393 : vector<128x32xi1>, vector<128x32xf32>
    %395 = arith.truncf %394 : vector<128x32xf32> to vector<128x32xbf16>
    %c256 = arith.constant 256 : index
    %c0_138 = arith.constant 0 : index
    %396 = vector.load %arg6[%c256, %c0_138] : memref<296x32xf32, #tpu.memory_space<vmem>>, vector<32x32xf32>
    %397 = arith.truncf %396 : vector<32x32xf32> to vector<32x32xbf16>
    %cst_139 = arith.constant dense<0.000000e+00> : vector<128x32xf32>
    %398 = tpu.matmul %395, %397, %cst_139 {dimension_numbers = #tpu.dot_dimension_numbers<[1], [0], [0], [1], [0, 0, 1, 1], [], []>} : vector<128x32xbf16>, vector<32x32xbf16>, vector<128x32xf32> -> vector<128x32xf32>
    %399 = arith.addf %368, %398 : vector<128x32xf32>
    %c288 = arith.constant 288 : index
    %c0_140 = arith.constant 0 : index
    %400 = vector.load %arg6[%c288, %c0_140] : memref<296x32xf32, #tpu.memory_space<vmem>>, vector<1x32xf32>
    %401 = vector.broadcast %400 : vector<1x32xf32> to vector<128x32xf32>
    %402 = arith.addf %399, %401 : vector<128x32xf32>
    %cst_141 = arith.constant 0.000000e+00 : f32
    %403 = vector.broadcast %cst_141 : f32 to vector<128x32xf32>
    %404 = arith.maximumf %402, %403 : vector<128x32xf32>
    %cst_142 = arith.constant 0.000000e+00 : f32
    %cst_143 = arith.constant 1.000000e+00 : f32
    %405 = vector.broadcast %cst_142 : f32 to vector<16x1xf32>
    %406 = arith.maximumf %405, %106 : vector<16x1xf32>
    %407 = vector.broadcast %cst_143 : f32 to vector<16x1xf32>
    %408 = arith.minimumf %407, %406 : vector<16x1xf32>
    %cst_144 = arith.constant 1.000000e+00 : f32
    %409 = vector.broadcast %cst_144 : f32 to vector<16x1xf32>
    %410 = arith.subf %409, %408 : vector<16x1xf32>
    %411 = vector.extract_strided_slice %404 {offsets = [0, 0], sizes = [64, 32], strides = [1, 1]} : vector<128x32xf32> to vector<64x32xf32>
    %cst_145 = arith.constant dense<0.000000e+00> : vector<32xf32>
    %412 = vector.multi_reduction <add>, %411, %cst_145 [0] : vector<64x32xf32> to vector<32xf32>
    %413 = vector.shape_cast %412 : vector<32xf32> to vector<1x32xf32>
    %cst_146 = arith.constant 6.400000e+01 : f32
    %414 = vector.broadcast %cst_146 : f32 to vector<1x32xf32>
    %415 = arith.divf %413, %414 : vector<1x32xf32>
    %416 = vector.shape_cast %415 : vector<1x32xf32> to vector<1x32xf32>
    %417 = vector.broadcast %416 : vector<1x32xf32> to vector<8x32xf32>
    %418 = vector.extract_strided_slice %404 {offsets = [64, 0], sizes = [64, 32], strides = [1, 1]} : vector<128x32xf32> to vector<64x32xf32>
    %cst_147 = arith.constant dense<0.000000e+00> : vector<32xf32>
    %419 = vector.multi_reduction <add>, %418, %cst_147 [0] : vector<64x32xf32> to vector<32xf32>
    %420 = vector.shape_cast %419 : vector<32xf32> to vector<1x32xf32>
    %cst_148 = arith.constant 6.400000e+01 : f32
    %421 = vector.broadcast %cst_148 : f32 to vector<1x32xf32>
    %422 = arith.divf %420, %421 : vector<1x32xf32>
    %423 = vector.shape_cast %422 : vector<1x32xf32> to vector<1x32xf32>
    %424 = vector.broadcast %423 : vector<1x32xf32> to vector<8x32xf32>
    %425 = tpu.concatenate %417, %424 in 0 : vector<8x32xf32>, vector<8x32xf32> -> vector<16x32xf32>
    %426 = vector.broadcast %410 : vector<16x1xf32> to vector<16x32xf32>
    %427 = arith.mulf %0, %426 : vector<16x32xf32>
    %428 = tpu.concatenate %425, %427 in 1 : vector<16x32xf32>, vector<16x32xf32> -> vector<16x64xf32>
    %c1 = arith.constant 1 : index
    %c0_149 = arith.constant 0 : index
    %c0_150 = arith.constant 0 : index
    %429 = vector.load %arg5[%c1, %c0_149, %c0_150] : memref<2x184x64xf32, #tpu.memory_space<vmem>>, vector<1x64x16xf32>
    %430 = vector.shape_cast %429 : vector<1x64x16xf32> to vector<64x16xf32>
    %cst_151 = arith.constant dense<0.000000e+00> : vector<16x16xf32>
    %431 = tpu.matmul %428, %430, %cst_151 {dimension_numbers = #tpu.dot_dimension_numbers<[1], [0], [0], [1], [0, 0, 1, 1], [], []>} : vector<16x64xf32>, vector<64x16xf32>, vector<16x16xf32> -> vector<16x16xf32>
    %c1_152 = arith.constant 1 : index
    %c64_153 = arith.constant 64 : index
    %c0_154 = arith.constant 0 : index
    %432 = vector.load %arg5[%c1_152, %c64_153, %c0_154] : memref<2x184x64xf32, #tpu.memory_space<vmem>>, vector<1x1x16xf32>
    %433 = vector.shape_cast %432 : vector<1x1x16xf32> to vector<1x16xf32>
    %434 = vector.broadcast %433 : vector<1x16xf32> to vector<16x16xf32>
    %435 = arith.addf %431, %434 : vector<16x16xf32>
    %436 = math.tanh %435 : vector<16x16xf32>
    %c1_155 = arith.constant 1 : index
    %c72_156 = arith.constant 72 : index
    %c0_157 = arith.constant 0 : index
    %437 = vector.load %arg5[%c1_155, %c72_156, %c0_157] : memref<2x184x64xf32, #tpu.memory_space<vmem>>, vector<1x16x1xf32>
    %438 = vector.shape_cast %437 : vector<1x16x1xf32> to vector<16x1xf32>
    %cst_158 = arith.constant dense<0.000000e+00> : vector<16x1xf32>
    %439 = tpu.matmul %436, %438, %cst_158 {dimension_numbers = #tpu.dot_dimension_numbers<[1], [0], [0], [1], [0, 0, 1, 1], [], []>} : vector<16x16xf32>, vector<16x1xf32>, vector<16x1xf32> -> vector<16x1xf32>
    %c1_159 = arith.constant 1 : index
    %c88_160 = arith.constant 88 : index
    %c0_161 = arith.constant 0 : index
    %440 = vector.load %arg5[%c1_159, %c88_160, %c0_161] : memref<2x184x64xf32, #tpu.memory_space<vmem>>, vector<1x1x1xf32>
    %441 = vector.shape_cast %440 : vector<1x1x1xf32> to vector<1x1xf32>
    %442 = vector.broadcast %441 : vector<1x1xf32> to vector<16x1xf32>
    %443 = arith.addf %439, %442 : vector<16x1xf32>
    %444 = vector.extract_strided_slice %443 {offsets = [0, 0], sizes = [8, 1], strides = [1, 1]} : vector<16x1xf32> to vector<8x1xf32>
    %cst_162 = arith.constant 1.000000e+01 : f32
    %445 = vector.broadcast %cst_162 : f32 to vector<8x1xf32>
    %446 = arith.mulf %444, %445 : vector<8x1xf32>
    %cst_163 = arith.constant dense<0xFF800000> : vector<1xf32>
    %447 = vector.multi_reduction <maximumf>, %446, %cst_163 [0] : vector<8x1xf32> to vector<1xf32>
    %448 = vector.shape_cast %447 : vector<1xf32> to vector<1x1xf32>
    %449 = vector.broadcast %448 : vector<1x1xf32> to vector<8x1xf32>
    %450 = arith.subf %446, %449 : vector<8x1xf32>
    %451 = math.exp %450 : vector<8x1xf32>
    %cst_164 = arith.constant dense<0.000000e+00> : vector<1xf32>
    %452 = vector.multi_reduction <add>, %451, %cst_164 [0] : vector<8x1xf32> to vector<1xf32>
    %453 = vector.shape_cast %452 : vector<1xf32> to vector<1x1xf32>
    %454 = vector.broadcast %453 : vector<1x1xf32> to vector<8x1xf32>
    %455 = arith.divf %451, %454 : vector<8x1xf32>
    %456 = vector.extract_strided_slice %1 {offsets = [0, 0], sizes = [8, 1], strides = [1, 1]} : vector<16x1xf32> to vector<8x1xf32>
    %457 = arith.mulf %455, %456 : vector<8x1xf32>
    %cst_165 = arith.constant dense<0.000000e+00> : vector<1xf32>
    %458 = vector.multi_reduction <add>, %457, %cst_165 [0] : vector<8x1xf32> to vector<1xf32>
    %459 = vector.shape_cast %458 : vector<1xf32> to vector<1x1xf32>
    %cst_166 = arith.constant 9.99999993E-9 : f32
    %460 = vector.broadcast %cst_166 : f32 to vector<1x1xf32>
    %461 = arith.addf %459, %460 : vector<1x1xf32>
    %462 = vector.broadcast %461 : vector<1x1xf32> to vector<8x1xf32>
    %463 = arith.divf %457, %462 : vector<8x1xf32>
    %464 = vector.extract_strided_slice %0 {offsets = [0, 0], sizes = [8, 32], strides = [1, 1]} : vector<16x32xf32> to vector<8x32xf32>
    %465 = vector.broadcast %463 : vector<8x1xf32> to vector<8x32xf32>
    %466 = arith.mulf %464, %465 : vector<8x32xf32>
    %cst_167 = arith.constant dense<0.000000e+00> : vector<32xf32>
    %467 = vector.multi_reduction <add>, %466, %cst_167 [0] : vector<8x32xf32> to vector<32xf32>
    %468 = vector.shape_cast %467 : vector<32xf32> to vector<1x32xf32>
    %469 = vector.extract_strided_slice %443 {offsets = [8, 0], sizes = [8, 1], strides = [1, 1]} : vector<16x1xf32> to vector<8x1xf32>
    %cst_168 = arith.constant 1.000000e+01 : f32
    %470 = vector.broadcast %cst_168 : f32 to vector<8x1xf32>
    %471 = arith.mulf %469, %470 : vector<8x1xf32>
    %cst_169 = arith.constant dense<0xFF800000> : vector<1xf32>
    %472 = vector.multi_reduction <maximumf>, %471, %cst_169 [0] : vector<8x1xf32> to vector<1xf32>
    %473 = vector.shape_cast %472 : vector<1xf32> to vector<1x1xf32>
    %474 = vector.broadcast %473 : vector<1x1xf32> to vector<8x1xf32>
    %475 = arith.subf %471, %474 : vector<8x1xf32>
    %476 = math.exp %475 : vector<8x1xf32>
    %cst_170 = arith.constant dense<0.000000e+00> : vector<1xf32>
    %477 = vector.multi_reduction <add>, %476, %cst_170 [0] : vector<8x1xf32> to vector<1xf32>
    %478 = vector.shape_cast %477 : vector<1xf32> to vector<1x1xf32>
    %479 = vector.broadcast %478 : vector<1x1xf32> to vector<8x1xf32>
    %480 = arith.divf %476, %479 : vector<8x1xf32>
    %481 = vector.extract_strided_slice %1 {offsets = [8, 0], sizes = [8, 1], strides = [1, 1]} : vector<16x1xf32> to vector<8x1xf32>
    %482 = arith.mulf %480, %481 : vector<8x1xf32>
    %cst_171 = arith.constant dense<0.000000e+00> : vector<1xf32>
    %483 = vector.multi_reduction <add>, %482, %cst_171 [0] : vector<8x1xf32> to vector<1xf32>
    %484 = vector.shape_cast %483 : vector<1xf32> to vector<1x1xf32>
    %cst_172 = arith.constant 9.99999993E-9 : f32
    %485 = vector.broadcast %cst_172 : f32 to vector<1x1xf32>
    %486 = arith.addf %484, %485 : vector<1x1xf32>
    %487 = vector.broadcast %486 : vector<1x1xf32> to vector<8x1xf32>
    %488 = arith.divf %482, %487 : vector<8x1xf32>
    %489 = vector.extract_strided_slice %0 {offsets = [8, 0], sizes = [8, 32], strides = [1, 1]} : vector<16x32xf32> to vector<8x32xf32>
    %490 = vector.broadcast %488 : vector<8x1xf32> to vector<8x32xf32>
    %491 = arith.mulf %489, %490 : vector<8x32xf32>
    %cst_173 = arith.constant dense<0.000000e+00> : vector<32xf32>
    %492 = vector.multi_reduction <add>, %491, %cst_173 [0] : vector<8x32xf32> to vector<32xf32>
    %493 = vector.shape_cast %492 : vector<32xf32> to vector<1x32xf32>
    %494 = tpu.concatenate %468, %493 in 0 : vector<1x32xf32>, vector<1x32xf32> -> vector<2x32xf32>
    %c1_174 = arith.constant 1 : index
    %c96_175 = arith.constant 96 : index
    %c0_176 = arith.constant 0 : index
    %495 = vector.load %arg5[%c1_174, %c96_175, %c0_176] : memref<2x184x64xf32, #tpu.memory_space<vmem>>, vector<1x32x64xf32>
    %496 = vector.shape_cast %495 : vector<1x32x64xf32> to vector<32x64xf32>
    %cst_177 = arith.constant dense<0.000000e+00> : vector<2x64xf32>
    %497 = tpu.matmul %494, %496, %cst_177 {dimension_numbers = #tpu.dot_dimension_numbers<[1], [0], [0], [1], [0, 0, 1, 1], [], []>} : vector<2x32xf32>, vector<32x64xf32>, vector<2x64xf32> -> vector<2x64xf32>
    %c1_178 = arith.constant 1 : index
    %c128_179 = arith.constant 128 : index
    %c0_180 = arith.constant 0 : index
    %498 = vector.load %arg5[%c1_178, %c128_179, %c0_180] : memref<2x184x64xf32, #tpu.memory_space<vmem>>, vector<1x1x64xf32>
    %499 = vector.shape_cast %498 : vector<1x1x64xf32> to vector<1x64xf32>
    %500 = vector.broadcast %499 : vector<1x64xf32> to vector<2x64xf32>
    %501 = arith.addf %497, %500 : vector<2x64xf32>
    %502 = vector.extract_strided_slice %501 {offsets = [0, 0], sizes = [2, 32], strides = [1, 1]} : vector<2x64xf32> to vector<2x32xf32>
    %503 = math.tanh %502 : vector<2x32xf32>
    %504 = vector.extract_strided_slice %501 {offsets = [0, 32], sizes = [2, 32], strides = [1, 1]} : vector<2x64xf32> to vector<2x32xf32>
    %505 = math.tanh %504 : vector<2x32xf32>
    %506 = arith.truncf %404 : vector<128x32xf32> to vector<128x32xbf16>
    %c1_181 = arith.constant 1 : index
    %c136_182 = arith.constant 136 : index
    %c0_183 = arith.constant 0 : index
    %507 = vector.load %arg5[%c1_181, %c136_182, %c0_183] : memref<2x184x64xf32, #tpu.memory_space<vmem>>, vector<1x32x32xf32>
    %508 = vector.shape_cast %507 : vector<1x32x32xf32> to vector<32x32xf32>
    %509 = arith.truncf %508 : vector<32x32xf32> to vector<32x32xbf16>
    %cst_184 = arith.constant dense<0.000000e+00> : vector<128x32xf32>
    %510 = tpu.matmul %506, %509, %cst_184 {dimension_numbers = #tpu.dot_dimension_numbers<[1], [0], [0], [1], [0, 0, 1, 1], [], []>} : vector<128x32xbf16>, vector<32x32xbf16>, vector<128x32xf32> -> vector<128x32xf32>
    %c1_185 = arith.constant 1 : index
    %c168_186 = arith.constant 168 : index
    %c0_187 = arith.constant 0 : index
    %511 = vector.load %arg5[%c1_185, %c168_186, %c0_187] : memref<2x184x64xf32, #tpu.memory_space<vmem>>, vector<1x8x32xf32>
    %512 = vector.shape_cast %511 : vector<1x8x32xf32> to vector<8x32xf32>
    %513 = arith.truncf %512 : vector<8x32xf32> to vector<8x32xbf16>
    %cst_188 = arith.constant dense<0.000000e+00> : vector<128x32xf32>
    %514 = tpu.matmul %3, %513, %cst_188 {dimension_numbers = #tpu.dot_dimension_numbers<[1], [0], [0], [1], [0, 0, 1, 1], [], []>} : vector<128x8xbf16>, vector<8x32xbf16>, vector<128x32xf32> -> vector<128x32xf32>
    %515 = arith.addf %510, %514 : vector<128x32xf32>
    %c1_189 = arith.constant 1 : index
    %c176_190 = arith.constant 176 : index
    %c0_191 = arith.constant 0 : index
    %516 = vector.load %arg5[%c1_189, %c176_190, %c0_191] : memref<2x184x64xf32, #tpu.memory_space<vmem>>, vector<1x1x32xf32>
    %517 = vector.shape_cast %516 : vector<1x1x32xf32> to vector<1x32xf32>
    %518 = vector.broadcast %517 : vector<1x32xf32> to vector<128x32xf32>
    %519 = arith.addf %515, %518 : vector<128x32xf32>
    %520 = vector.extract_strided_slice %519 {offsets = [0, 0], sizes = [64, 32], strides = [1, 1]} : vector<128x32xf32> to vector<64x32xf32>
    %cst_192 = arith.constant dense<0.000000e+00> : vector<32xf32>
    %521 = vector.multi_reduction <add>, %520, %cst_192 [0] : vector<64x32xf32> to vector<32xf32>
    %522 = vector.shape_cast %521 : vector<32xf32> to vector<1x32xf32>
    %cst_193 = arith.constant 6.400000e+01 : f32
    %523 = vector.broadcast %cst_193 : f32 to vector<1x32xf32>
    %524 = arith.divf %522, %523 : vector<1x32xf32>
    %525 = vector.broadcast %524 : vector<1x32xf32> to vector<64x32xf32>
    %526 = arith.subf %520, %525 : vector<64x32xf32>
    %527 = arith.mulf %526, %526 : vector<64x32xf32>
    %cst_194 = arith.constant dense<0.000000e+00> : vector<32xf32>
    %528 = vector.multi_reduction <add>, %527, %cst_194 [0] : vector<64x32xf32> to vector<32xf32>
    %529 = vector.shape_cast %528 : vector<32xf32> to vector<1x32xf32>
    %cst_195 = arith.constant 6.400000e+01 : f32
    %530 = vector.broadcast %cst_195 : f32 to vector<1x32xf32>
    %531 = arith.divf %529, %530 : vector<1x32xf32>
    %532 = vector.broadcast %524 : vector<1x32xf32> to vector<64x32xf32>
    %533 = arith.subf %520, %532 : vector<64x32xf32>
    %cst_196 = arith.constant 9.99999974E-6 : f32
    %534 = vector.broadcast %cst_196 : f32 to vector<1x32xf32>
    %535 = arith.addf %531, %534 : vector<1x32xf32>
    %536 = math.rsqrt %535 : vector<1x32xf32>
    %537 = vector.broadcast %536 : vector<1x32xf32> to vector<64x32xf32>
    %538 = arith.mulf %533, %537 : vector<64x32xf32>
    %539 = vector.extract_strided_slice %503 {offsets = [0, 0], sizes = [1, 32], strides = [1, 1]} : vector<2x32xf32> to vector<1x32xf32>
    %540 = vector.broadcast %539 : vector<1x32xf32> to vector<64x32xf32>
    %541 = arith.mulf %540, %538 : vector<64x32xf32>
    %542 = vector.extract_strided_slice %505 {offsets = [0, 0], sizes = [1, 32], strides = [1, 1]} : vector<2x32xf32> to vector<1x32xf32>
    %543 = vector.broadcast %542 : vector<1x32xf32> to vector<64x32xf32>
    %544 = arith.addf %541, %543 : vector<64x32xf32>
    %cst_197 = arith.constant 0.000000e+00 : f32
    %545 = vector.broadcast %cst_197 : f32 to vector<64x32xf32>
    %546 = arith.maximumf %544, %545 : vector<64x32xf32>
    %547 = vector.extract_strided_slice %404 {offsets = [0, 0], sizes = [64, 32], strides = [1, 1]} : vector<128x32xf32> to vector<64x32xf32>
    %548 = arith.addf %547, %546 : vector<64x32xf32>
    %549 = vector.extract_strided_slice %519 {offsets = [64, 0], sizes = [64, 32], strides = [1, 1]} : vector<128x32xf32> to vector<64x32xf32>
    %cst_198 = arith.constant dense<0.000000e+00> : vector<32xf32>
    %550 = vector.multi_reduction <add>, %549, %cst_198 [0] : vector<64x32xf32> to vector<32xf32>
    %551 = vector.shape_cast %550 : vector<32xf32> to vector<1x32xf32>
    %cst_199 = arith.constant 6.400000e+01 : f32
    %552 = vector.broadcast %cst_199 : f32 to vector<1x32xf32>
    %553 = arith.divf %551, %552 : vector<1x32xf32>
    %554 = vector.broadcast %553 : vector<1x32xf32> to vector<64x32xf32>
    %555 = arith.subf %549, %554 : vector<64x32xf32>
    %556 = arith.mulf %555, %555 : vector<64x32xf32>
    %cst_200 = arith.constant dense<0.000000e+00> : vector<32xf32>
    %557 = vector.multi_reduction <add>, %556, %cst_200 [0] : vector<64x32xf32> to vector<32xf32>
    %558 = vector.shape_cast %557 : vector<32xf32> to vector<1x32xf32>
    %cst_201 = arith.constant 6.400000e+01 : f32
    %559 = vector.broadcast %cst_201 : f32 to vector<1x32xf32>
    %560 = arith.divf %558, %559 : vector<1x32xf32>
    %561 = vector.broadcast %553 : vector<1x32xf32> to vector<64x32xf32>
    %562 = arith.subf %549, %561 : vector<64x32xf32>
    %cst_202 = arith.constant 9.99999974E-6 : f32
    %563 = vector.broadcast %cst_202 : f32 to vector<1x32xf32>
    %564 = arith.addf %560, %563 : vector<1x32xf32>
    %565 = math.rsqrt %564 : vector<1x32xf32>
    %566 = vector.broadcast %565 : vector<1x32xf32> to vector<64x32xf32>
    %567 = arith.mulf %562, %566 : vector<64x32xf32>
    %568 = vector.extract_strided_slice %503 {offsets = [1, 0], sizes = [1, 32], strides = [1, 1]} : vector<2x32xf32> to vector<1x32xf32>
    %569 = vector.broadcast %568 : vector<1x32xf32> to vector<64x32xf32>
    %570 = arith.mulf %569, %567 : vector<64x32xf32>
    %571 = vector.extract_strided_slice %505 {offsets = [1, 0], sizes = [1, 32], strides = [1, 1]} : vector<2x32xf32> to vector<1x32xf32>
    %572 = vector.broadcast %571 : vector<1x32xf32> to vector<64x32xf32>
    %573 = arith.addf %570, %572 : vector<64x32xf32>
    %cst_203 = arith.constant 0.000000e+00 : f32
    %574 = vector.broadcast %cst_203 : f32 to vector<64x32xf32>
    %575 = arith.maximumf %573, %574 : vector<64x32xf32>
    %576 = vector.extract_strided_slice %404 {offsets = [64, 0], sizes = [64, 32], strides = [1, 1]} : vector<128x32xf32> to vector<64x32xf32>
    %577 = arith.addf %576, %575 : vector<64x32xf32>
    %578 = tpu.concatenate %548, %577 in 0 : vector<64x32xf32>, vector<64x32xf32> -> vector<128x32xf32>
    %c0_204 = arith.constant 0 : index
    %c0_205 = arith.constant 0 : index
    %579 = vector.load %arg7[%c0_204, %c0_205] : memref<128x32xf32, #tpu.memory_space<vmem>>, vector<128x32xf32>
    tpu.vector_store %arg7[%c0_204, %c0_205], %578 {strides = array<i32>} : memref<128x32xf32, #tpu.memory_space<vmem>>, vector<128x32xf32>,
    %580 = tpu.concatenate %55, %443 in 1 : vector<16x1xf32>, vector<16x1xf32> -> vector<16x2xf32>
    %c0_206 = arith.constant 0 : index
    %c0_207 = arith.constant 0 : index
    %581 = vector.load %arg8[%c0_206, %c0_207] : memref<16x2xf32, #tpu.memory_space<vmem>>, vector<16x2xf32>
    tpu.vector_store %arg8[%c0_206, %c0_207], %580 {strides = array<i32>} : memref<16x2xf32, #tpu.memory_space<vmem>>, vector<16x2xf32>,
    return
  }
  func.func @transform_0(%arg0: i32) -> (i32, i32) {
    %c0_i32 = arith.constant 0 : i32
    %c0_i32_0 = arith.constant 0 : i32
    return %arg0, %c0_i32 : i32, i32
  }
  func.func @transform_1(%arg0: i32) -> (i32, i32) {
    %c0_i32 = arith.constant 0 : i32
    %c0_i32_0 = arith.constant 0 : i32
    return %arg0, %c0_i32 : i32, i32
  }
  func.func @transform_2(%arg0: i32) -> (i32, i32) {
    %c0_i32 = arith.constant 0 : i32
    %c0_i32_0 = arith.constant 0 : i32
    return %arg0, %c0_i32 : i32, i32
  }
  func.func @transform_3(%arg0: i32) -> (i32, i32) {
    %c0_i32 = arith.constant 0 : i32
    %c0_i32_0 = arith.constant 0 : i32
    return %arg0, %c0_i32 : i32, i32
  }
  func.func @transform_4(%arg0: i32) -> (i32, i32, i32) {
    %c0_i32 = arith.constant 0 : i32
    %c0_i32_0 = arith.constant 0 : i32
    %c0_i32_1 = arith.constant 0 : i32
    %c0_i32_2 = arith.constant 0 : i32
    return %c0_i32, %c0_i32_0, %c0_i32_1 : i32, i32, i32
  }
  func.func @transform_5(%arg0: i32) -> (i32, i32) {
    %c0_i32 = arith.constant 0 : i32
    %c0_i32_0 = arith.constant 0 : i32
    %c0_i32_1 = arith.constant 0 : i32
    return %c0_i32, %c0_i32_0 : i32, i32
  }
  func.func @transform_6(%arg0: i32) -> (i32, i32) {
    %c0_i32 = arith.constant 0 : i32
    %c0_i32_0 = arith.constant 0 : i32
    return %arg0, %c0_i32 : i32, i32
  }
  func.func @transform_7(%arg0: i32) -> (i32, i32) {
    %c0_i32 = arith.constant 0 : i32
    %c0_i32_0 = arith.constant 0 : i32
    return %arg0, %c0_i32 : i32, i32
  }
}

</mosaic_0001>

<llo_original>
// kernel: multihop_forward.1
$region0: #{multihop_forward.1}
  #allocation0 [shape = 'u32[]', space=smem, size = 0x4, offset = 0x4, fixed_abs, tag = 'smem constant byte address 0x4 - core index']
  #allocation1 [shape = 'u32[144,128]{1,0:T(1,128)}', space=vmem, size = 0x12000, scoped, tag = 'internal scratch']
  %s0 = inlined_call_operand.vmem [shape: f32[128,32], index: 0, kind: input, shape index: {}]
  %s1 = inlined_call_operand.vmem [shape: f32[16,32], index: 1, kind: input, shape index: {}]
  %s2 = inlined_call_operand.vmem [shape: f32[128,8], index: 2, kind: input, shape index: {}]
  %s3 = inlined_call_operand.vmem [shape: f32[16,1], index: 3, kind: input, shape index: {}]
  %s4 = inlined_call_operand.vmem [shape: f32[2,184,64], index: 4, kind: input, shape index: {}]
  %s5 = inlined_call_operand.vmem [shape: f32[296,32], index: 5, kind: input, shape index: {}]
  %s6 = inlined_call_operand.hbm [shape: f32[128,32], index: 6, kind: output, shape index: {0}]
  %s7 = inlined_call_operand.vmem [shape: f32[16,2], index: 7, kind: output, shape index: {1}]
  %8 = xla_tuple %s6, %s7
  %s9 = sld [smem:[#allocation0]]
  $region42: #{multihop_forward.1} parent=0
    _
  %s11 = ssub.s32 1, %s9
  %s12 = scalar_select 0, %s11, %s9
  $region1: #{multihop_forward.1} parent=0
    #allocation2 [shape = 'u8[65536]{0}', space=vmem, size = 0x10000, scoped, tag = 'output window, operand 0, single buffered']
    #allocation3 [shape = 's32[1]{0}', space=sflag, size = 0x4, scoped, tag = 'scoped memory for multihop_forward.1']
    %13 = vsyncpa [#allocation3], 0
    // Predicated region
    $region2: #{multihop_forward.1} parent=1 // pred_check
      _
    $region3: #{multihop_forward.1} parent=1 // pred_check_branch
      %15 = sbr.rel (0) target = $region5
    $region4: #{multihop_forward.1} parent=1 // pred_region
      _
    $region5: #{multihop_forward.1} parent=1 // pred_fallthru
      _
    // Predicated region
    $region6: #{multihop_forward.1} parent=1 // pred_check
      _
    $region7: #{multihop_forward.1} parent=1 // pred_check_branch
      %17 = sbr.rel (0) target = $region9
    $region8: #{multihop_forward.1} parent=1 // pred_region
      _
    $region9: #{multihop_forward.1} parent=1 // pred_fallthru
      _
    // Predicated region
    $region10: #{multihop_forward.1} parent=1 // pred_check
      _
    $region11: #{multihop_forward.1} parent=1 // pred_check_branch
      %19 = sbr.rel (0) target = $region13
    $region12: #{multihop_forward.1} parent=1 // pred_region
      _
    $region13: #{multihop_forward.1} parent=1 // pred_fallthru
      _
    // Predicated region
    $region14: #{multihop_forward.1} parent=1 // pred_check
      _
    $region15: #{multihop_forward.1} parent=1 // pred_check_branch
      %21 = sbr.rel (0) target = $region17
    $region16: #{multihop_forward.1} parent=1 // pred_region
      _
    $region17: #{multihop_forward.1} parent=1 // pred_fallthru
      _
    // Predicated region
    $region18: #{multihop_forward.1} parent=1 // pred_check
      _
    $region19: #{multihop_forward.1} parent=1 // pred_check_branch
      %23 = sbr.rel (0) target = $region21
    $region20: #{multihop_forward.1} parent=1 // pred_region
      _
    $region21: #{multihop_forward.1} parent=1 // pred_fallthru
      _
    // Predicated region
    $region22: #{multihop_forward.1} parent=1 // pred_check
      _
    $region23: #{multihop_forward.1} parent=1 // pred_check_branch
      %25 = sbr.rel (0) target = $region25
    $region24: #{multihop_forward.1} parent=1 // pred_region
      _
    $region25: #{multihop_forward.1} parent=1 // pred_fallthru
      _
    %v27 = vld [vmem:[%s1] sm:$0xff]
    %v28 = vld [vmem:[%s1 + $0x8] sm:$0xff]
    %v29 = vld [vmem:[%s3] sm:$0xff]
    %v30 = vld [vmem:[%s3 + $0x8] sm:$0xff]
    %v31 = vld [vmem:[%s2] sm:$0xff]
    %v32 = vld [vmem:[%s2 + $0x8] sm:$0xff]
    %v33 = vld [vmem:[%s2 + $0x10] sm:$0xff]
    %v34 = vld [vmem:[%s2 + $0x18] sm:$0xff]
    %v35 = vld [vmem:[%s2 + $0x20] sm:$0xff]
    %v36 = vld [vmem:[%s2 + $0x28] sm:$0xff]
    %v37 = vld [vmem:[%s2 + $0x30] sm:$0xff]
    %v38 = vld [vmem:[%s2 + $0x38] sm:$0xff]
    %v39 = vld [vmem:[%s2 + $0x40] sm:$0xff]
    %v40 = vld [vmem:[%s2 + $0x48] sm:$0xff]
    %v41 = vld [vmem:[%s2 + $0x50] sm:$0xff]
    %v42 = vld [vmem:[%s2 + $0x58] sm:$0xff]
    %v43 = vld [vmem:[%s2 + $0x60] sm:$0xff]
    %v44 = vld [vmem:[%s2 + $0x68] sm:$0xff]
    %v45 = vld [vmem:[%s2 + $0x70] sm:$0xff]
    %v46 = vld [vmem:[%s2 + $0x78] sm:$0xff]
    %v47 = vpack.c.bf16 %v32, %v31
    %v48 = vpack.c.bf16 %v34, %v33
    %v49 = vpack.c.bf16 %v36, %v35
    %v50 = vpack.c.bf16 %v38, %v37
    %v51 = vpack.c.bf16 %v40, %v39
    %v52 = vpack.c.bf16 %v42, %v41
    %v53 = vpack.c.bf16 %v44, %v43
    %v54 = vpack.c.bf16 %v46, %v45
    %v55 = vlaneseq
    %v56 = vshrl.u32 %v55, 7
    %v57 = vadd.s32 %v56, 8
    %v58 = vadd.s32 %v56, 16
    %v59 = vadd.s32 %v56, 24
    %v60 = vadd.s32 %v56, 32
    %v61 = vadd.s32 %v56, 40
    %v62 = vadd.s32 %v56, 48
    %v63 = vadd.s32 %v56, 56
    %v64 = vadd.s32 %v56, 64
    %v65 = vadd.s32 %v56, 72
    %v66 = vadd.s32 %v56, 80
    %v67 = vadd.s32 %v56, 88
    %v68 = vadd.s32 %v56, 96
    %v69 = vadd.s32 %v56, 104
    %v70 = vadd.s32 %v56, 112
    %v71 = vadd.s32 %v56, 120
    %vm72 = vcmp.lt.s32.totalorder %v56, 0
    %v73 = vsub.s32 0, %v56
    %v74 = vsel %vm72, %v73, %v56
    %v75 = vshrl.u32 %v74, 6
    %v76 = vand.u32 %v74, 63
    %v77 = vsub.s32 0, %v76
    %v78 = vsel %vm72, %v77, %v76
    %vm79 = vcmp.lt.s32.totalorder %v57, 0
    %v80 = vsub.s32 0, %v57
    %v81 = vsel %vm79, %v80, %v57
    %v82 = vshrl.u32 %v81, 6
    %v83 = vand.u32 %v81, 63
    %v84 = vsub.s32 0, %v83
    %v85 = vsel %vm79, %v84, %v83
    %vm86 = vcmp.lt.s32.totalorder %v58, 0
    %v87 = vsub.s32 0, %v58
    %v88 = vsel %vm86, %v87, %v58
    %v89 = vshrl.u32 %v88, 6
    %v90 = vand.u32 %v88, 63
    %v91 = vsub.s32 0, %v90
    %v92 = vsel %vm86, %v91, %v90
    %vm93 = vcmp.lt.s32.totalorder %v59, 0
    %v94 = vsub.s32 0, %v59
    %v95 = vsel %vm93, %v94, %v59
    %v96 = vshrl.u32 %v95, 6
    %v97 = vand.u32 %v95, 63
    %v98 = vsub.s32 0, %v97
    %v99 = vsel %vm93, %v98, %v97
    %vm100 = vcmp.lt.s32.totalorder %v60, 0
    %v101 = vsub.s32 0, %v60
    %v102 = vsel %vm100, %v101, %v60
    %v103 = vshrl.u32 %v102, 6
    %v104 = vand.u32 %v102, 63
    %v105 = vsub.s32 0, %v104
    %v106 = vsel %vm100, %v105, %v104
    %vm107 = vcmp.lt.s32.totalorder %v61, 0
    %v108 = vsub.s32 0, %v61
    %v109 = vsel %vm107, %v108, %v61
    %v110 = vshrl.u32 %v109, 6
    %v111 = vand.u32 %v109, 63
    %v112 = vsub.s32 0, %v111
    %v113 = vsel %vm107, %v112, %v111
    %vm114 = vcmp.lt.s32.totalorder %v62, 0
    %v115 = vsub.s32 0, %v62
    %v116 = vsel %vm114, %v115, %v62
    %v117 = vshrl.u32 %v116, 6
    %v118 = vand.u32 %v116, 63
    %v119 = vsub.s32 0, %v118
    %v120 = vsel %vm114, %v119, %v118
    %vm121 = vcmp.lt.s32.totalorder %v63, 0
    %v122 = vsub.s32 0, %v63
    %v123 = vsel %vm121, %v122, %v63
    %v124 = vshrl.u32 %v123, 6
    %v125 = vand.u32 %v123, 63
    %v126 = vsub.s32 0, %v125
    %v127 = vsel %vm121, %v126, %v125
    %vm128 = vcmp.lt.s32.totalorder %v64, 0
    %v129 = vsub.s32 0, %v64
    %v130 = vsel %vm128, %v129, %v64
    %v131 = vshrl.u32 %v130, 6
    %v132 = vand.u32 %v130, 63
    %v133 = vsub.s32 0, %v132
    %v134 = vsel %vm128, %v133, %v132
    %vm135 = vcmp.lt.s32.totalorder %v65, 0
    %v136 = vsub.s32 0, %v65
    %v137 = vsel %vm135, %v136, %v65
    %v138 = vshrl.u32 %v137, 6
    %v139 = vand.u32 %v137, 63
    %v140 = vsub.s32 0, %v139
    %v141 = vsel %vm135, %v140, %v139
    %vm142 = vcmp.lt.s32.totalorder %v66, 0
    %v143 = vsub.s32 0, %v66
    %v144 = vsel %vm142, %v143, %v66
    %v145 = vshrl.u32 %v144, 6
    %v146 = vand.u32 %v144, 63
    %v147 = vsub.s32 0, %v146
    %v148 = vsel %vm142, %v147, %v146
    %vm149 = vcmp.lt.s32.totalorder %v67, 0
    %v150 = vsub.s32 0, %v67
    %v151 = vsel %vm149, %v150, %v67
    %v152 = vshrl.u32 %v151, 6
    %v153 = vand.u32 %v151, 63
    %v154 = vsub.s32 0, %v153
    %v155 = vsel %vm149, %v154, %v153
    %vm156 = vcmp.lt.s32.totalorder %v68, 0
    %v157 = vsub.s32 0, %v68
    %v158 = vsel %vm156, %v157, %v68
    %v159 = vshrl.u32 %v158, 6
    %v160 = vand.u32 %v158, 63
    %v161 = vsub.s32 0, %v160
    %v162 = vsel %vm156, %v161, %v160
    %vm163 = vcmp.lt.s32.totalorder %v69, 0
    %v164 = vsub.s32 0, %v69
    %v165 = vsel %vm163, %v164, %v69
    %v166 = vshrl.u32 %v165, 6
    %v167 = vand.u32 %v165, 63
    %v168 = vsub.s32 0, %v167
    %v169 = vsel %vm163, %v168, %v167
    %vm170 = vcmp.lt.s32.totalorder %v70, 0
    %v171 = vsub.s32 0, %v70
    %v172 = vsel %vm170, %v171, %v70
    %v173 = vshrl.u32 %v172, 6
    %v174 = vand.u32 %v172, 63
    %v175 = vsub.s32 0, %v174
    %v176 = vsel %vm170, %v175, %v174
    %vm177 = vcmp.lt.s32.totalorder %v71, 0
    %v178 = vsub.s32 0, %v71
    %v179 = vsel %vm177, %v178, %v71
    %v180 = vshrl.u32 %v179, 6
    %v181 = vand.u32 %v179, 63
    %v182 = vsub.s32 0, %v181
    %v183 = vsel %vm177, %v182, %v181
    %vm184 = vcmp.ne.s32.totalorder %v78, 0
    %vm185 = vcmp.ne.s32.totalorder %v85, 0
    %vm186 = vcmp.ne.s32.totalorder %v92, 0
    %vm187 = vcmp.ne.s32.totalorder %v99, 0
    %vm188 = vcmp.ne.s32.totalorder %v106, 0
    %vm189 = vcmp.ne.s32.totalorder %v113, 0
    %vm190 = vcmp.ne.s32.totalorder %v120, 0
    %vm191 = vcmp.ne.s32.totalorder %v127, 0
    %vm192 = vcmp.ne.s32.totalorder %v134, 0
    %vm193 = vcmp.ne.s32.totalorder %v141, 0
    %vm194 = vcmp.ne.s32.totalorder %v148, 0
    %vm195 = vcmp.ne.s32.totalorder %v155, 0
    %vm196 = vcmp.ne.s32.totalorder %v162, 0
    %vm197 = vcmp.ne.s32.totalorder %v169, 0
    %vm198 = vcmp.ne.s32.totalorder %v176, 0
    %vm199 = vcmp.ne.s32.totalorder %v183, 0
    %vm200 = vcmp.lt.s32.totalorder %v78, 0
    %vm201 = vcmp.lt.s32.totalorder %v85, 0
    %vm202 = vcmp.lt.s32.totalorder %v92, 0
    %vm203 = vcmp.lt.s32.totalorder %v99, 0
    %vm204 = vcmp.lt.s32.totalorder %v106, 0
    %vm205 = vcmp.lt.s32.totalorder %v113, 0
    %vm206 = vcmp.lt.s32.totalorder %v120, 0
    %vm207 = vcmp.lt.s32.totalorder %v127, 0
    %vm208 = vcmp.lt.s32.totalorder %v134, 0
    %vm209 = vcmp.lt.s32.totalorder %v141, 0
    %vm210 = vcmp.lt.s32.totalorder %v148, 0
    %vm211 = vcmp.lt.s32.totalorder %v155, 0
    %vm212 = vcmp.lt.s32.totalorder %v162, 0
    %vm213 = vcmp.lt.s32.totalorder %v169, 0
    %vm214 = vcmp.lt.s32.totalorder %v176, 0
    %vm215 = vcmp.lt.s32.totalorder %v183, 0
    %vm216 = vmand %vm200, %vm184
    %vm217 = vmand %vm201, %vm185
    %vm218 = vmand %vm202, %vm186
    %vm219 = vmand %vm203, %vm187
    %vm220 = vmand %vm204, %vm188
    %vm221 = vmand %vm205, %vm189
    %vm222 = vmand %vm206, %vm190
    %vm223 = vmand %vm207, %vm191
    %vm224 = vmand %vm208, %vm192
    %vm225 = vmand %vm209, %vm193
    %vm226 = vmand %vm210, %vm194
    %vm227 = vmand %vm211, %vm195
    %vm228 = vmand %vm212, %vm196
    %vm229 = vmand %vm213, %vm197
    %vm230 = vmand %vm214, %vm198
    %vm231 = vmand %vm215, %vm199
    %v232 = vadd.s32 %v78, 64
    %v233 = vadd.s32 %v85, 64
    %v234 = vadd.s32 %v92, 64
    %v235 = vadd.s32 %v99, 64
    %v236 = vadd.s32 %v106, 64
    %v237 = vadd.s32 %v113, 64
    %v238 = vadd.s32 %v120, 64
    %v239 = vadd.s32 %v127, 64
    %v240 = vadd.s32 %v134, 64
    %v241 = vadd.s32 %v141, 64
    %v242 = vadd.s32 %v148, 64
    %v243 = vadd.s32 %v155, 64
    %v244 = vadd.s32 %v162, 64
    %v245 = vadd.s32 %v169, 64
    %v246 = vadd.s32 %v176, 64
    %v247 = vadd.s32 %v183, 64
    %v248 = vsel %vm216, %v232, %v78
    %v249 = vsel %vm217, %v233, %v85
    %v250 = vsel %vm218, %v234, %v92
    %v251 = vsel %vm219, %v235, %v99
    %v252 = vsel %vm220, %v236, %v106
    %v253 = vsel %vm221, %v237, %v113
    %v254 = vsel %vm222, %v238, %v120
    %v255 = vsel %vm223, %v239, %v127
    %v256 = vsel %vm224, %v240, %v134
    %v257 = vsel %vm225, %v241, %v141
    %v258 = vsel %vm226, %v242, %v148
    %v259 = vsel %vm227, %v243, %v155
    %v260 = vsel %vm228, %v244, %v162
    %v261 = vsel %vm229, %v245, %v169
    %v262 = vsel %vm230, %v246, %v176
    %v263 = vsel %vm231, %v247, %v183
    %v264 = vld [vmem:[%s0] sm:$0xff]
    %v265 = vld [vmem:[%s0 + $0x8] sm:$0xff]
    %v266 = vld [vmem:[%s0 + $0x10] sm:$0xff]
    %v267 = vld [vmem:[%s0 + $0x18] sm:$0xff]
    %v268 = vld [vmem:[%s0 + $0x20] sm:$0xff]
    %v269 = vld [vmem:[%s0 + $0x28] sm:$0xff]
    %v270 = vld [vmem:[%s0 + $0x30] sm:$0xff]
    %v271 = vld [vmem:[%s0 + $0x38] sm:$0xff]
    %v272 = vld [vmem:[%s0 + $0x40] sm:$0xff]
    %v273 = vld [vmem:[%s0 + $0x48] sm:$0xff]
    %v274 = vld [vmem:[%s0 + $0x50] sm:$0xff]
    %v275 = vld [vmem:[%s0 + $0x58] sm:$0xff]
    %v276 = vld [vmem:[%s0 + $0x60] sm:$0xff]
    %v277 = vld [vmem:[%s0 + $0x68] sm:$0xff]
    %v278 = vld [vmem:[%s0 + $0x70] sm:$0xff]
    %v279 = vld [vmem:[%s0 + $0x78] sm:$0xff]
    %vm280 = vcmask 261120
    %v281 = vsel %vm280, %v264, 0.0
    %v282 = vsel %vm280, %v265, 0.0
    %v283 = vadd.f32 %v281, %v282
    %v284 = vsel %vm280, %v266, 0.0
    %v285 = vadd.f32 %v283, %v284
    %v286 = vsel %vm280, %v267, 0.0
    %v287 = vadd.f32 %v285, %v286
    %v288 = vsel %vm280, %v268, 0.0
    %v289 = vadd.f32 %v287, %v288
    %v290 = vsel %vm280, %v269, 0.0
    %v291 = vadd.f32 %v289, %v290
    %v292 = vsel %vm280, %v270, 0.0
    %v293 = vadd.f32 %v291, %v292
    %v294 = vsel %vm280, %v271, 0.0
    %v295 = vadd.f32 %v293, %v294
    %v296 = vrot.slane %v295, 4
    %v297 = vadd.f32 %v295, %v296
    %v298 = vrot.slane %v297, 2
    %v299 = vadd.f32 %v297, %v298
    %v300 = vrot.slane %v299, 1
    %v301 = vadd.f32 %v299, %v300
    %v302 = vrcp.pop 64.0
    %v303 = vmul.f32 %v301, %v302
    %v304 = vsel %vm280, %v272, 0.0
    %v305 = vsel %vm280, %v273, 0.0
    %v306 = vadd.f32 %v304, %v305
    %v307 = vsel %vm280, %v274, 0.0
    %v308 = vadd.f32 %v306, %v307
    %v309 = vsel %vm280, %v275, 0.0
    %v310 = vadd.f32 %v308, %v309
    %v311 = vsel %vm280, %v276, 0.0
    %v312 = vadd.f32 %v310, %v311
    %v313 = vsel %vm280, %v277, 0.0
    %v314 = vadd.f32 %v312, %v313
    %v315 = vsel %vm280, %v278, 0.0
    %v316 = vadd.f32 %v314, %v315
    %v317 = vsel %vm280, %v279, 0.0
    %v318 = vadd.f32 %v316, %v317
    %v319 = vrot.slane %v318, 4
    %v320 = vadd.f32 %v318, %v319
    %v321 = vrot.slane %v320, 2
    %v322 = vadd.f32 %v320, %v321
    %v323 = vrot.slane %v322, 1
    %v324 = vadd.f32 %v322, %v323
    %v325 = vmul.f32 %v324, %v302
    %328 = vrot.lane.b32.xlu0 %v27, 32
    %v329 = vpop.permute.xlu0 %328
    %330 = vrot.lane.b32.xlu0 %v28, 32
    %v331 = vpop.permute.xlu0 %330
    %v334 = vsel %vm280, %v303, %v329
    %v335 = vsel %vm280, %v325, %v331
    %v336 = vld [vmem:[%s4] sm:$0xff]
    %v337 = vld [vmem:[%s4 + $0x8] sm:$0xff]
    %v338 = vld [vmem:[%s4 + $0x10] sm:$0xff]
    %v339 = vld [vmem:[%s4 + $0x18] sm:$0xff]
    %v340 = vld [vmem:[%s4 + $0x20] sm:$0xff]
    %v341 = vld [vmem:[%s4 + $0x28] sm:$0xff]
    %v342 = vld [vmem:[%s4 + $0x30] sm:$0xff]
    %v343 = vld [vmem:[%s4 + $0x38] sm:$0xff]
    %v344 = vld [vmem:[%s4 + $0x40] sm:$0x1]
    %v345 = vlaneseq
    %v346 = vshrl.u32 %v345, 7
    %v347 = vsub.s32 0, %v346
    %v348 = vrot.slane %v344, %v347
    %vm349 = vcmask 523264
    %v351 = vsel %vm349, %v334, 0
    %v354 = vsel %vm349, %v335, 0
    %356 = vmatprep.subr.mxu0 0.0
    %357 = vmatpush1.msra.mxu0 %v336
    %358 = vmatprep.subr.mxu0 0.0
    %359 = vmatpush1.msra.mxu0 %v337
    %360 = vmatprep.subr.mxu0 0.0
    %361 = vmatpush1.msra.mxu0 %v338
    %362 = vmatprep.subr.mxu0 0.0
    %363 = vmatpush1.msra.mxu0 %v339
    %364 = vmatprep.subr.mxu0 0.0
    %365 = vmatpush1.msra.mxu0 %v340
    %366 = vmatprep.subr.mxu0 0.0
    %367 = vmatpush1.msra.mxu0 %v341
    %368 = vmatprep.subr.mxu0 0.0
    %369 = vmatpush1.msra.mxu0 %v342
    %370 = vmatprep.subr.mxu0 0.0
    %371 = vmatpush1.msra.mxu0 %v343
    %372 = vmatprep.subr.mxu0 0.0
    %373 = vmatpush1.msra.mxu0 0.0
    %374 = vmatprep.subr.mxu0 0.0
    %375 = vmatpush1.msra.mxu0 0.0
    %376 = vmatprep.subr.mxu0 0.0
    %377 = vmatpush1.msra.mxu0 0.0
    %378 = vmatprep.subr.mxu0 0.0
    %379 = vmatpush1.msra.mxu0 0.0
    %380 = vmatprep.subr.mxu0 0.0
    %381 = vmatpush1.msra.mxu0 0.0
    %382 = vmatprep.subr.mxu0 0.0
    %383 = vmatpush1.msra.mxu0 0.0
    %384 = vmatprep.subr.mxu0 0.0
    %385 = vmatpush1.msra.mxu0 0.0
    %386 = vmatprep.subr.mxu0 0.0
    %387 = vmatpush1.msra.mxu0 0.0
    %388 = vmatprep.subr.mxu0 0.0
    %389 = vmatpush1.msra.mxu0 0.0
    %390 = vmatprep.subr.mxu0 0.0
    %391 = vmatpush1.msra.mxu0 0.0
    %392 = vmatprep.subr.mxu0 0.0
    %393 = vmatpush1.msra.mxu0 0.0
    %394 = vmatprep.subr.mxu0 0.0
    %395 = vmatpush1.msra.mxu0 0.0
    %396 = vmatprep.subr.mxu0 0.0
    %397 = vmatpush1.msra.mxu0 0.0
    %398 = vmatprep.subr.mxu0 0.0
    %399 = vmatpush1.msra.mxu0 0.0
    %400 = vmatprep.subr.mxu0 0.0
    %401 = vmatpush1.msra.mxu0 0.0
    %402 = vmatprep.subr.mxu0 0.0
    %403 = vmatpush1.msra.mxu0 0.0
    %404 = vmatprep.subr.mxu0 0.0
    %405 = vmatpush1.msra.mxu0 0.0
    %406 = vmatprep.subr.mxu0 0.0
    %407 = vmatpush1.msra.mxu0 0.0
    %408 = vmatprep.subr.mxu0 0.0
    %409 = vmatpush1.msra.mxu0 0.0
    %410 = vmatprep.subr.mxu0 0.0
    %411 = vmatpush1.msra.mxu0 0.0
    %412 = vmatprep.subr.mxu0 0.0
    %413 = vmatpush1.msra.mxu0 0.0
    %414 = vmatprep.subr.mxu0 0.0
    %415 = vmatpush1.msra.mxu0 0.0
    %416 = vmatprep.subr.mxu0 0.0
    %417 = vmatpush1.msra.mxu0 0.0
    %418 = vmatprep.subr.mxu0 0.0
    %419 = vmatpush1.msra.mxu0 0.0
    %420 = vmatprep.mubr.f32.mxu0 0.0
    %421 = vmatmul.mubr.f32.gmra.mrb[0].mxu0 %v351
    %v422 = vpop.f32.mrb[0].mxu0
    %v423 = vadd.f32 %v348, %v422
    %v424 = vpop.f32.mrb[0].mxu0
    %425 = vmatprep.mubr.f32.mxu0 0.0
    %426 = vmatmul.mubr.f32.gmra.mrb[0].mxu0 %v354
    %v427 = vpop.f32.mrb[0].mxu0
    %v428 = vadd.f32 %v348, %v427
    %v429 = vpop.f32.mrb[0].mxu0
    %430 = vdwg.mxu0
    %v431 = vtanh.pop %v423
    %v432 = vtanh.pop %v428
    %v433 = vld [vmem:[%s4 + $0x48] sm:$0xff]
    %v434 = vld [vmem:[%s4 + $0x50] sm:$0xff]
    %v435 = vld [vmem:[%s4 + $0x58] sm:$0x1]
    %v436 = vlaneseq
    %v437 = vshrl.u32 %v436, 7
    %v438 = vsub.s32 0, %v437
    %v439 = vrot.slane %v435, %v438
    %vm440 = vcmask 130048
    %v442 = vsel %vm440, %v431, 0
    %v445 = vsel %vm440, %v432, 0
    %447 = vmatprep.subr.mxu0 0.0
    %448 = vmatpush1.msra.mxu0 %v433
    %449 = vmatprep.subr.mxu0 0.0
    %450 = vmatpush1.msra.mxu0 %v434
    %451 = vmatprep.subr.mxu0 0.0
    %452 = vmatpush1.msra.mxu0 0.0
    %453 = vmatprep.subr.mxu0 0.0
    %454 = vmatpush1.msra.mxu0 0.0
    %455 = vmatprep.subr.mxu0 0.0
    %456 = vmatpush1.msra.mxu0 0.0
    %457 = vmatprep.subr.mxu0 0.0
    %458 = vmatpush1.msra.mxu0 0.0
    %459 = vmatprep.subr.mxu0 0.0
    %460 = vmatpush1.msra.mxu0 0.0
    %461 = vmatprep.subr.mxu0 0.0
    %462 = vmatpush1.msra.mxu0 0.0
    %463 = vmatprep.subr.mxu0 0.0
    %464 = vmatpush1.msra.mxu0 0.0
    %465 = vmatprep.subr.mxu0 0.0
    %466 = vmatpush1.msra.mxu0 0.0
    %467 = vmatprep.subr.mxu0 0.0
    %468 = vmatpush1.msra.mxu0 0.0
    %469 = vmatprep.subr.mxu0 0.0
    %470 = vmatpush1.msra.mxu0 0.0
    %471 = vmatprep.subr.mxu0 0.0
    %472 = vmatpush1.msra.mxu0 0.0
    %473 = vmatprep.subr.mxu0 0.0
    %474 = vmatpush1.msra.mxu0 0.0
    %475 = vmatprep.subr.mxu0 0.0
    %476 = vmatpush1.msra.mxu0 0.0
    %477 = vmatprep.subr.mxu0 0.0
    %478 = vmatpush1.msra.mxu0 0.0
    %479 = vmatprep.subr.mxu0 0.0
    %480 = vmatpush1.msra.mxu0 0.0
    %481 = vmatprep.subr.mxu0 0.0
    %482 = vmatpush1.msra.mxu0 0.0
    %483 = vmatprep.subr.mxu0 0.0
    %484 = vmatpush1.msra.mxu0 0.0
    %485 = vmatprep.subr.mxu0 0.0
    %486 = vmatpush1.msra.mxu0 0.0
    %487 = vmatprep.subr.mxu0 0.0
    %488 = vmatpush1.msra.mxu0 0.0
    %489 = vmatprep.subr.mxu0 0.0
    %490 = vmatpush1.msra.mxu0 0.0
    %491 = vmatprep.subr.mxu0 0.0
    %492 = vmatpush1.msra.mxu0 0.0
    %493 = vmatprep.subr.mxu0 0.0
    %494 = vmatpush1.msra.mxu0 0.0
    %495 = vmatprep.subr.mxu0 0.0
    %496 = vmatpush1.msra.mxu0 0.0
    %497 = vmatprep.subr.mxu0 0.0
    %498 = vmatpush1.msra.mxu0 0.0
    %499 = vmatprep.subr.mxu0 0.0
    %500 = vmatpush1.msra.mxu0 0.0
    %501 = vmatprep.subr.mxu0 0.0
    %502 = vmatpush1.msra.mxu0 0.0
    %503 = vmatprep.subr.mxu0 0.0
    %504 = vmatpush1.msra.mxu0 0.0
    %505 = vmatprep.subr.mxu0 0.0
    %506 = vmatpush1.msra.mxu0 0.0
    %507 = vmatprep.subr.mxu0 0.0
    %508 = vmatpush1.msra.mxu0 0.0
    %509 = vmatprep.subr.mxu0 0.0
    %510 = vmatpush1.msra.mxu0 0.0
    %511 = vmatprep.mubr.f32.mxu0 0.0
    %512 = vmatmul.mubr.f32.gmra.mrb[0].mxu0 %v442
    %v513 = vpop.f32.mrb[0].mxu0
    %v514 = vadd.f32 %v439, %v513
    %v515 = vpop.f32.mrb[0].mxu0
    %516 = vmatprep.mubr.f32.mxu0 0.0
    %517 = vmatmul.mubr.f32.gmra.mrb[0].mxu0 %v445
    %v518 = vpop.f32.mrb[0].mxu0
    %v519 = vadd.f32 %v439, %v518
    %v520 = vpop.f32.mrb[0].mxu0
    %521 = vdwg.mxu0
    %v522 = vmul.f32 %v514, 10.0
    %vm523 = vcmask 7168
    %v524 = vsel %vm523, %v522, -inf
    %v525 = vrot.slane %v524, 4
    %v526 = vmax.f32 %v524, %v525
    %v527 = vrot.slane %v526, 2
    %v528 = vmax.f32 %v526, %v527
    %v529 = vrot.slane %v528, 1
    %v530 = vmax.f32 %v528, %v529
    %v531 = vsub.f32 %v522, %v530
    %v532 = vmul.f32 %v531, 1.442695
    %v533 = vpow.pop %v532
    %v534 = vsel %vm523, %v533, 0.0
    %v535 = vrot.slane %v534, 4
    %v536 = vadd.f32 %v534, %v535
    %v537 = vrot.slane %v536, 2
    %v538 = vadd.f32 %v536, %v537
    %v539 = vrot.slane %v538, 1
    %v540 = vadd.f32 %v538, %v539
    %v541 = vrcp.pop %v540
    %v542 = vmul.f32 %v533, %v541
    %v543 = vmul.f32 %v542, %v29
    %v544 = vsel %vm523, %v543, 0.0
    %v545 = vrot.slane %v544, 4
    %v546 = vadd.f32 %v544, %v545
    %v547 = vrot.slane %v546, 2
    %v548 = vadd.f32 %v546, %v547
    %v549 = vrot.slane %v548, 1
    %v550 = vadd.f32 %v548, %v549
    %v551 = vadd.f32 %v550, 1e-08
    %v552 = vrcp.pop %v551
    %v553 = vmul.f32 %v543, %v552
    %555 = vset.pattern.permute.xlu0 0
    %556 = vperm.xlu0 %555, %v553
    %v557 = vpop.permute.xlu0 %556
    %v559 = vmul.f32 %v27, %v557
    %v560 = vsel %vm280, %v559, 0.0
    %v561 = vrot.slane %v560, 4
    %v562 = vadd.f32 %v560, %v561
    %v563 = vrot.slane %v562, 2
    %v564 = vadd.f32 %v562, %v563
    %v565 = vrot.slane %v564, 1
    %v566 = vadd.f32 %v564, %v565
    %v567 = vmul.f32 %v519, 10.0
    %v568 = vsel %vm523, %v567, -inf
    %v569 = vrot.slane %v568, 4
    %v570 = vmax.f32 %v568, %v569
    %v571 = vrot.slane %v570, 2
    %v572 = vmax.f32 %v570, %v571
    %v573 = vrot.slane %v572, 1
    %v574 = vmax.f32 %v572, %v573
    %v575 = vsub.f32 %v567, %v574
    %v576 = vmul.f32 %v575, 1.442695
    %v577 = vpow.pop %v576
    %v578 = vsel %vm523, %v577, 0.0
    %v579 = vrot.slane %v578, 4
    %v580 = vadd.f32 %v578, %v579
    %v581 = vrot.slane %v580, 2
    %v582 = vadd.f32 %v580, %v581
    %v583 = vrot.slane %v582, 1
    %v584 = vadd.f32 %v582, %v583
    %v585 = vrcp.pop %v584
    %v586 = vmul.f32 %v577, %v585
    %v587 = vmul.f32 %v586, %v30
    %v588 = vsel %vm523, %v587, 0.0
    %v589 = vrot.slane %v588, 4
    %v590 = vadd.f32 %v588, %v589
    %v591 = vrot.slane %v590, 2
    %v592 = vadd.f32 %v590, %v591
    %v593 = vrot.slane %v592, 1
    %v594 = vadd.f32 %v592, %v593
    %v595 = vadd.f32 %v594, 1e-08
    %v596 = vrcp.pop %v595
    %v597 = vmul.f32 %v587, %v596
    %599 = vset.pattern.permute.xlu0 0
    %600 = vperm.xlu0 %599, %v597
    %v601 = vpop.permute.xlu0 %600
    %v603 = vmul.f32 %v28, %v601
    %v604 = vsel %vm280, %v603, 0.0
    %v605 = vrot.slane %v604, 4
    %v606 = vadd.f32 %v604, %v605
    %v607 = vrot.slane %v606, 2
    %v608 = vadd.f32 %v606, %v607
    %v609 = vrot.slane %v608, 1
    %v610 = vadd.f32 %v608, %v609
    %vm611 = vcmask 1040384
    %v612 = vsel %vm611, %v566, %v610
    %v613 = vld [vmem:[%s4 + $0x60] sm:$0xff]
    %v614 = vld [vmem:[%s4 + $0x68] sm:$0xff]
    %v615 = vld [vmem:[%s4 + $0x70] sm:$0xff]
    %v616 = vld [vmem:[%s4 + $0x78] sm:$0xff]
    %v617 = vld [vmem:[%s4 + $0x80] sm:$0x1]
    %v618 = vlaneseq
    %v619 = vshrl.u32 %v618, 7
    %v620 = vsub.s32 0, %v619
    %v621 = vrot.slane %v617, %v620
    %v623 = vsel %vm280, %v612, 0
    %625 = vmatprep.subr.mxu0 0.0
    %626 = vmatpush1.msra.mxu0 %v613
    %627 = vmatprep.subr.mxu0 0.0
    %628 = vmatpush1.msra.mxu0 %v614
    %629 = vmatprep.subr.mxu0 0.0
    %630 = vmatpush1.msra.mxu0 %v615
    %631 = vmatprep.subr.mxu0 0.0
    %632 = vmatpush1.msra.mxu0 %v616
    %633 = vmatprep.subr.mxu0 0.0
    %634 = vmatpush1.msra.mxu0 0.0
    %635 = vmatprep.subr.mxu0 0.0
    %636 = vmatpush1.msra.mxu0 0.0
    %637 = vmatprep.subr.mxu0 0.0
    %638 = vmatpush1.msra.mxu0 0.0
    %639 = vmatprep.subr.mxu0 0.0
    %640 = vmatpush1.msra.mxu0 0.0
    %641 = vmatprep.subr.mxu0 0.0
    %642 = vmatpush1.msra.mxu0 0.0
    %643 = vmatprep.subr.mxu0 0.0
    %644 = vmatpush1.msra.mxu0 0.0
    %645 = vmatprep.subr.mxu0 0.0
    %646 = vmatpush1.msra.mxu0 0.0
    %647 = vmatprep.subr.mxu0 0.0
    %648 = vmatpush1.msra.mxu0 0.0
    %649 = vmatprep.subr.mxu0 0.0
    %650 = vmatpush1.msra.mxu0 0.0
    %651 = vmatprep.subr.mxu0 0.0
    %652 = vmatpush1.msra.mxu0 0.0
    %653 = vmatprep.subr.mxu0 0.0
    %654 = vmatpush1.msra.mxu0 0.0
    %655 = vmatprep.subr.mxu0 0.0
    %656 = vmatpush1.msra.mxu0 0.0
    %657 = vmatprep.subr.mxu0 0.0
    %658 = vmatpush1.msra.mxu0 0.0
    %659 = vmatprep.subr.mxu0 0.0
    %660 = vmatpush1.msra.mxu0 0.0
    %661 = vmatprep.subr.mxu0 0.0
    %662 = vmatpush1.msra.mxu0 0.0
    %663 = vmatprep.subr.mxu0 0.0
    %664 = vmatpush1.msra.mxu0 0.0
    %665 = vmatprep.subr.mxu0 0.0
    %666 = vmatpush1.msra.mxu0 0.0
    %667 = vmatprep.subr.mxu0 0.0
    %668 = vmatpush1.msra.mxu0 0.0
    %669 = vmatprep.subr.mxu0 0.0
    %670 = vmatpush1.msra.mxu0 0.0
    %671 = vmatprep.subr.mxu0 0.0
    %672 = vmatpush1.msra.mxu0 0.0
    %673 = vmatprep.subr.mxu0 0.0
    %674 = vmatpush1.msra.mxu0 0.0
    %675 = vmatprep.subr.mxu0 0.0
    %676 = vmatpush1.msra.mxu0 0.0
    %677 = vmatprep.subr.mxu0 0.0
    %678 = vmatpush1.msra.mxu0 0.0
    %679 = vmatprep.subr.mxu0 0.0
    %680 = vmatpush1.msra.mxu0 0.0
    %681 = vmatprep.subr.mxu0 0.0
    %682 = vmatpush1.msra.mxu0 0.0
    %683 = vmatprep.subr.mxu0 0.0
    %684 = vmatpush1.msra.mxu0 0.0
    %685 = vmatprep.subr.mxu0 0.0
    %686 = vmatpush1.msra.mxu0 0.0
    %687 = vmatprep.subr.mxu0 0.0
    %688 = vmatpush1.msra.mxu0 0.0
    %689 = vmatprep.mubr.f32.mxu0 0.0
    %690 = vmatmul.mubr.f32.gmra.mrb[0].mxu0 %v623
    %v691 = vpop.f32.mrb[0].mxu0
    %v692 = vadd.f32 %v621, %v691
    %v693 = vpop.f32.mrb[0].mxu0
    %694 = vdwg.mxu0
    %v695 = vtanh.pop %v692
    %v696 = vpack.c.bf16 %v265, %v264
    %v697 = vpack.c.bf16 %v267, %v266
    %v698 = vpack.c.bf16 %v269, %v268
    %v699 = vpack.c.bf16 %v271, %v270
    %v700 = vpack.c.bf16 %v273, %v272
    %v701 = vpack.c.bf16 %v275, %v274
    %v702 = vpack.c.bf16 %v277, %v276
    %v703 = vpack.c.bf16 %v279, %v278
    %v704 = vld [vmem:[%s4 + $0x88] sm:$0xff]
    %v705 = vld [vmem:[%s4 + $0x90] sm:$0xff]
    %v706 = vld [vmem:[%s4 + $0x98] sm:$0xff]
    %v707 = vld [vmem:[%s4 + $0xa0] sm:$0xff]
    %v708 = vpack.c.bf16 %v705, %v704
    %v709 = vpack.c.bf16 %v707, %v706
    %v710 = vld [vmem:[%s4 + $0xa8] sm:$0xff]
    %v711 = vpack.c.bf16 %v710, %v710
    %vm712 = vcmask 64512
    %v714 = vsel %vm712, %v47, 0
    %v717 = vsel %vm712, %v48, 0
    %v720 = vsel %vm712, %v49, 0
    %v723 = vsel %vm712, %v50, 0
    %v726 = vsel %vm712, %v51, 0
    %v729 = vsel %vm712, %v52, 0
    %v732 = vsel %vm712, %v53, 0
    %v735 = vsel %vm712, %v54, 0
    %vm737 = vcmask 1043456
    %v739 = vsel %vm737, %v711, 0
    %741 = vmatprep.subr.bf16.mxu0 0
    %742 = vmatpush1.bf16.msra.mxu0 %v739
    %743 = vmatprep.subr.bf16.mxu0 0
    %744 = vmatpush1.bf16.msra.mxu0 0
    %745 = vmatprep.subr.bf16.mxu0 0
    %746 = vmatpush1.bf16.msra.mxu0 0
    %747 = vmatprep.subr.bf16.mxu0 0
    %748 = vmatpush1.bf16.msra.mxu0 0
    %749 = vmatprep.subr.bf16.mxu0 0
    %750 = vmatpush1.bf16.msra.mxu0 0
    %751 = vmatprep.subr.bf16.mxu0 0
    %752 = vmatpush1.bf16.msra.mxu0 0
    %753 = vmatprep.subr.bf16.mxu0 0
    %754 = vmatpush1.bf16.msra.mxu0 0
    %755 = vmatprep.subr.bf16.mxu0 0
    %756 = vmatpush1.bf16.msra.mxu0 0
    %757 = vmatprep.subr.bf16.mxu0 0
    %758 = vmatpush1.bf16.msra.mxu0 0
    %759 = vmatprep.subr.bf16.mxu0 0
    %760 = vmatpush1.bf16.msra.mxu0 0
    %761 = vmatprep.subr.bf16.mxu0 0
    %762 = vmatpush1.bf16.msra.mxu0 0
    %763 = vmatprep.subr.bf16.mxu0 0
    %764 = vmatpush1.bf16.msra.mxu0 0
    %765 = vmatprep.subr.bf16.mxu0 0
    %766 = vmatpush1.bf16.msra.mxu0 0
    %767 = vmatprep.subr.bf16.mxu0 0
    %768 = vmatpush1.bf16.msra.mxu0 0
    %769 = vmatprep.subr.bf16.mxu0 0
    %770 = vmatpush1.bf16.msra.mxu0 0
    %771 = vmatprep.subr.bf16.mxu0 0
    %772 = vmatpush1.bf16.msra.mxu0 0
    %773 = vmatprep.mubr.bf16.mxu0 0
    %774 = vmatmul.mubr.bf16.gmra.mrb[0].mxu0 %v714
    %v775 = vpop.f32.mrb[0].mxu0
    %v776 = vadd.f32 0.0, %v775
    %v777 = vpop.f32.mrb[0].mxu0
    %v778 = vpop.f32.mrb[0].mxu0
    %v779 = vadd.f32 0.0, %v778
    %v780 = vpop.f32.mrb[0].mxu0
    %781 = vmatprep.mubr.bf16.mxu0 0
    %782 = vmatmul.mubr.bf16.gmra.mrb[0].mxu0 %v717
    %v783 = vpop.f32.mrb[0].mxu0
    %v784 = vadd.f32 0.0, %v783
    %v785 = vpop.f32.mrb[0].mxu0
    %v786 = vpop.f32.mrb[0].mxu0
    %v787 = vadd.f32 0.0, %v786
    %v788 = vpop.f32.mrb[0].mxu0
    %789 = vmatprep.mubr.bf16.mxu0 0
    %790 = vmatmul.mubr.bf16.gmra.mrb[0].mxu0 %v720
    %v791 = vpop.f32.mrb[0].mxu0
    %v792 = vadd.f32 0.0, %v791
    %v793 = vpop.f32.mrb[0].mxu0
    %v794 = vpop.f32.mrb[0].mxu0
    %v795 = vadd.f32 0.0, %v794
    %v796 = vpop.f32.mrb[0].mxu0
    %797 = vmatprep.mubr.bf16.mxu0 0
    %798 = vmatmul.mubr.bf16.gmra.mrb[0].mxu0 %v723
    %v799 = vpop.f32.mrb[0].mxu0
    %v800 = vadd.f32 0.0, %v799
    %v801 = vpop.f32.mrb[0].mxu0
    %v802 = vpop.f32.mrb[0].mxu0
    %v803 = vadd.f32 0.0, %v802
    %v804 = vpop.f32.mrb[0].mxu0
    %805 = vmatprep.mubr.bf16.mxu0 0
    %806 = vmatmul.mubr.bf16.gmra.mrb[0].mxu0 %v726
    %v807 = vpop.f32.mrb[0].mxu0
    %v808 = vadd.f32 0.0, %v807
    %v809 = vpop.f32.mrb[0].mxu0
    %v810 = vpop.f32.mrb[0].mxu0
    %v811 = vadd.f32 0.0, %v810
    %v812 = vpop.f32.mrb[0].mxu0
    %813 = vmatprep.mubr.bf16.mxu0 0
    %814 = vmatmul.mubr.bf16.gmra.mrb[0].mxu0 %v729
    %v815 = vpop.f32.mrb[0].mxu0
    %v816 = vadd.f32 0.0, %v815
    %v817 = vpop.f32.mrb[0].mxu0
    %v818 = vpop.f32.mrb[0].mxu0
    %v819 = vadd.f32 0.0, %v818
    %v820 = vpop.f32.mrb[0].mxu0
    %821 = vmatprep.mubr.bf16.mxu0 0
    %822 = vmatmul.mubr.bf16.gmra.mrb[0].mxu0 %v732
    %v823 = vpop.f32.mrb[0].mxu0
    %v824 = vadd.f32 0.0, %v823
    %v825 = vpop.f32.mrb[0].mxu0
    %v826 = vpop.f32.mrb[0].mxu0
    %v827 = vadd.f32 0.0, %v826
    %v828 = vpop.f32.mrb[0].mxu0
    %829 = vmatprep.mubr.bf16.mxu0 0
    %830 = vmatmul.mubr.bf16.gmra.mrb[0].mxu0 %v735
    %v831 = vpop.f32.mrb[0].mxu0
    %v832 = vadd.f32 0.0, %v831
    %v833 = vpop.f32.mrb[0].mxu0
    %v834 = vpop.f32.mrb[0].mxu0
    %v835 = vadd.f32 0.0, %v834
    %v836 = vpop.f32.mrb[0].mxu0
    %837 = vdwg.mxu0
    %v839 = vsel %vm280, %v696, 0
    %v842 = vsel %vm280, %v697, 0
    %v845 = vsel %vm280, %v698, 0
    %v848 = vsel %vm280, %v699, 0
    %v851 = vsel %vm280, %v700, 0
    %v854 = vsel %vm280, %v701, 0
    %v857 = vsel %vm280, %v702, 0
    %v860 = vsel %vm280, %v703, 0
    %862 = vmatprep.subr.bf16.mxu0 0
    %863 = vmatpush1.bf16.msra.mxu0 %v708
    %864 = vmatprep.subr.bf16.mxu0 0
    %865 = vmatpush1.bf16.msra.mxu0 %v709
    %866 = vmatprep.subr.bf16.mxu0 0
    %867 = vmatpush1.bf16.msra.mxu0 0
    %868 = vmatprep.subr.bf16.mxu0 0
    %869 = vmatpush1.bf16.msra.mxu0 0
    %870 = vmatprep.subr.bf16.mxu0 0
    %871 = vmatpush1.bf16.msra.mxu0 0
    %872 = vmatprep.subr.bf16.mxu0 0
    %873 = vmatpush1.bf16.msra.mxu0 0
    %874 = vmatprep.subr.bf16.mxu0 0
    %875 = vmatpush1.bf16.msra.mxu0 0
    %876 = vmatprep.subr.bf16.mxu0 0
    %877 = vmatpush1.bf16.msra.mxu0 0
    %878 = vmatprep.subr.bf16.mxu0 0
    %879 = vmatpush1.bf16.msra.mxu0 0
    %880 = vmatprep.subr.bf16.mxu0 0
    %881 = vmatpush1.bf16.msra.mxu0 0
    %882 = vmatprep.subr.bf16.mxu0 0
    %883 = vmatpush1.bf16.msra.mxu0 0
    %884 = vmatprep.subr.bf16.mxu0 0
    %885 = vmatpush1.bf16.msra.mxu0 0
    %886 = vmatprep.subr.bf16.mxu0 0
    %887 = vmatpush1.bf16.msra.mxu0 0
    %888 = vmatprep.subr.bf16.mxu0 0
    %889 = vmatpush1.bf16.msra.mxu0 0
    %890 = vmatprep.subr.bf16.mxu0 0
    %891 = vmatpush1.bf16.msra.mxu0 0
    %892 = vmatprep.subr.bf16.mxu0 0
    %893 = vmatpush1.bf16.msra.mxu0 0
    %894 = vmatprep.mubr.bf16.mxu0 0
    %895 = vmatmul.mubr.bf16.gmra.mrb[0].mxu0 %v839
    %v896 = vpop.f32.mrb[0].mxu0
    %v897 = vadd.f32 %v776, %v896
    %v898 = vpop.f32.mrb[0].mxu0
    %v899 = vpop.f32.mrb[0].mxu0
    %v900 = vadd.f32 %v779, %v899
    %v901 = vpop.f32.mrb[0].mxu0
    %902 = vmatprep.mubr.bf16.mxu0 0
    %903 = vmatmul.mubr.bf16.gmra.mrb[0].mxu0 %v842
    %v904 = vpop.f32.mrb[0].mxu0
    %v905 = vadd.f32 %v784, %v904
    %v906 = vpop.f32.mrb[0].mxu0
    %v907 = vpop.f32.mrb[0].mxu0
    %v908 = vadd.f32 %v787, %v907
    %v909 = vpop.f32.mrb[0].mxu0
    %910 = vmatprep.mubr.bf16.mxu0 0
    %911 = vmatmul.mubr.bf16.gmra.mrb[0].mxu0 %v845
    %v912 = vpop.f32.mrb[0].mxu0
    %v913 = vadd.f32 %v792, %v912
    %v914 = vpop.f32.mrb[0].mxu0
    %v915 = vpop.f32.mrb[0].mxu0
    %v916 = vadd.f32 %v795, %v915
    %v917 = vpop.f32.mrb[0].mxu0
    %918 = vmatprep.mubr.bf16.mxu0 0
    %919 = vmatmul.mubr.bf16.gmra.mrb[0].mxu0 %v848
    %v920 = vpop.f32.mrb[0].mxu0
    %v921 = vadd.f32 %v800, %v920
    %v922 = vpop.f32.mrb[0].mxu0
    %v923 = vpop.f32.mrb[0].mxu0
    %v924 = vadd.f32 %v803, %v923
    %v925 = vpop.f32.mrb[0].mxu0
    %926 = vmatprep.mubr.bf16.mxu0 0
    %927 = vmatmul.mubr.bf16.gmra.mrb[0].mxu0 %v851
    %v928 = vpop.f32.mrb[0].mxu0
    %v929 = vadd.f32 %v808, %v928
    %v930 = vpop.f32.mrb[0].mxu0
    %v931 = vpop.f32.mrb[0].mxu0
    %v932 = vadd.f32 %v811, %v931
    %v933 = vpop.f32.mrb[0].mxu0
    %934 = vmatprep.mubr.bf16.mxu0 0
    %935 = vmatmul.mubr.bf16.gmra.mrb[0].mxu0 %v854
    %v936 = vpop.f32.mrb[0].mxu0
    %v937 = vadd.f32 %v816, %v936
    %v938 = vpop.f32.mrb[0].mxu0
    %v939 = vpop.f32.mrb[0].mxu0
    %v940 = vadd.f32 %v819, %v939
    %v941 = vpop.f32.mrb[0].mxu0
    %942 = vmatprep.mubr.bf16.mxu0 0
    %943 = vmatmul.mubr.bf16.gmra.mrb[0].mxu0 %v857
    %v944 = vpop.f32.mrb[0].mxu0
    %v945 = vadd.f32 %v824, %v944
    %v946 = vpop.f32.mrb[0].mxu0
    %v947 = vpop.f32.mrb[0].mxu0
    %v948 = vadd.f32 %v827, %v947
    %v949 = vpop.f32.mrb[0].mxu0
    %950 = vmatprep.mubr.bf16.mxu0 0
    %951 = vmatmul.mubr.bf16.gmra.mrb[0].mxu0 %v860
    %v952 = vpop.f32.mrb[0].mxu0
    %v953 = vadd.f32 %v832, %v952
    %v954 = vpop.f32.mrb[0].mxu0
    %v955 = vpop.f32.mrb[0].mxu0
    %v956 = vadd.f32 %v835, %v955
    %v957 = vpop.f32.mrb[0].mxu0
    %958 = vdwg.mxu0
    %v959 = vld [vmem:[%s4 + $0xb0] sm:$0x1]
    %v960 = vlaneseq
    %v961 = vshrl.u32 %v960, 7
    %v962 = vsub.s32 0, %v961
    %v963 = vrot.slane %v959, %v962
    %v964 = vadd.f32 %v897, %v963
    %v965 = vadd.f32 %v900, %v963
    %v966 = vadd.f32 %v905, %v963
    %v967 = vadd.f32 %v908, %v963
    %v968 = vadd.f32 %v913, %v963
    %v969 = vadd.f32 %v916, %v963
    %v970 = vadd.f32 %v921, %v963
    %v971 = vadd.f32 %v924, %v963
    %v972 = vadd.f32 %v929, %v963
    %v973 = vadd.f32 %v932, %v963
    %v974 = vadd.f32 %v937, %v963
    %v975 = vadd.f32 %v940, %v963
    %v976 = vadd.f32 %v945, %v963
    %v977 = vadd.f32 %v948, %v963
    %v978 = vadd.f32 %v953, %v963
    %v979 = vadd.f32 %v956, %v963
    %v980 = vsel %vm280, %v964, 0.0
    %v981 = vsel %vm280, %v965, 0.0
    %v982 = vadd.f32 %v980, %v981
    %v983 = vsel %vm280, %v966, 0.0
    %v984 = vadd.f32 %v982, %v983
    %v985 = vsel %vm280, %v967, 0.0
    %v986 = vadd.f32 %v984, %v985
    %v987 = vsel %vm280, %v968, 0.0
    %v988 = vadd.f32 %v986, %v987
    %v989 = vsel %vm280, %v969, 0.0
    %v990 = vadd.f32 %v988, %v989
    %v991 = vsel %vm280, %v970, 0.0
    %v992 = vadd.f32 %v990, %v991
    %v993 = vsel %vm280, %v971, 0.0
    %v994 = vadd.f32 %v992, %v993
    %v995 = vrot.slane %v994, 4
    %v996 = vadd.f32 %v994, %v995
    %v997 = vrot.slane %v996, 2
    %v998 = vadd.f32 %v996, %v997
    %v999 = vrot.slane %v998, 1
    %v1000 = vadd.f32 %v998, %v999
    %v1001 = vmul.f32 %v1000, %v302
    %v1002 = vsub.f32 %v964, %v1001
    %v1003 = vsub.f32 %v965, %v1001
    %v1004 = vsub.f32 %v966, %v1001
    %v1005 = vsub.f32 %v967, %v1001
    %v1006 = vsub.f32 %v968, %v1001
    %v1007 = vsub.f32 %v969, %v1001
    %v1008 = vsub.f32 %v970, %v1001
    %v1009 = vsub.f32 %v971, %v1001
    %v1010 = vmul.f32 %v1002, %v1002
    %v1011 = vmul.f32 %v1003, %v1003
    %v1012 = vmul.f32 %v1004, %v1004
    %v1013 = vmul.f32 %v1005, %v1005
    %v1014 = vmul.f32 %v1006, %v1006
    %v1015 = vmul.f32 %v1007, %v1007
    %v1016 = vmul.f32 %v1008, %v1008
    %v1017 = vmul.f32 %v1009, %v1009
    %v1018 = vsel %vm280, %v1010, 0.0
    %v1019 = vsel %vm280, %v1011, 0.0
    %v1020 = vadd.f32 %v1018, %v1019
    %v1021 = vsel %vm280, %v1012, 0.0
    %v1022 = vadd.f32 %v1020, %v1021
    %v1023 = vsel %vm280, %v1013, 0.0
    %v1024 = vadd.f32 %v1022, %v1023
    %v1025 = vsel %vm280, %v1014, 0.0
    %v1026 = vadd.f32 %v1024, %v1025
    %v1027 = vsel %vm280, %v1015, 0.0
    %v1028 = vadd.f32 %v1026, %v1027
    %v1029 = vsel %vm280, %v1016, 0.0
    %v1030 = vadd.f32 %v1028, %v1029
    %v1031 = vsel %vm280, %v1017, 0.0
    %v1032 = vadd.f32 %v1030, %v1031
    %v1033 = vrot.slane %v1032, 4
    %v1034 = vadd.f32 %v1032, %v1033
    %v1035 = vrot.slane %v1034, 2
    %v1036 = vadd.f32 %v1034, %v1035
    %v1037 = vrot.slane %v1036, 1
    %v1038 = vadd.f32 %v1036, %v1037
    %v1039 = vmul.f32 %v1038, %v302
    %v1040 = vadd.f32 %v1039, 1e-05
    %v1041 = vrsqrt.pop %v1040
    %v1042 = vmul.f32 %v1002, %v1041
    %v1043 = vmul.f32 %v1003, %v1041
    %v1044 = vmul.f32 %v1004, %v1041
    %v1045 = vmul.f32 %v1005, %v1041
    %v1046 = vmul.f32 %v1006, %v1041
    %v1047 = vmul.f32 %v1007, %v1041
    %v1048 = vmul.f32 %v1008, %v1041
    %v1049 = vmul.f32 %v1009, %v1041
    %v1050 = vlaneseq
    %v1051 = vshrl.u32 %v1050, 7
    %v1052 = vsub.s32 0, %v1051
    %v1053 = vrot.slane %v695, %v1052
    %v1054 = vmul.f32 %v1053, %v1042
    %v1055 = vmul.f32 %v1053, %v1043
    %v1056 = vmul.f32 %v1053, %v1044
    %v1057 = vmul.f32 %v1053, %v1045
    %v1058 = vmul.f32 %v1053, %v1046
    %v1059 = vmul.f32 %v1053, %v1047
    %v1060 = vmul.f32 %v1053, %v1048
    %v1061 = vmul.f32 %v1053, %v1049
    %1063 = vrot.lane.b32.xlu0 %v1053, 96
    %v1064 = vpop.permute.xlu0 %1063
    %v1066 = vadd.f32 %v1054, %v1064
    %v1067 = vadd.f32 %v1055, %v1064
    %v1068 = vadd.f32 %v1056, %v1064
    %v1069 = vadd.f32 %v1057, %v1064
    %v1070 = vadd.f32 %v1058, %v1064
    %v1071 = vadd.f32 %v1059, %v1064
    %v1072 = vadd.f32 %v1060, %v1064
    %v1073 = vadd.f32 %v1061, %v1064
    %v1074 = vmax.f32 %v1066, 0.0
    %v1075 = vmax.f32 %v1067, 0.0
    %v1076 = vmax.f32 %v1068, 0.0
    %v1077 = vmax.f32 %v1069, 0.0
    %v1078 = vmax.f32 %v1070, 0.0
    %v1079 = vmax.f32 %v1071, 0.0
    %v1080 = vmax.f32 %v1072, 0.0
    %v1081 = vmax.f32 %v1073, 0.0
    %v1082 = vadd.f32 %v264, %v1074
    %v1083 = vadd.f32 %v265, %v1075
    %v1084 = vadd.f32 %v266, %v1076
    %v1085 = vadd.f32 %v267, %v1077
    %v1086 = vadd.f32 %v268, %v1078
    %v1087 = vadd.f32 %v269, %v1079
    %v1088 = vadd.f32 %v270, %v1080
    %v1089 = vadd.f32 %v271, %v1081
    %v1090 = vsel %vm280, %v972, 0.0
    %v1091 = vsel %vm280, %v973, 0.0
    %v1092 = vadd.f32 %v1090, %v1091
    %v1093 = vsel %vm280, %v974, 0.0
    %v1094 = vadd.f32 %v1092, %v1093
    %v1095 = vsel %vm280, %v975, 0.0
    %v1096 = vadd.f32 %v1094, %v1095
    %v1097 = vsel %vm280, %v976, 0.0
    %v1098 = vadd.f32 %v1096, %v1097
    %v1099 = vsel %vm280, %v977, 0.0
    %v1100 = vadd.f32 %v1098, %v1099
    %v1101 = vsel %vm280, %v978, 0.0
    %v1102 = vadd.f32 %v1100, %v1101
    %v1103 = vsel %vm280, %v979, 0.0
    %v1104 = vadd.f32 %v1102, %v1103
    %v1105 = vrot.slane %v1104, 4
    %v1106 = vadd.f32 %v1104, %v1105
    %v1107 = vrot.slane %v1106, 2
    %v1108 = vadd.f32 %v1106, %v1107
    %v1109 = vrot.slane %v1108, 1
    %v1110 = vadd.f32 %v1108, %v1109
    %v1111 = vmul.f32 %v1110, %v302
    %v1112 = vsub.f32 %v972, %v1111
    %v1113 = vsub.f32 %v973, %v1111
    %v1114 = vsub.f32 %v974, %v1111
    %v1115 = vsub.f32 %v975, %v1111
    %v1116 = vsub.f32 %v976, %v1111
    %v1117 = vsub.f32 %v977, %v1111
    %v1118 = vsub.f32 %v978, %v1111
    %v1119 = vsub.f32 %v979, %v1111
    %v1120 = vmul.f32 %v1112, %v1112
    %v1121 = vmul.f32 %v1113, %v1113
    %v1122 = vmul.f32 %v1114, %v1114
    %v1123 = vmul.f32 %v1115, %v1115
    %v1124 = vmul.f32 %v1116, %v1116
    %v1125 = vmul.f32 %v1117, %v1117
    %v1126 = vmul.f32 %v1118, %v1118
    %v1127 = vmul.f32 %v1119, %v1119
    %v1128 = vsel %vm280, %v1120, 0.0
    %v1129 = vsel %vm280, %v1121, 0.0
    %v1130 = vadd.f32 %v1128, %v1129
    %v1131 = vsel %vm280, %v1122, 0.0
    %v1132 = vadd.f32 %v1130, %v1131
    %v1133 = vsel %vm280, %v1123, 0.0
    %v1134 = vadd.f32 %v1132, %v1133
    %v1135 = vsel %vm280, %v1124, 0.0
    %v1136 = vadd.f32 %v1134, %v1135
    %v1137 = vsel %vm280, %v1125, 0.0
    %v1138 = vadd.f32 %v1136, %v1137
    %v1139 = vsel %vm280, %v1126, 0.0
    %v1140 = vadd.f32 %v1138, %v1139
    %v1141 = vsel %vm280, %v1127, 0.0
    %v1142 = vadd.f32 %v1140, %v1141
    %v1143 = vrot.slane %v1142, 4
    %v1144 = vadd.f32 %v1142, %v1143
    %v1145 = vrot.slane %v1144, 2
    %v1146 = vadd.f32 %v1144, %v1145
    %v1147 = vrot.slane %v1146, 1
    %v1148 = vadd.f32 %v1146, %v1147
    %v1149 = vmul.f32 %v1148, %v302
    %v1150 = vadd.f32 %v1149, 1e-05
    %v1151 = vrsqrt.pop %v1150
    %v1152 = vmul.f32 %v1112, %v1151
    %v1153 = vmul.f32 %v1113, %v1151
    %v1154 = vmul.f32 %v1114, %v1151
    %v1155 = vmul.f32 %v1115, %v1151
    %v1156 = vmul.f32 %v1116, %v1151
    %v1157 = vmul.f32 %v1117, %v1151
    %v1158 = vmul.f32 %v1118, %v1151
    %v1159 = vmul.f32 %v1119, %v1151
    %v1160 = vlaneseq
    %v1161 = vshrl.u32 %v1160, 7
    %v1162 = vsub.s32 1, %v1161
    %v1163 = vrot.slane %v695, %v1162
    %v1164 = vmul.f32 %v1163, %v1152
    %v1165 = vmul.f32 %v1163, %v1153
    %v1166 = vmul.f32 %v1163, %v1154
    %v1167 = vmul.f32 %v1163, %v1155
    %v1168 = vmul.f32 %v1163, %v1156
    %v1169 = vmul.f32 %v1163, %v1157
    %v1170 = vmul.f32 %v1163, %v1158
    %v1171 = vmul.f32 %v1163, %v1159
    %1173 = vrot.lane.b32.xlu0 %v1163, 96
    %v1174 = vpop.permute.xlu0 %1173
    %v1176 = vadd.f32 %v1164, %v1174
    %v1177 = vadd.f32 %v1165, %v1174
    %v1178 = vadd.f32 %v1166, %v1174
    %v1179 = vadd.f32 %v1167, %v1174
    %v1180 = vadd.f32 %v1168, %v1174
    %v1181 = vadd.f32 %v1169, %v1174
    %v1182 = vadd.f32 %v1170, %v1174
    %v1183 = vadd.f32 %v1171, %v1174
    %v1184 = vmax.f32 %v1176, 0.0
    %v1185 = vmax.f32 %v1177, 0.0
    %v1186 = vmax.f32 %v1178, 0.0
    %v1187 = vmax.f32 %v1179, 0.0
    %v1188 = vmax.f32 %v1180, 0.0
    %v1189 = vmax.f32 %v1181, 0.0
    %v1190 = vmax.f32 %v1182, 0.0
    %v1191 = vmax.f32 %v1183, 0.0
    %v1192 = vadd.f32 %v272, %v1184
    %v1193 = vadd.f32 %v273, %v1185
    %v1194 = vadd.f32 %v274, %v1186
    %v1195 = vadd.f32 %v275, %v1187
    %v1196 = vadd.f32 %v276, %v1188
    %v1197 = vadd.f32 %v277, %v1189
    %v1198 = vadd.f32 %v278, %v1190
    %v1199 = vadd.f32 %v279, %v1191
    %v1200 = vrot.slane %v1082, 7
    %v1201 = vrot.slane %v1083, 7
    %v1202 = vrot.slane %v1084, 7
    %v1203 = vrot.slane %v1085, 7
    %v1204 = vrot.slane %v1086, 7
    %v1205 = vrot.slane %v1087, 7
    %v1206 = vrot.slane %v1088, 7
    %v1207 = vrot.slane %v1089, 7
    %v1208 = vrot.slane %v1192, 7
    %v1209 = vrot.slane %v1193, 7
    %v1210 = vrot.slane %v1194, 7
    %v1211 = vrot.slane %v1195, 7
    %v1212 = vrot.slane %v1196, 7
    %v1213 = vrot.slane %v1197, 7
    %v1214 = vrot.slane %v1198, 7
    %v1215 = vrot.slane %v1199, 7
    %vm1216 = vcmp.lt.s32.totalorder %v56, 1
    %v1217 = vsel %vm1216, %v1214, %v1215
    %v1218 = vsel %vm1216, %v1213, %v1214
    %v1219 = vsel %vm1216, %v1212, %v1213
    %v1220 = vsel %vm1216, %v1211, %v1212
    %v1221 = vsel %vm1216, %v1210, %v1211
    %v1222 = vsel %vm1216, %v1209, %v1210
    %v1223 = vsel %vm1216, %v1208, %v1209
    %v1224 = vsel %vm1216, %v1207, %v1208
    %v1225 = vsel %vm1216, %v1206, %v1207
    %v1226 = vsel %vm1216, %v1205, %v1206
    %v1227 = vsel %vm1216, %v1204, %v1205
    %v1228 = vsel %vm1216, %v1203, %v1204
    %v1229 = vsel %vm1216, %v1202, %v1203
    %v1230 = vsel %vm1216, %v1201, %v1202
    %v1231 = vsel %vm1216, %v1200, %v1201
    %v1232 = vsel %vm1216, %v1215, %v1200
    %vm1233 = vcmp.ge.s32.totalorder %v248, 8
    %vm1234 = vcmp.ge.s32.totalorder %v249, 8
    %vm1235 = vcmp.ge.s32.totalorder %v250, 8
    %vm1236 = vcmp.ge.s32.totalorder %v251, 8
    %vm1237 = vcmp.ge.s32.totalorder %v252, 8
    %vm1238 = vcmp.ge.s32.totalorder %v253, 8
    %vm1239 = vcmp.ge.s32.totalorder %v254, 8
    %vm1240 = vcmp.ge.s32.totalorder %v255, 8
    %vm1241 = vcmp.ge.s32.totalorder %v256, 8
    %vm1242 = vcmp.ge.s32.totalorder %v257, 8
    %vm1243 = vcmp.ge.s32.totalorder %v258, 8
    %vm1244 = vcmp.ge.s32.totalorder %v259, 8
    %vm1245 = vcmp.ge.s32.totalorder %v260, 8
    %vm1246 = vcmp.ge.s32.totalorder %v261, 8
    %vm1247 = vcmp.ge.s32.totalorder %v262, 8
    %vm1248 = vcmp.ge.s32.totalorder %v263, 8
    %vm1249 = vcmp.lt.s32.totalorder %v248, 0
    %v1250 = vsub.s32 0, %v248
    %v1251 = vsel %vm1249, %v1250, %v248
    %v1252 = vshrl.u32 %v1251, 3
    %v1253 = vand.u32 %v1251, 7
    %v1254 = vsub.s32 0, %v1253
    %v1255 = vsel %vm1249, %v1254, %v1253
    %vm1256 = vcmp.lt.s32.totalorder %v249, 0
    %v1257 = vsub.s32 0, %v249
    %v1258 = vsel %vm1256, %v1257, %v249
    %v1259 = vshrl.u32 %v1258, 3
    %v1260 = vand.u32 %v1258, 7
    %v1261 = vsub.s32 0, %v1260
    %v1262 = vsel %vm1256, %v1261, %v1260
    %vm1263 = vcmp.lt.s32.totalorder %v250, 0
    %v1264 = vsub.s32 0, %v250
    %v1265 = vsel %vm1263, %v1264, %v250
    %v1266 = vshrl.u32 %v1265, 3
    %v1267 = vand.u32 %v1265, 7
    %v1268 = vsub.s32 0, %v1267
    %v1269 = vsel %vm1263, %v1268, %v1267
    %vm1270 = vcmp.lt.s32.totalorder %v251, 0
    %v1271 = vsub.s32 0, %v251
    %v1272 = vsel %vm1270, %v1271, %v251
    %v1273 = vshrl.u32 %v1272, 3
    %v1274 = vand.u32 %v1272, 7
    %v1275 = vsub.s32 0, %v1274
    %v1276 = vsel %vm1270, %v1275, %v1274
    %vm1277 = vcmp.lt.s32.totalorder %v252, 0
    %v1278 = vsub.s32 0, %v252
    %v1279 = vsel %vm1277, %v1278, %v252
    %v1280 = vshrl.u32 %v1279, 3
    %v1281 = vand.u32 %v1279, 7
    %v1282 = vsub.s32 0, %v1281
    %v1283 = vsel %vm1277, %v1282, %v1281
    %vm1284 = vcmp.lt.s32.totalorder %v253, 0
    %v1285 = vsub.s32 0, %v253
    %v1286 = vsel %vm1284, %v1285, %v253
    %v1287 = vshrl.u32 %v1286, 3
    %v1288 = vand.u32 %v1286, 7
    %v1289 = vsub.s32 0, %v1288
    %v1290 = vsel %vm1284, %v1289, %v1288
    %vm1291 = vcmp.lt.s32.totalorder %v254, 0
    %v1292 = vsub.s32 0, %v254
    %v1293 = vsel %vm1291, %v1292, %v254
    %v1294 = vshrl.u32 %v1293, 3
    %v1295 = vand.u32 %v1293, 7
    %v1296 = vsub.s32 0, %v1295
    %v1297 = vsel %vm1291, %v1296, %v1295
    %vm1298 = vcmp.lt.s32.totalorder %v255, 0
    %v1299 = vsub.s32 0, %v255
    %v1300 = vsel %vm1298, %v1299, %v255
    %v1301 = vshrl.u32 %v1300, 3
    %v1302 = vand.u32 %v1300, 7
    %v1303 = vsub.s32 0, %v1302
    %v1304 = vsel %vm1298, %v1303, %v1302
    %vm1305 = vcmp.lt.s32.totalorder %v256, 0
    %v1306 = vsub.s32 0, %v256
    %v1307 = vsel %vm1305, %v1306, %v256
    %v1308 = vshrl.u32 %v1307, 3
    %v1309 = vand.u32 %v1307, 7
    %v1310 = vsub.s32 0, %v1309
    %v1311 = vsel %vm1305, %v1310, %v1309
    %vm1312 = vcmp.lt.s32.totalorder %v257, 0
    %v1313 = vsub.s32 0, %v257
    %v1314 = vsel %vm1312, %v1313, %v257
    %v1315 = vshrl.u32 %v1314, 3
    %v1316 = vand.u32 %v1314, 7
    %v1317 = vsub.s32 0, %v1316
    %v1318 = vsel %vm1312, %v1317, %v1316
    %vm1319 = vcmp.lt.s32.totalorder %v258, 0
    %v1320 = vsub.s32 0, %v258
    %v1321 = vsel %vm1319, %v1320, %v258
    %v1322 = vshrl.u32 %v1321, 3
    %v1323 = vand.u32 %v1321, 7
    %v1324 = vsub.s32 0, %v1323
    %v1325 = vsel %vm1319, %v1324, %v1323
    %vm1326 = vcmp.lt.s32.totalorder %v259, 0
    %v1327 = vsub.s32 0, %v259
    %v1328 = vsel %vm1326, %v1327, %v259
    %v1329 = vshrl.u32 %v1328, 3
    %v1330 = vand.u32 %v1328, 7
    %v1331 = vsub.s32 0, %v1330
    %v1332 = vsel %vm1326, %v1331, %v1330
    %vm1333 = vcmp.lt.s32.totalorder %v260, 0
    %v1334 = vsub.s32 0, %v260
    %v1335 = vsel %vm1333, %v1334, %v260
    %v1336 = vshrl.u32 %v1335, 3
    %v1337 = vand.u32 %v1335, 7
    %v1338 = vsub.s32 0, %v1337
    %v1339 = vsel %vm1333, %v1338, %v1337
    %vm1340 = vcmp.lt.s32.totalorder %v261, 0
    %v1341 = vsub.s32 0, %v261
    %v1342 = vsel %vm1340, %v1341, %v261
    %v1343 = vshrl.u32 %v1342, 3
    %v1344 = vand.u32 %v1342, 7
    %v1345 = vsub.s32 0, %v1344
    %v1346 = vsel %vm1340, %v1345, %v1344
    %vm1347 = vcmp.lt.s32.totalorder %v262, 0
    %v1348 = vsub.s32 0, %v262
    %v1349 = vsel %vm1347, %v1348, %v262
    %v1350 = vshrl.u32 %v1349, 3
    %v1351 = vand.u32 %v1349, 7
    %v1352 = vsub.s32 0, %v1351
    %v1353 = vsel %vm1347, %v1352, %v1351
    %vm1354 = vcmp.lt.s32.totalorder %v263, 0
    %v1355 = vsub.s32 0, %v263
    %v1356 = vsel %vm1354, %v1355, %v263
    %v1357 = vshrl.u32 %v1356, 3
    %v1358 = vand.u32 %v1356, 7
    %v1359 = vsub.s32 0, %v1358
    %v1360 = vsel %vm1354, %v1359, %v1358
    %vm1361 = vcmp.ne.s32.totalorder %v1255, 0
    %vm1362 = vcmp.ne.s32.totalorder %v1262, 0
    %vm1363 = vcmp.ne.s32.totalorder %v1269, 0
    %vm1364 = vcmp.ne.s32.totalorder %v1276, 0
    %vm1365 = vcmp.ne.s32.totalorder %v1283, 0
    %vm1366 = vcmp.ne.s32.totalorder %v1290, 0
    %vm1367 = vcmp.ne.s32.totalorder %v1297, 0
    %vm1368 = vcmp.ne.s32.totalorder %v1304, 0
    %vm1369 = vcmp.ne.s32.totalorder %v1311, 0
    %vm1370 = vcmp.ne.s32.totalorder %v1318, 0
    %vm1371 = vcmp.ne.s32.totalorder %v1325, 0
    %vm1372 = vcmp.ne.s32.totalorder %v1332, 0
    %vm1373 = vcmp.ne.s32.totalorder %v1339, 0
    %vm1374 = vcmp.ne.s32.totalorder %v1346, 0
    %vm1375 = vcmp.ne.s32.totalorder %v1353, 0
    %vm1376 = vcmp.ne.s32.totalorder %v1360, 0
    %vm1377 = vcmp.lt.s32.totalorder %v1255, 0
    %vm1378 = vcmp.lt.s32.totalorder %v1262, 0
    %vm1379 = vcmp.lt.s32.totalorder %v1269, 0
    %vm1380 = vcmp.lt.s32.totalorder %v1276, 0
    %vm1381 = vcmp.lt.s32.totalorder %v1283, 0
    %vm1382 = vcmp.lt.s32.totalorder %v1290, 0
    %vm1383 = vcmp.lt.s32.totalorder %v1297, 0
    %vm1384 = vcmp.lt.s32.totalorder %v1304, 0
    %vm1385 = vcmp.lt.s32.totalorder %v1311, 0
    %vm1386 = vcmp.lt.s32.totalorder %v1318, 0
    %vm1387 = vcmp.lt.s32.totalorder %v1325, 0
    %vm1388 = vcmp.lt.s32.totalorder %v1332, 0
    %vm1389 = vcmp.lt.s32.totalorder %v1339, 0
    %vm1390 = vcmp.lt.s32.totalorder %v1346, 0
    %vm1391 = vcmp.lt.s32.totalorder %v1353, 0
    %vm1392 = vcmp.lt.s32.totalorder %v1360, 0
    %vm1393 = vmand %vm1377, %vm1361
    %vm1394 = vmand %vm1378, %vm1362
    %vm1395 = vmand %vm1379, %vm1363
    %vm1396 = vmand %vm1380, %vm1364
    %vm1397 = vmand %vm1381, %vm1365
    %vm1398 = vmand %vm1382, %vm1366
    %vm1399 = vmand %vm1383, %vm1367
    %vm1400 = vmand %vm1384, %vm1368
    %vm1401 = vmand %vm1385, %vm1369
    %vm1402 = vmand %vm1386, %vm1370
    %vm1403 = vmand %vm1387, %vm1371
    %vm1404 = vmand %vm1388, %vm1372
    %vm1405 = vmand %vm1389, %vm1373
    %vm1406 = vmand %vm1390, %vm1374
    %vm1407 = vmand %vm1391, %vm1375
    %vm1408 = vmand %vm1392, %vm1376
    %v1409 = vadd.s32 %v1255, 8
    %v1410 = vadd.s32 %v1262, 8
    %v1411 = vadd.s32 %v1269, 8
    %v1412 = vadd.s32 %v1276, 8
    %v1413 = vadd.s32 %v1283, 8
    %v1414 = vadd.s32 %v1290, 8
    %v1415 = vadd.s32 %v1297, 8
    %v1416 = vadd.s32 %v1304, 8
    %v1417 = vadd.s32 %v1311, 8
    %v1418 = vadd.s32 %v1318, 8
    %v1419 = vadd.s32 %v1325, 8
    %v1420 = vadd.s32 %v1332, 8
    %v1421 = vadd.s32 %v1339, 8
    %v1422 = vadd.s32 %v1346, 8
    %v1423 = vadd.s32 %v1353, 8
    %v1424 = vadd.s32 %v1360, 8
    %v1425 = vsel %vm1393, %v1409, %v1255
    %v1426 = vsel %vm1394, %v1410, %v1262
    %v1427 = vsel %vm1395, %v1411, %v1269
    %v1428 = vsel %vm1396, %v1412, %v1276
    %v1429 = vsel %vm1397, %v1413, %v1283
    %v1430 = vsel %vm1398, %v1414, %v1290
    %v1431 = vsel %vm1399, %v1415, %v1297
    %v1432 = vsel %vm1400, %v1416, %v1304
    %v1433 = vsel %vm1401, %v1417, %v1311
    %v1434 = vsel %vm1402, %v1418, %v1318
    %v1435 = vsel %vm1403, %v1419, %v1325
    %v1436 = vsel %vm1404, %v1420, %v1332
    %v1437 = vsel %vm1405, %v1421, %v1339
    %v1438 = vsel %vm1406, %v1422, %v1346
    %v1439 = vsel %vm1407, %v1423, %v1353
    %v1440 = vsel %vm1408, %v1424, %v1360
    %vm1441 = vcmp.gt.s32.totalorder %v1425, 0
    %vm1442 = vcmp.gt.s32.totalorder %v1426, 0
    %vm1443 = vcmp.gt.s32.totalorder %v1427, 0
    %vm1444 = vcmp.gt.s32.totalorder %v1428, 0
    %vm1445 = vcmp.gt.s32.totalorder %v1429, 0
    %vm1446 = vcmp.gt.s32.totalorder %v1430, 0
    %vm1447 = vcmp.gt.s32.totalorder %v1431, 0
    %vm1448 = vcmp.gt.s32.totalorder %v1432, 0
    %vm1449 = vcmp.gt.s32.totalorder %v1433, 0
    %vm1450 = vcmp.gt.s32.totalorder %v1434, 0
    %vm1451 = vcmp.gt.s32.totalorder %v1435, 0
    %vm1452 = vcmp.gt.s32.totalorder %v1436, 0
    %vm1453 = vcmp.gt.s32.totalorder %v1437, 0
    %vm1454 = vcmp.gt.s32.totalorder %v1438, 0
    %vm1455 = vcmp.gt.s32.totalorder %v1439, 0
    %vm1456 = vcmp.gt.s32.totalorder %v1440, 0
    %vm1457 = vmand %vm1233, %vm1441
    %vm1458 = vmand %vm1234, %vm1442
    %vm1459 = vmand %vm1235, %vm1443
    %vm1460 = vmand %vm1236, %vm1444
    %vm1461 = vmand %vm1237, %vm1445
    %vm1462 = vmand %vm1238, %vm1446
    %vm1463 = vmand %vm1239, %vm1447
    %vm1464 = vmand %vm1240, %vm1448
    %vm1465 = vmand %vm1241, %vm1449
    %vm1466 = vmand %vm1242, %vm1450
    %vm1467 = vmand %vm1243, %vm1451
    %vm1468 = vmand %vm1244, %vm1452
    %vm1469 = vmand %vm1245, %vm1453
    %vm1470 = vmand %vm1246, %vm1454
    %vm1471 = vmand %vm1247, %vm1455
    %vm1472 = vmand %vm1248, %vm1456
    %v1473 = vsel %vm1457, 1, 0
    %v1474 = vsel %vm1458, 1, 0
    %v1475 = vsel %vm1459, 1, 0
    %v1476 = vsel %vm1460, 1, 0
    %v1477 = vsel %vm1461, 1, 0
    %v1478 = vsel %vm1462, 1, 0
    %v1479 = vsel %vm1463, 1, 0
    %v1480 = vsel %vm1464, 1, 0
    %v1481 = vsel %vm1465, 1, 0
    %v1482 = vsel %vm1466, 1, 0
    %v1483 = vsel %vm1467, 1, 0
    %v1484 = vsel %vm1468, 1, 0
    %v1485 = vsel %vm1469, 1, 0
    %v1486 = vsel %vm1470, 1, 0
    %v1487 = vsel %vm1471, 1, 0
    %v1488 = vsel %vm1472, 1, 0
    %vm1489 = vcmp.eq.s32.totalorder %v1473, 1
    %vm1490 = vcmp.eq.s32.totalorder %v1474, 1
    %vm1491 = vcmp.eq.s32.totalorder %v1475, 1
    %vm1492 = vcmp.eq.s32.totalorder %v1476, 1
    %vm1493 = vcmp.eq.s32.totalorder %v1477, 1
    %vm1494 = vcmp.eq.s32.totalorder %v1478, 1
    %vm1495 = vcmp.eq.s32.totalorder %v1479, 1
    %vm1496 = vcmp.eq.s32.totalorder %v1480, 1
    %vm1497 = vcmp.eq.s32.totalorder %v1481, 1
    %vm1498 = vcmp.eq.s32.totalorder %v1482, 1
    %vm1499 = vcmp.eq.s32.totalorder %v1483, 1
    %vm1500 = vcmp.eq.s32.totalorder %v1484, 1
    %vm1501 = vcmp.eq.s32.totalorder %v1485, 1
    %vm1502 = vcmp.eq.s32.totalorder %v1486, 1
    %vm1503 = vcmp.eq.s32.totalorder %v1487, 1
    %vm1504 = vcmp.eq.s32.totalorder %v1488, 1
    %v1505 = vsel %vm1489, %v1217, 0.0
    %v1506 = vsel %vm1490, %v1232, 0.0
    %v1507 = vsel %vm1491, %v1231, 0.0
    %v1508 = vsel %vm1492, %v1230, 0.0
    %v1509 = vsel %vm1493, %v1229, 0.0
    %v1510 = vsel %vm1494, %v1228, 0.0
    %v1511 = vsel %vm1495, %v1227, 0.0
    %v1512 = vsel %vm1496, %v1226, 0.0
    %v1513 = vsel %vm1497, %v1225, 0.0
    %v1514 = vsel %vm1498, %v1224, 0.0
    %v1515 = vsel %vm1499, %v1223, 0.0
    %v1516 = vsel %vm1500, %v1222, 0.0
    %v1517 = vsel %vm1501, %v1221, 0.0
    %v1518 = vsel %vm1502, %v1220, 0.0
    %v1519 = vsel %vm1503, %v1219, 0.0
    %v1520 = vsel %vm1504, %v1218, 0.0
    %v1521 = vpack.c.bf16 %v1506, %v1505
    %v1522 = vpack.c.bf16 %v1508, %v1507
    %v1523 = vpack.c.bf16 %v1510, %v1509
    %v1524 = vpack.c.bf16 %v1512, %v1511
    %v1525 = vpack.c.bf16 %v1514, %v1513
    %v1526 = vpack.c.bf16 %v1516, %v1515
    %v1527 = vpack.c.bf16 %v1518, %v1517
    %v1528 = vpack.c.bf16 %v1520, %v1519
    %v1529 = vld [vmem:[%s5] sm:$0xff]
    %v1530 = vld [vmem:[%s5 + $0x8] sm:$0xff]
    %v1531 = vld [vmem:[%s5 + $0x10] sm:$0xff]
    %v1532 = vld [vmem:[%s5 + $0x18] sm:$0xff]
    %v1533 = vpack.c.bf16 %v1530, %v1529
    %v1534 = vpack.c.bf16 %v1532, %v1531
    %v1535 = vsel %vm1233, 1, 0
    %v1536 = vsel %vm1234, 1, 0
    %v1537 = vsel %vm1235, 1, 0
    %v1538 = vsel %vm1236, 1, 0
    %v1539 = vsel %vm1237, 1, 0
    %v1540 = vsel %vm1238, 1, 0
    %v1541 = vsel %vm1239, 1, 0
    %v1542 = vsel %vm1240, 1, 0
    %v1543 = vsel %vm1241, 1, 0
    %v1544 = vsel %vm1242, 1, 0
    %v1545 = vsel %vm1243, 1, 0
    %v1546 = vsel %vm1244, 1, 0
    %v1547 = vsel %vm1245, 1, 0
    %v1548 = vsel %vm1246, 1, 0
    %v1549 = vsel %vm1247, 1, 0
    %v1550 = vsel %vm1248, 1, 0
    %vm1551 = vcmp.eq.s32.totalorder %v1535, 1
    %vm1552 = vcmp.eq.s32.totalorder %v1536, 1
    %vm1553 = vcmp.eq.s32.totalorder %v1537, 1
    %vm1554 = vcmp.eq.s32.totalorder %v1538, 1
    %vm1555 = vcmp.eq.s32.totalorder %v1539, 1
    %vm1556 = vcmp.eq.s32.totalorder %v1540, 1
    %vm1557 = vcmp.eq.s32.totalorder %v1541, 1
    %vm1558 = vcmp.eq.s32.totalorder %v1542, 1
    %vm1559 = vcmp.eq.s32.totalorder %v1543, 1
    %vm1560 = vcmp.eq.s32.totalorder %v1544, 1
    %vm1561 = vcmp.eq.s32.totalorder %v1545, 1
    %vm1562 = vcmp.eq.s32.totalorder %v1546, 1
    %vm1563 = vcmp.eq.s32.totalorder %v1547, 1
    %vm1564 = vcmp.eq.s32.totalorder %v1548, 1
    %vm1565 = vcmp.eq.s32.totalorder %v1549, 1
    %vm1566 = vcmp.eq.s32.totalorder %v1550, 1
    %v1567 = vsel %vm1551, %v1199, 0.0
    %v1568 = vsel %vm1552, %v1082, 0.0
    %v1569 = vsel %vm1553, %v1083, 0.0
    %v1570 = vsel %vm1554, %v1084, 0.0
    %v1571 = vsel %vm1555, %v1085, 0.0
    %v1572 = vsel %vm1556, %v1086, 0.0
    %v1573 = vsel %vm1557, %v1087, 0.0
    %v1574 = vsel %vm1558, %v1088, 0.0
    %v1575 = vsel %vm1559, %v1089, 0.0
    %v1576 = vsel %vm1560, %v1192, 0.0
    %v1577 = vsel %vm1561, %v1193, 0.0
    %v1578 = vsel %vm1562, %v1194, 0.0
    %v1579 = vsel %vm1563, %v1195, 0.0
    %v1580 = vsel %vm1564, %v1196, 0.0
    %v1581 = vsel %vm1565, %v1197, 0.0
    %v1582 = vsel %vm1566, %v1198, 0.0
    %v1583 = vpack.c.bf16 %v1568, %v1567
    %v1584 = vpack.c.bf16 %v1570, %v1569
    %v1585 = vpack.c.bf16 %v1572, %v1571
    %v1586 = vpack.c.bf16 %v1574, %v1573
    %v1587 = vpack.c.bf16 %v1576, %v1575
    %v1588 = vpack.c.bf16 %v1578, %v1577
    %v1589 = vpack.c.bf16 %v1580, %v1579
    %v1590 = vpack.c.bf16 %v1582, %v1581
    %v1591 = vld [vmem:[%s5 + $0x20] sm:$0xff]
    %v1592 = vld [vmem:[%s5 + $0x28] sm:$0xff]
    %v1593 = vld [vmem:[%s5 + $0x30] sm:$0xff]
    %v1594 = vld [vmem:[%s5 + $0x38] sm:$0xff]
    %v1595 = vpack.c.bf16 %v1592, %v1591
    %v1596 = vpack.c.bf16 %v1594, %v1593
    %v1598 = vsel %vm280, %v1583, 0
    %v1601 = vsel %vm280, %v1584, 0
    %v1604 = vsel %vm280, %v1585, 0
    %v1607 = vsel %vm280, %v1586, 0
    %v1610 = vsel %vm280, %v1587, 0
    %v1613 = vsel %vm280, %v1588, 0
    %v1616 = vsel %vm280, %v1589, 0
    %v1619 = vsel %vm280, %v1590, 0
    %1621 = vmatprep.subr.bf16.mxu0 0
    %1622 = vmatpush1.bf16.msra.mxu0 %v1595
    %1623 = vmatprep.subr.bf16.mxu0 0
    %1624 = vmatpush1.bf16.msra.mxu0 %v1596
    %1625 = vmatprep.subr.bf16.mxu0 0
    %1626 = vmatpush1.bf16.msra.mxu0 0
    %1627 = vmatprep.subr.bf16.mxu0 0
    %1628 = vmatpush1.bf16.msra.mxu0 0
    %1629 = vmatprep.subr.bf16.mxu0 0
    %1630 = vmatpush1.bf16.msra.mxu0 0
    %1631 = vmatprep.subr.bf16.mxu0 0
    %1632 = vmatpush1.bf16.msra.mxu0 0
    %1633 = vmatprep.subr.bf16.mxu0 0
    %1634 = vmatpush1.bf16.msra.mxu0 0
    %1635 = vmatprep.subr.bf16.mxu0 0
    %1636 = vmatpush1.bf16.msra.mxu0 0
    %1637 = vmatprep.subr.bf16.mxu0 0
    %1638 = vmatpush1.bf16.msra.mxu0 0
    %1639 = vmatprep.subr.bf16.mxu0 0
    %1640 = vmatpush1.bf16.msra.mxu0 0
    %1641 = vmatprep.subr.bf16.mxu0 0
    %1642 = vmatpush1.bf16.msra.mxu0 0
    %1643 = vmatprep.subr.bf16.mxu0 0
    %1644 = vmatpush1.bf16.msra.mxu0 0
    %1645 = vmatprep.subr.bf16.mxu0 0
    %1646 = vmatpush1.bf16.msra.mxu0 0
    %1647 = vmatprep.subr.bf16.mxu0 0
    %1648 = vmatpush1.bf16.msra.mxu0 0
    %1649 = vmatprep.subr.bf16.mxu0 0
    %1650 = vmatpush1.bf16.msra.mxu0 0
    %1651 = vmatprep.subr.bf16.mxu0 0
    %1652 = vmatpush1.bf16.msra.mxu0 0
    %1653 = vmatprep.mubr.bf16.mxu0 0
    %1654 = vmatmul.mubr.bf16.gmra.mrb[0].mxu0 %v1598
    %v1655 = vpop.f32.mrb[0].mxu0
    %v1656 = vadd.f32 0.0, %v1655
    %v1657 = vpop.f32.mrb[0].mxu0
    %v1658 = vpop.f32.mrb[0].mxu0
    %v1659 = vadd.f32 0.0, %v1658
    %v1660 = vpop.f32.mrb[0].mxu0
    %1661 = vmatprep.mubr.bf16.mxu0 0
    %1662 = vmatmul.mubr.bf16.gmra.mrb[0].mxu0 %v1601
    %v1663 = vpop.f32.mrb[0].mxu0
    %v1664 = vadd.f32 0.0, %v1663
    %v1665 = vpop.f32.mrb[0].mxu0
    %v1666 = vpop.f32.mrb[0].mxu0
    %v1667 = vadd.f32 0.0, %v1666
    %v1668 = vpop.f32.mrb[0].mxu0
    %1669 = vmatprep.mubr.bf16.mxu0 0
    %1670 = vmatmul.mubr.bf16.gmra.mrb[0].mxu0 %v1604
    %v1671 = vpop.f32.mrb[0].mxu0
    %v1672 = vadd.f32 0.0, %v1671
    %v1673 = vpop.f32.mrb[0].mxu0
    %v1674 = vpop.f32.mrb[0].mxu0
    %v1675 = vadd.f32 0.0, %v1674
    %v1676 = vpop.f32.mrb[0].mxu0
    %1677 = vmatprep.mubr.bf16.mxu0 0
    %1678 = vmatmul.mubr.bf16.gmra.mrb[0].mxu0 %v1607
    %v1679 = vpop.f32.mrb[0].mxu0
    %v1680 = vadd.f32 0.0, %v1679
    %v1681 = vpop.f32.mrb[0].mxu0
    %v1682 = vpop.f32.mrb[0].mxu0
    %v1683 = vadd.f32 0.0, %v1682
    %v1684 = vpop.f32.mrb[0].mxu0
    %1685 = vmatprep.mubr.bf16.mxu0 0
    %1686 = vmatmul.mubr.bf16.gmra.mrb[0].mxu0 %v1610
    %v1687 = vpop.f32.mrb[0].mxu0
    %v1688 = vadd.f32 0.0, %v1687
    %v1689 = vpop.f32.mrb[0].mxu0
    %v1690 = vpop.f32.mrb[0].mxu0
    %v1691 = vadd.f32 0.0, %v1690
    %v1692 = vpop.f32.mrb[0].mxu0
    %1693 = vmatprep.mubr.bf16.mxu0 0
    %1694 = vmatmul.mubr.bf16.gmra.mrb[0].mxu0 %v1613
    %v1695 = vpop.f32.mrb[0].mxu0
    %v1696 = vadd.f32 0.0, %v1695
    %v1697 = vpop.f32.mrb[0].mxu0
    %v1698 = vpop.f32.mrb[0].mxu0
    %v1699 = vadd.f32 0.0, %v1698
    %v1700 = vpop.f32.mrb[0].mxu0
    %1701 = vmatprep.mubr.bf16.mxu0 0
    %1702 = vmatmul.mubr.bf16.gmra.mrb[0].mxu0 %v1616
    %v1703 = vpop.f32.mrb[0].mxu0
    %v1704 = vadd.f32 0.0, %v1703
    %v1705 = vpop.f32.mrb[0].mxu0
    %v1706 = vpop.f32.mrb[0].mxu0
    %v1707 = vadd.f32 0.0, %v1706
    %v1708 = vpop.f32.mrb[0].mxu0
    %1709 = vmatprep.mubr.bf16.mxu0 0
    %1710 = vmatmul.mubr.bf16.gmra.mrb[0].mxu0 %v1619
    %v1711 = vpop.f32.mrb[0].mxu0
    %v1712 = vadd.f32 0.0, %v1711
    %v1713 = vpop.f32.mrb[0].mxu0
    %v1714 = vpop.f32.mrb[0].mxu0
    %v1715 = vadd.f32 0.0, %v1714
    %v1716 = vpop.f32.mrb[0].mxu0
    %1717 = vdwg.mxu0
    %v1719 = vsel %vm280, %v1521, 0
    %v1722 = vsel %vm280, %v1522, 0
    %v1725 = vsel %vm280, %v1523, 0
    %v1728 = vsel %vm280, %v1524, 0
    %v1731 = vsel %vm280, %v1525, 0
    %v1734 = vsel %vm280, %v1526, 0
    %v1737 = vsel %vm280, %v1527, 0
    %v1740 = vsel %vm280, %v1528, 0
    %1742 = vmatprep.subr.bf16.mxu0 0
    %1743 = vmatpush1.bf16.msra.mxu0 %v1533
    %1744 = vmatprep.subr.bf16.mxu0 0
    %1745 = vmatpush1.bf16.msra.mxu0 %v1534
    %1746 = vmatprep.subr.bf16.mxu0 0
    %1747 = vmatpush1.bf16.msra.mxu0 0
    %1748 = vmatprep.subr.bf16.mxu0 0
    %1749 = vmatpush1.bf16.msra.mxu0 0
    %1750 = vmatprep.subr.bf16.mxu0 0
    %1751 = vmatpush1.bf16.msra.mxu0 0
    %1752 = vmatprep.subr.bf16.mxu0 0
    %1753 = vmatpush1.bf16.msra.mxu0 0
    %1754 = vmatprep.subr.bf16.mxu0 0
    %1755 = vmatpush1.bf16.msra.mxu0 0
    %1756 = vmatprep.subr.bf16.mxu0 0
    %1757 = vmatpush1.bf16.msra.mxu0 0
    %1758 = vmatprep.subr.bf16.mxu0 0
    %1759 = vmatpush1.bf16.msra.mxu0 0
    %1760 = vmatprep.subr.bf16.mxu0 0
    %1761 = vmatpush1.bf16.msra.mxu0 0
    %1762 = vmatprep.subr.bf16.mxu0 0
    %1763 = vmatpush1.bf16.msra.mxu0 0
    %1764 = vmatprep.subr.bf16.mxu0 0
    %1765 = vmatpush1.bf16.msra.mxu0 0
    %1766 = vmatprep.subr.bf16.mxu0 0
    %1767 = vmatpush1.bf16.msra.mxu0 0
    %1768 = vmatprep.subr.bf16.mxu0 0
    %1769 = vmatpush1.bf16.msra.mxu0 0
    %1770 = vmatprep.subr.bf16.mxu0 0
    %1771 = vmatpush1.bf16.msra.mxu0 0
    %1772 = vmatprep.subr.bf16.mxu0 0
    %1773 = vmatpush1.bf16.msra.mxu0 0
    %1774 = vmatprep.mubr.bf16.mxu0 0
    %1775 = vmatmul.mubr.bf16.gmra.mrb[0].mxu0 %v1719
    %v1776 = vpop.f32.mrb[0].mxu0
    %v1777 = vadd.f32 %v1656, %v1776
    %v1778 = vpop.f32.mrb[0].mxu0
    %v1779 = vpop.f32.mrb[0].mxu0
    %v1780 = vadd.f32 %v1659, %v1779
    %v1781 = vpop.f32.mrb[0].mxu0
    %1782 = vmatprep.mubr.bf16.mxu0 0
    %1783 = vmatmul.mubr.bf16.gmra.mrb[0].mxu0 %v1722
    %v1784 = vpop.f32.mrb[0].mxu0
    %v1785 = vadd.f32 %v1664, %v1784
    %v1786 = vpop.f32.mrb[0].mxu0
    %v1787 = vpop.f32.mrb[0].mxu0
    %v1788 = vadd.f32 %v1667, %v1787
    %v1789 = vpop.f32.mrb[0].mxu0
    %1790 = vmatprep.mubr.bf16.mxu0 0
    %1791 = vmatmul.mubr.bf16.gmra.mrb[0].mxu0 %v1725
    %v1792 = vpop.f32.mrb[0].mxu0
    %v1793 = vadd.f32 %v1672, %v1792
    %v1794 = vpop.f32.mrb[0].mxu0
    %v1795 = vpop.f32.mrb[0].mxu0
    %v1796 = vadd.f32 %v1675, %v1795
    %v1797 = vpop.f32.mrb[0].mxu0
    %1798 = vmatprep.mubr.bf16.mxu0 0
    %1799 = vmatmul.mubr.bf16.gmra.mrb[0].mxu0 %v1728
    %v1800 = vpop.f32.mrb[0].mxu0
    %v1801 = vadd.f32 %v1680, %v1800
    %v1802 = vpop.f32.mrb[0].mxu0
    %v1803 = vpop.f32.mrb[0].mxu0
    %v1804 = vadd.f32 %v1683, %v1803
    %v1805 = vpop.f32.mrb[0].mxu0
    %1806 = vmatprep.mubr.bf16.mxu0 0
    %1807 = vmatmul.mubr.bf16.gmra.mrb[0].mxu0 %v1731
    %v1808 = vpop.f32.mrb[0].mxu0
    %v1809 = vadd.f32 %v1688, %v1808
    %v1810 = vpop.f32.mrb[0].mxu0
    %v1811 = vpop.f32.mrb[0].mxu0
    %v1812 = vadd.f32 %v1691, %v1811
    %v1813 = vpop.f32.mrb[0].mxu0
    %1814 = vmatprep.mubr.bf16.mxu0 0
    %1815 = vmatmul.mubr.bf16.gmra.mrb[0].mxu0 %v1734
    %v1816 = vpop.f32.mrb[0].mxu0
    %v1817 = vadd.f32 %v1696, %v1816
    %v1818 = vpop.f32.mrb[0].mxu0
    %v1819 = vpop.f32.mrb[0].mxu0
    %v1820 = vadd.f32 %v1699, %v1819
    %v1821 = vpop.f32.mrb[0].mxu0
    %1822 = vmatprep.mubr.bf16.mxu0 0
    %1823 = vmatmul.mubr.bf16.gmra.mrb[0].mxu0 %v1737
    %v1824 = vpop.f32.mrb[0].mxu0
    %v1825 = vadd.f32 %v1704, %v1824
    %v1826 = vpop.f32.mrb[0].mxu0
    %v1827 = vpop.f32.mrb[0].mxu0
    %v1828 = vadd.f32 %v1707, %v1827
    %v1829 = vpop.f32.mrb[0].mxu0
    %1830 = vmatprep.mubr.bf16.mxu0 0
    %1831 = vmatmul.mubr.bf16.gmra.mrb[0].mxu0 %v1740
    %v1832 = vpop.f32.mrb[0].mxu0
    %v1833 = vadd.f32 %v1712, %v1832
    %v1834 = vpop.f32.mrb[0].mxu0
    %v1835 = vpop.f32.mrb[0].mxu0
    %v1836 = vadd.f32 %v1715, %v1835
    %v1837 = vpop.f32.mrb[0].mxu0
    %1838 = vdwg.mxu0
    %v1839 = vrot.slane %v1082, 1
    %v1840 = vrot.slane %v1083, 1
    %v1841 = vrot.slane %v1084, 1
    %v1842 = vrot.slane %v1085, 1
    %v1843 = vrot.slane %v1086, 1
    %v1844 = vrot.slane %v1087, 1
    %v1845 = vrot.slane %v1088, 1
    %v1846 = vrot.slane %v1089, 1
    %v1847 = vrot.slane %v1192, 1
    %v1848 = vrot.slane %v1193, 1
    %v1849 = vrot.slane %v1194, 1
    %v1850 = vrot.slane %v1195, 1
    %v1851 = vrot.slane %v1196, 1
    %v1852 = vrot.slane %v1197, 1
    %v1853 = vrot.slane %v1198, 1
    %v1854 = vrot.slane %v1199, 1
    %vm1855 = vcmp.lt.s32.totalorder %v56, 7
    %v1856 = vsel %vm1855, %v1853, %v1854
    %v1857 = vsel %vm1855, %v1852, %v1853
    %v1858 = vsel %vm1855, %v1851, %v1852
    %v1859 = vsel %vm1855, %v1850, %v1851
    %v1860 = vsel %vm1855, %v1849, %v1850
    %v1861 = vsel %vm1855, %v1848, %v1849
    %v1862 = vsel %vm1855, %v1847, %v1848
    %v1863 = vsel %vm1855, %v1846, %v1847
    %v1864 = vsel %vm1855, %v1845, %v1846
    %v1865 = vsel %vm1855, %v1844, %v1845
    %v1866 = vsel %vm1855, %v1843, %v1844
    %v1867 = vsel %vm1855, %v1842, %v1843
    %v1868 = vsel %vm1855, %v1841, %v1842
    %v1869 = vsel %vm1855, %v1840, %v1841
    %v1870 = vsel %vm1855, %v1839, %v1840
    %v1871 = vsel %vm1855, %v1854, %v1839
    %vm1872 = vcmp.lt.s32.totalorder %v1425, 7
    %vm1873 = vcmp.lt.s32.totalorder %v1426, 7
    %vm1874 = vcmp.lt.s32.totalorder %v1427, 7
    %vm1875 = vcmp.lt.s32.totalorder %v1428, 7
    %vm1876 = vcmp.lt.s32.totalorder %v1429, 7
    %vm1877 = vcmp.lt.s32.totalorder %v1430, 7
    %vm1878 = vcmp.lt.s32.totalorder %v1431, 7
    %vm1879 = vcmp.lt.s32.totalorder %v1432, 7
    %vm1880 = vcmp.lt.s32.totalorder %v1433, 7
    %vm1881 = vcmp.lt.s32.totalorder %v1434, 7
    %vm1882 = vcmp.lt.s32.totalorder %v1435, 7
    %vm1883 = vcmp.lt.s32.totalorder %v1436, 7
    %vm1884 = vcmp.lt.s32.totalorder %v1437, 7
    %vm1885 = vcmp.lt.s32.totalorder %v1438, 7
    %vm1886 = vcmp.lt.s32.totalorder %v1439, 7
    %vm1887 = vcmp.lt.s32.totalorder %v1440, 7
    %vm1888 = vmand %vm1233, %vm1872
    %vm1889 = vmand %vm1234, %vm1873
    %vm1890 = vmand %vm1235, %vm1874
    %vm1891 = vmand %vm1236, %vm1875
    %vm1892 = vmand %vm1237, %vm1876
    %vm1893 = vmand %vm1238, %vm1877
    %vm1894 = vmand %vm1239, %vm1878
    %vm1895 = vmand %vm1240, %vm1879
    %vm1896 = vmand %vm1241, %vm1880
    %vm1897 = vmand %vm1242, %vm1881
    %vm1898 = vmand %vm1243, %vm1882
    %vm1899 = vmand %vm1244, %vm1883
    %vm1900 = vmand %vm1245, %vm1884
    %vm1901 = vmand %vm1246, %vm1885
    %vm1902 = vmand %vm1247, %vm1886
    %vm1903 = vmand %vm1248, %vm1887
    %v1904 = vsel %vm1888, 1, 0
    %v1905 = vsel %vm1889, 1, 0
    %v1906 = vsel %vm1890, 1, 0
    %v1907 = vsel %vm1891, 1, 0
    %v1908 = vsel %vm1892, 1, 0
    %v1909 = vsel %vm1893, 1, 0
    %v1910 = vsel %vm1894, 1, 0
    %v1911 = vsel %vm1895, 1, 0
    %v1912 = vsel %vm1896, 1, 0
    %v1913 = vsel %vm1897, 1, 0
    %v1914 = vsel %vm1898, 1, 0
    %v1915 = vsel %vm1899, 1, 0
    %v1916 = vsel %vm1900, 1, 0
    %v1917 = vsel %vm1901, 1, 0
    %v1918 = vsel %vm1902, 1, 0
    %v1919 = vsel %vm1903, 1, 0
    %vm1920 = vcmp.eq.s32.totalorder %v1904, 1
    %vm1921 = vcmp.eq.s32.totalorder %v1905, 1
    %vm1922 = vcmp.eq.s32.totalorder %v1906, 1
    %vm1923 = vcmp.eq.s32.totalorder %v1907, 1
    %vm1924 = vcmp.eq.s32.totalorder %v1908, 1
    %vm1925 = vcmp.eq.s32.totalorder %v1909, 1
    %vm1926 = vcmp.eq.s32.totalorder %v1910, 1
    %vm1927 = vcmp.eq.s32.totalorder %v1911, 1
    %vm1928 = vcmp.eq.s32.totalorder %v1912, 1
    %vm1929 = vcmp.eq.s32.totalorder %v1913, 1
    %vm1930 = vcmp.eq.s32.totalorder %v1914, 1
    %vm1931 = vcmp.eq.s32.totalorder %v1915, 1
    %vm1932 = vcmp.eq.s32.totalorder %v1916, 1
    %vm1933 = vcmp.eq.s32.totalorder %v1917, 1
    %vm1934 = vcmp.eq.s32.totalorder %v1918, 1
    %vm1935 = vcmp.eq.s32.totalorder %v1919, 1
    %v1936 = vsel %vm1920, %v1871, 0.0
    %v1937 = vsel %vm1921, %v1870, 0.0
    %v1938 = vsel %vm1922, %v1869, 0.0
    %v1939 = vsel %vm1923, %v1868, 0.0
    %v1940 = vsel %vm1924, %v1867, 0.0
    %v1941 = vsel %vm1925, %v1866, 0.0
    %v1942 = vsel %vm1926, %v1865, 0.0
    %v1943 = vsel %vm1927, %v1864, 0.0
    %v1944 = vsel %vm1928, %v1863, 0.0
    %v1945 = vsel %vm1929, %v1862, 0.0
    %v1946 = vsel %vm1930, %v1861, 0.0
    %v1947 = vsel %vm1931, %v1860, 0.0
    %v1948 = vsel %vm1932, %v1859, 0.0
    %v1949 = vsel %vm1933, %v1858, 0.0
    %v1950 = vsel %vm1934, %v1857, 0.0
    %v1951 = vsel %vm1935, %v1856, 0.0
    %v1952 = vpack.c.bf16 %v1937, %v1936
    %v1953 = vpack.c.bf16 %v1939, %v1938
    %v1954 = vpack.c.bf16 %v1941, %v1940
    %v1955 = vpack.c.bf16 %v1943, %v1942
    %v1956 = vpack.c.bf16 %v1945, %v1944
    %v1957 = vpack.c.bf16 %v1947, %v1946
    %v1958 = vpack.c.bf16 %v1949, %v1948
    %v1959 = vpack.c.bf16 %v1951, %v1950
    %v1960 = vld [vmem:[%s5 + $0x40] sm:$0xff]
    %v1961 = vld [vmem:[%s5 + $0x48] sm:$0xff]
    %v1962 = vld [vmem:[%s5 + $0x50] sm:$0xff]
    %v1963 = vld [vmem:[%s5 + $0x58] sm:$0xff]
    %v1964 = vpack.c.bf16 %v1961, %v1960
    %v1965 = vpack.c.bf16 %v1963, %v1962
    %v1967 = vsel %vm280, %v1952, 0
    %v1970 = vsel %vm280, %v1953, 0
    %v1973 = vsel %vm280, %v1954, 0
    %v1976 = vsel %vm280, %v1955, 0
    %v1979 = vsel %vm280, %v1956, 0
    %v1982 = vsel %vm280, %v1957, 0
    %v1985 = vsel %vm280, %v1958, 0
    %v1988 = vsel %vm280, %v1959, 0
    %1990 = vmatprep.subr.bf16.mxu0 0
    %1991 = vmatpush1.bf16.msra.mxu0 %v1964
    %1992 = vmatprep.subr.bf16.mxu0 0
    %1993 = vmatpush1.bf16.msra.mxu0 %v1965
    %1994 = vmatprep.subr.bf16.mxu0 0
    %1995 = vmatpush1.bf16.msra.mxu0 0
    %1996 = vmatprep.subr.bf16.mxu0 0
    %1997 = vmatpush1.bf16.msra.mxu0 0
    %1998 = vmatprep.subr.bf16.mxu0 0
    %1999 = vmatpush1.bf16.msra.mxu0 0
    %2000 = vmatprep.subr.bf16.mxu0 0
    %2001 = vmatpush1.bf16.msra.mxu0 0
    %2002 = vmatprep.subr.bf16.mxu0 0
    %2003 = vmatpush1.bf16.msra.mxu0 0
    %2004 = vmatprep.subr.bf16.mxu0 0
    %2005 = vmatpush1.bf16.msra.mxu0 0
    %2006 = vmatprep.subr.bf16.mxu0 0
    %2007 = vmatpush1.bf16.msra.mxu0 0
    %2008 = vmatprep.subr.bf16.mxu0 0
    %2009 = vmatpush1.bf16.msra.mxu0 0
    %2010 = vmatprep.subr.bf16.mxu0 0
    %2011 = vmatpush1.bf16.msra.mxu0 0
    %2012 = vmatprep.subr.bf16.mxu0 0
    %2013 = vmatpush1.bf16.msra.mxu0 0
    %2014 = vmatprep.subr.bf16.mxu0 0
    %2015 = vmatpush1.bf16.msra.mxu0 0
    %2016 = vmatprep.subr.bf16.mxu0 0
    %2017 = vmatpush1.bf16.msra.mxu0 0
    %2018 = vmatprep.subr.bf16.mxu0 0
    %2019 = vmatpush1.bf16.msra.mxu0 0
    %2020 = vmatprep.subr.bf16.mxu0 0
    %2021 = vmatpush1.bf16.msra.mxu0 0
    %2022 = vmatprep.mubr.bf16.mxu0 0
    %2023 = vmatmul.mubr.bf16.gmra.mrb[0].mxu0 %v1967
    %v2024 = vpop.f32.mrb[0].mxu0
    %v2025 = vadd.f32 0.0, %v2024
    %v2026 = vpop.f32.mrb[0].mxu0
    %v2027 = vpop.f32.mrb[0].mxu0
    %v2028 = vadd.f32 0.0, %v2027
    %v2029 = vpop.f32.mrb[0].mxu0
    %2030 = vmatprep.mubr.bf16.mxu0 0
    %2031 = vmatmul.mubr.bf16.gmra.mrb[0].mxu0 %v1970
    %v2032 = vpop.f32.mrb[0].mxu0
    %v2033 = vadd.f32 0.0, %v2032
    %v2034 = vpop.f32.mrb[0].mxu0
    %v2035 = vpop.f32.mrb[0].mxu0
    %v2036 = vadd.f32 0.0, %v2035
    %v2037 = vpop.f32.mrb[0].mxu0
    %2038 = vmatprep.mubr.bf16.mxu0 0
    %2039 = vmatmul.mubr.bf16.gmra.mrb[0].mxu0 %v1973
    %v2040 = vpop.f32.mrb[0].mxu0
    %v2041 = vadd.f32 0.0, %v2040
    %v2042 = vpop.f32.mrb[0].mxu0
    %v2043 = vpop.f32.mrb[0].mxu0
    %v2044 = vadd.f32 0.0, %v2043
    %v2045 = vpop.f32.mrb[0].mxu0
    %2046 = vmatprep.mubr.bf16.mxu0 0
    %2047 = vmatmul.mubr.bf16.gmra.mrb[0].mxu0 %v1976
    %v2048 = vpop.f32.mrb[0].mxu0
    %v2049 = vadd.f32 0.0, %v2048
    %v2050 = vpop.f32.mrb[0].mxu0
    %v2051 = vpop.f32.mrb[0].mxu0
    %v2052 = vadd.f32 0.0, %v2051
    %v2053 = vpop.f32.mrb[0].mxu0
    %2054 = vmatprep.mubr.bf16.mxu0 0
    %2055 = vmatmul.mubr.bf16.gmra.mrb[0].mxu0 %v1979
    %v2056 = vpop.f32.mrb[0].mxu0
    %v2057 = vadd.f32 0.0, %v2056
    %v2058 = vpop.f32.mrb[0].mxu0
    %v2059 = vpop.f32.mrb[0].mxu0
    %v2060 = vadd.f32 0.0, %v2059
    %v2061 = vpop.f32.mrb[0].mxu0
    %2062 = vmatprep.mubr.bf16.mxu0 0
    %2063 = vmatmul.mubr.bf16.gmra.mrb[0].mxu0 %v1982
    %v2064 = vpop.f32.mrb[0].mxu0
    %v2065 = vadd.f32 0.0, %v2064
    %v2066 = vpop.f32.mrb[0].mxu0
    %v2067 = vpop.f32.mrb[0].mxu0
    %v2068 = vadd.f32 0.0, %v2067
    %v2069 = vpop.f32.mrb[0].mxu0
    %2070 = vmatprep.mubr.bf16.mxu0 0
    %2071 = vmatmul.mubr.bf16.gmra.mrb[0].mxu0 %v1985
    %v2072 = vpop.f32.mrb[0].mxu0
    %v2073 = vadd.f32 0.0, %v2072
    %v2074 = vpop.f32.mrb[0].mxu0
    %v2075 = vpop.f32.mrb[0].mxu0
    %v2076 = vadd.f32 0.0, %v2075
    %v2077 = vpop.f32.mrb[0].mxu0
    %2078 = vmatprep.mubr.bf16.mxu0 0
    %2079 = vmatmul.mubr.bf16.gmra.mrb[0].mxu0 %v1988
    %v2080 = vpop.f32.mrb[0].mxu0
    %v2081 = vadd.f32 0.0, %v2080
    %v2082 = vpop.f32.mrb[0].mxu0
    %v2083 = vpop.f32.mrb[0].mxu0
    %v2084 = vadd.f32 0.0, %v2083
    %v2085 = vpop.f32.mrb[0].mxu0
    %2086 = vdwg.mxu0
    %v2087 = vadd.f32 %v1777, %v2025
    %v2088 = vadd.f32 %v1780, %v2028
    %v2089 = vadd.f32 %v1785, %v2033
    %v2090 = vadd.f32 %v1788, %v2036
    %v2091 = vadd.f32 %v1793, %v2041
    %v2092 = vadd.f32 %v1796, %v2044
    %v2093 = vadd.f32 %v1801, %v2049
    %v2094 = vadd.f32 %v1804, %v2052
    %v2095 = vadd.f32 %v1809, %v2057
    %v2096 = vadd.f32 %v1812, %v2060
    %v2097 = vadd.f32 %v1817, %v2065
    %v2098 = vadd.f32 %v1820, %v2068
    %v2099 = vadd.f32 %v1825, %v2073
    %v2100 = vadd.f32 %v1828, %v2076
    %v2101 = vadd.f32 %v1833, %v2081
    %v2102 = vadd.f32 %v1836, %v2084
    %v2103 = vsel %vm1441, 1, 0
    %v2104 = vsel %vm1442, 1, 0
    %v2105 = vsel %vm1443, 1, 0
    %v2106 = vsel %vm1444, 1, 0
    %v2107 = vsel %vm1445, 1, 0
    %v2108 = vsel %vm1446, 1, 0
    %v2109 = vsel %vm1447, 1, 0
    %v2110 = vsel %vm1448, 1, 0
    %v2111 = vsel %vm1449, 1, 0
    %v2112 = vsel %vm1450, 1, 0
    %v2113 = vsel %vm1451, 1, 0
    %v2114 = vsel %vm1452, 1, 0
    %v2115 = vsel %vm1453, 1, 0
    %v2116 = vsel %vm1454, 1, 0
    %v2117 = vsel %vm1455, 1, 0
    %v2118 = vsel %vm1456, 1, 0
    %vm2119 = vcmp.eq.s32.totalorder %v2103, 1
    %vm2120 = vcmp.eq.s32.totalorder %v2104, 1
    %vm2121 = vcmp.eq.s32.totalorder %v2105, 1
    %vm2122 = vcmp.eq.s32.totalorder %v2106, 1
    %vm2123 = vcmp.eq.s32.totalorder %v2107, 1
    %vm2124 = vcmp.eq.s32.totalorder %v2108, 1
    %vm2125 = vcmp.eq.s32.totalorder %v2109, 1
    %vm2126 = vcmp.eq.s32.totalorder %v2110, 1
    %vm2127 = vcmp.eq.s32.totalorder %v2111, 1
    %vm2128 = vcmp.eq.s32.totalorder %v2112, 1
    %vm2129 = vcmp.eq.s32.totalorder %v2113, 1
    %vm2130 = vcmp.eq.s32.totalorder %v2114, 1
    %vm2131 = vcmp.eq.s32.totalorder %v2115, 1
    %vm2132 = vcmp.eq.s32.totalorder %v2116, 1
    %vm2133 = vcmp.eq.s32.totalorder %v2117, 1
    %vm2134 = vcmp.eq.s32.totalorder %v2118, 1
    %v2135 = vsel %vm2119, %v1232, 0.0
    %v2136 = vsel %vm2120, %v1231, 0.0
    %v2137 = vsel %vm2121, %v1230, 0.0
    %v2138 = vsel %vm2122, %v1229, 0.0
    %v2139 = vsel %vm2123, %v1228, 0.0
    %v2140 = vsel %vm2124, %v1227, 0.0
    %v2141 = vsel %vm2125, %v1226, 0.0
    %v2142 = vsel %vm2126, %v1225, 0.0
    %v2143 = vsel %vm2127, %v1224, 0.0
    %v2144 = vsel %vm2128, %v1223, 0.0
    %v2145 = vsel %vm2129, %v1222, 0.0
    %v2146 = vsel %vm2130, %v1221, 0.0
    %v2147 = vsel %vm2131, %v1220, 0.0
    %v2148 = vsel %vm2132, %v1219, 0.0
    %v2149 = vsel %vm2133, %v1218, 0.0
    %v2150 = vsel %vm2134, %v1217, 0.0
    %v2151 = vpack.c.bf16 %v2136, %v2135
    %v2152 = vpack.c.bf16 %v2138, %v2137
    %v2153 = vpack.c.bf16 %v2140, %v2139
    %v2154 = vpack.c.bf16 %v2142, %v2141
    %v2155 = vpack.c.bf16 %v2144, %v2143
    %v2156 = vpack.c.bf16 %v2146, %v2145
    %v2157 = vpack.c.bf16 %v2148, %v2147
    %v2158 = vpack.c.bf16 %v2150, %v2149
    %v2159 = vld [vmem:[%s5 + $0x60] sm:$0xff]
    %v2160 = vld [vmem:[%s5 + $0x68] sm:$0xff]
    %v2161 = vld [vmem:[%s5 + $0x70] sm:$0xff]
    %v2162 = vld [vmem:[%s5 + $0x78] sm:$0xff]
    %v2163 = vpack.c.bf16 %v2160, %v2159
    %v2164 = vpack.c.bf16 %v2162, %v2161
    %v2166 = vsel %vm280, %v2151, 0
    %v2169 = vsel %vm280, %v2152, 0
    %v2172 = vsel %vm280, %v2153, 0
    %v2175 = vsel %vm280, %v2154, 0
    %v2178 = vsel %vm280, %v2155, 0
    %v2181 = vsel %vm280, %v2156, 0
    %v2184 = vsel %vm280, %v2157, 0
    %v2187 = vsel %vm280, %v2158, 0
    %2189 = vmatprep.subr.bf16.mxu0 0
    %2190 = vmatpush1.bf16.msra.mxu0 %v2163
    %2191 = vmatprep.subr.bf16.mxu0 0
    %2192 = vmatpush1.bf16.msra.mxu0 %v2164
    %2193 = vmatprep.subr.bf16.mxu0 0
    %2194 = vmatpush1.bf16.msra.mxu0 0
    %2195 = vmatprep.subr.bf16.mxu0 0
    %2196 = vmatpush1.bf16.msra.mxu0 0
    %2197 = vmatprep.subr.bf16.mxu0 0
    %2198 = vmatpush1.bf16.msra.mxu0 0
    %2199 = vmatprep.subr.bf16.mxu0 0
    %2200 = vmatpush1.bf16.msra.mxu0 0
    %2201 = vmatprep.subr.bf16.mxu0 0
    %2202 = vmatpush1.bf16.msra.mxu0 0
    %2203 = vmatprep.subr.bf16.mxu0 0
    %2204 = vmatpush1.bf16.msra.mxu0 0
    %2205 = vmatprep.subr.bf16.mxu0 0
    %2206 = vmatpush1.bf16.msra.mxu0 0
    %2207 = vmatprep.subr.bf16.mxu0 0
    %2208 = vmatpush1.bf16.msra.mxu0 0
    %2209 = vmatprep.subr.bf16.mxu0 0
    %2210 = vmatpush1.bf16.msra.mxu0 0
    %2211 = vmatprep.subr.bf16.mxu0 0
    %2212 = vmatpush1.bf16.msra.mxu0 0
    %2213 = vmatprep.subr.bf16.mxu0 0
    %2214 = vmatpush1.bf16.msra.mxu0 0
    %2215 = vmatprep.subr.bf16.mxu0 0
    %2216 = vmatpush1.bf16.msra.mxu0 0
    %2217 = vmatprep.subr.bf16.mxu0 0
    %2218 = vmatpush1.bf16.msra.mxu0 0
    %2219 = vmatprep.subr.bf16.mxu0 0
    %2220 = vmatpush1.bf16.msra.mxu0 0
    %2221 = vmatprep.mubr.bf16.mxu0 0
    %2222 = vmatmul.mubr.bf16.gmra.mrb[0].mxu0 %v2166
    %v2223 = vpop.f32.mrb[0].mxu0
    %v2224 = vadd.f32 0.0, %v2223
    %v2225 = vpop.f32.mrb[0].mxu0
    %v2226 = vpop.f32.mrb[0].mxu0
    %v2227 = vadd.f32 0.0, %v2226
    %v2228 = vpop.f32.mrb[0].mxu0
    %2229 = vmatprep.mubr.bf16.mxu0 0
    %2230 = vmatmul.mubr.bf16.gmra.mrb[0].mxu0 %v2169
    %v2231 = vpop.f32.mrb[0].mxu0
    %v2232 = vadd.f32 0.0, %v2231
    %v2233 = vpop.f32.mrb[0].mxu0
    %v2234 = vpop.f32.mrb[0].mxu0
    %v2235 = vadd.f32 0.0, %v2234
    %v2236 = vpop.f32.mrb[0].mxu0
    %2237 = vmatprep.mubr.bf16.mxu0 0
    %2238 = vmatmul.mubr.bf16.gmra.mrb[0].mxu0 %v2172
    %v2239 = vpop.f32.mrb[0].mxu0
    %v2240 = vadd.f32 0.0, %v2239
    %v2241 = vpop.f32.mrb[0].mxu0
    %v2242 = vpop.f32.mrb[0].mxu0
    %v2243 = vadd.f32 0.0, %v2242
    %v2244 = vpop.f32.mrb[0].mxu0
    %2245 = vmatprep.mubr.bf16.mxu0 0
    %2246 = vmatmul.mubr.bf16.gmra.mrb[0].mxu0 %v2175
    %v2247 = vpop.f32.mrb[0].mxu0
    %v2248 = vadd.f32 0.0, %v2247
    %v2249 = vpop.f32.mrb[0].mxu0
    %v2250 = vpop.f32.mrb[0].mxu0
    %v2251 = vadd.f32 0.0, %v2250
    %v2252 = vpop.f32.mrb[0].mxu0
    %2253 = vmatprep.mubr.bf16.mxu0 0
    %2254 = vmatmul.mubr.bf16.gmra.mrb[0].mxu0 %v2178
    %v2255 = vpop.f32.mrb[0].mxu0
    %v2256 = vadd.f32 0.0, %v2255
    %v2257 = vpop.f32.mrb[0].mxu0
    %v2258 = vpop.f32.mrb[0].mxu0
    %v2259 = vadd.f32 0.0, %v2258
    %v2260 = vpop.f32.mrb[0].mxu0
    %2261 = vmatprep.mubr.bf16.mxu0 0
    %2262 = vmatmul.mubr.bf16.gmra.mrb[0].mxu0 %v2181
    %v2263 = vpop.f32.mrb[0].mxu0
    %v2264 = vadd.f32 0.0, %v2263
    %v2265 = vpop.f32.mrb[0].mxu0
    %v2266 = vpop.f32.mrb[0].mxu0
    %v2267 = vadd.f32 0.0, %v2266
    %v2268 = vpop.f32.mrb[0].mxu0
    %2269 = vmatprep.mubr.bf16.mxu0 0
    %2270 = vmatmul.mubr.bf16.gmra.mrb[0].mxu0 %v2184
    %v2271 = vpop.f32.mrb[0].mxu0
    %v2272 = vadd.f32 0.0, %v2271
    %v2273 = vpop.f32.mrb[0].mxu0
    %v2274 = vpop.f32.mrb[0].mxu0
    %v2275 = vadd.f32 0.0, %v2274
    %v2276 = vpop.f32.mrb[0].mxu0
    %2277 = vmatprep.mubr.bf16.mxu0 0
    %2278 = vmatmul.mubr.bf16.gmra.mrb[0].mxu0 %v2187
    %v2279 = vpop.f32.mrb[0].mxu0
    %v2280 = vadd.f32 0.0, %v2279
    %v2281 = vpop.f32.mrb[0].mxu0
    %v2282 = vpop.f32.mrb[0].mxu0
    %v2283 = vadd.f32 0.0, %v2282
    %v2284 = vpop.f32.mrb[0].mxu0
    %2285 = vdwg.mxu0
    %v2286 = vadd.f32 %v2087, %v2224
    %v2287 = vadd.f32 %v2088, %v2227
    %v2288 = vadd.f32 %v2089, %v2232
    %v2289 = vadd.f32 %v2090, %v2235
    %v2290 = vadd.f32 %v2091, %v2240
    %v2291 = vadd.f32 %v2092, %v2243
    %v2292 = vadd.f32 %v2093, %v2248
    %v2293 = vadd.f32 %v2094, %v2251
    %v2294 = vadd.f32 %v2095, %v2256
    %v2295 = vadd.f32 %v2096, %v2259
    %v2296 = vadd.f32 %v2097, %v2264
    %v2297 = vadd.f32 %v2098, %v2267
    %v2298 = vadd.f32 %v2099, %v2272
    %v2299 = vadd.f32 %v2100, %v2275
    %v2300 = vadd.f32 %v2101, %v2280
    %v2301 = vadd.f32 %v2102, %v2283
    %v2302 = vpack.c.bf16 %v1083, %v1082
    %v2303 = vpack.c.bf16 %v1085, %v1084
    %v2304 = vpack.c.bf16 %v1087, %v1086
    %v2305 = vpack.c.bf16 %v1089, %v1088
    %v2306 = vpack.c.bf16 %v1193, %v1192
    %v2307 = vpack.c.bf16 %v1195, %v1194
    %v2308 = vpack.c.bf16 %v1197, %v1196
    %v2309 = vpack.c.bf16 %v1199, %v1198
    %v2310 = vld [vmem:[%s5 + $0x80] sm:$0xff]
    %v2311 = vld [vmem:[%s5 + $0x88] sm:$0xff]
    %v2312 = vld [vmem:[%s5 + $0x90] sm:$0xff]
    %v2313 = vld [vmem:[%s5 + $0x98] sm:$0xff]
    %v2314 = vpack.c.bf16 %v2311, %v2310
    %v2315 = vpack.c.bf16 %v2313, %v2312
    %v2317 = vsel %vm280, %v2302, 0
    %v2320 = vsel %vm280, %v2303, 0
    %v2323 = vsel %vm280, %v2304, 0
    %v2326 = vsel %vm280, %v2305, 0
    %v2329 = vsel %vm280, %v2306, 0
    %v2332 = vsel %vm280, %v2307, 0
    %v2335 = vsel %vm280, %v2308, 0
    %v2338 = vsel %vm280, %v2309, 0
    %2340 = vmatprep.subr.bf16.mxu0 0
    %2341 = vmatpush1.bf16.msra.mxu0 %v2314
    %2342 = vmatprep.subr.bf16.mxu0 0
    %2343 = vmatpush1.bf16.msra.mxu0 %v2315
    %2344 = vmatprep.subr.bf16.mxu0 0
    %2345 = vmatpush1.bf16.msra.mxu0 0
    %2346 = vmatprep.subr.bf16.mxu0 0
    %2347 = vmatpush1.bf16.msra.mxu0 0
    %2348 = vmatprep.subr.bf16.mxu0 0
    %2349 = vmatpush1.bf16.msra.mxu0 0
    %2350 = vmatprep.subr.bf16.mxu0 0
    %2351 = vmatpush1.bf16.msra.mxu0 0
    %2352 = vmatprep.subr.bf16.mxu0 0
    %2353 = vmatpush1.bf16.msra.mxu0 0
    %2354 = vmatprep.subr.bf16.mxu0 0
    %2355 = vmatpush1.bf16.msra.mxu0 0
    %2356 = vmatprep.subr.bf16.mxu0 0
    %2357 = vmatpush1.bf16.msra.mxu0 0
    %2358 = vmatprep.subr.bf16.mxu0 0
    %2359 = vmatpush1.bf16.msra.mxu0 0
    %2360 = vmatprep.subr.bf16.mxu0 0
    %2361 = vmatpush1.bf16.msra.mxu0 0
    %2362 = vmatprep.subr.bf16.mxu0 0
    %2363 = vmatpush1.bf16.msra.mxu0 0
    %2364 = vmatprep.subr.bf16.mxu0 0
    %2365 = vmatpush1.bf16.msra.mxu0 0
    %2366 = vmatprep.subr.bf16.mxu0 0
    %2367 = vmatpush1.bf16.msra.mxu0 0
    %2368 = vmatprep.subr.bf16.mxu0 0
    %2369 = vmatpush1.bf16.msra.mxu0 0
    %2370 = vmatprep.subr.bf16.mxu0 0
    %2371 = vmatpush1.bf16.msra.mxu0 0
    %2372 = vmatprep.mubr.bf16.mxu0 0
    %2373 = vmatmul.mubr.bf16.gmra.mrb[0].mxu0 %v2317
    %v2374 = vpop.f32.mrb[0].mxu0
    %v2375 = vadd.f32 0.0, %v2374
    %v2376 = vpop.f32.mrb[0].mxu0
    %v2377 = vpop.f32.mrb[0].mxu0
    %v2378 = vadd.f32 0.0, %v2377
    %v2379 = vpop.f32.mrb[0].mxu0
    %2380 = vmatprep.mubr.bf16.mxu0 0
    %2381 = vmatmul.mubr.bf16.gmra.mrb[0].mxu0 %v2320
    %v2382 = vpop.f32.mrb[0].mxu0
    %v2383 = vadd.f32 0.0, %v2382
    %v2384 = vpop.f32.mrb[0].mxu0
    %v2385 = vpop.f32.mrb[0].mxu0
    %v2386 = vadd.f32 0.0, %v2385
    %v2387 = vpop.f32.mrb[0].mxu0
    %2388 = vmatprep.mubr.bf16.mxu0 0
    %2389 = vmatmul.mubr.bf16.gmra.mrb[0].mxu0 %v2323
    %v2390 = vpop.f32.mrb[0].mxu0
    %v2391 = vadd.f32 0.0, %v2390
    %v2392 = vpop.f32.mrb[0].mxu0
    %v2393 = vpop.f32.mrb[0].mxu0
    %v2394 = vadd.f32 0.0, %v2393
    %v2395 = vpop.f32.mrb[0].mxu0
    %2396 = vmatprep.mubr.bf16.mxu0 0
    %2397 = vmatmul.mubr.bf16.gmra.mrb[0].mxu0 %v2326
    %v2398 = vpop.f32.mrb[0].mxu0
    %v2399 = vadd.f32 0.0, %v2398
    %v2400 = vpop.f32.mrb[0].mxu0
    %v2401 = vpop.f32.mrb[0].mxu0
    %v2402 = vadd.f32 0.0, %v2401
    %v2403 = vpop.f32.mrb[0].mxu0
    %2404 = vmatprep.mubr.bf16.mxu0 0
    %2405 = vmatmul.mubr.bf16.gmra.mrb[0].mxu0 %v2329
    %v2406 = vpop.f32.mrb[0].mxu0
    %v2407 = vadd.f32 0.0, %v2406
    %v2408 = vpop.f32.mrb[0].mxu0
    %v2409 = vpop.f32.mrb[0].mxu0
    %v2410 = vadd.f32 0.0, %v2409
    %v2411 = vpop.f32.mrb[0].mxu0
    %2412 = vmatprep.mubr.bf16.mxu0 0
    %2413 = vmatmul.mubr.bf16.gmra.mrb[0].mxu0 %v2332
    %v2414 = vpop.f32.mrb[0].mxu0
    %v2415 = vadd.f32 0.0, %v2414
    %v2416 = vpop.f32.mrb[0].mxu0
    %v2417 = vpop.f32.mrb[0].mxu0
    %v2418 = vadd.f32 0.0, %v2417
    %v2419 = vpop.f32.mrb[0].mxu0
    %2420 = vmatprep.mubr.bf16.mxu0 0
    %2421 = vmatmul.mubr.bf16.gmra.mrb[0].mxu0 %v2335
    %v2422 = vpop.f32.mrb[0].mxu0
    %v2423 = vadd.f32 0.0, %v2422
    %v2424 = vpop.f32.mrb[0].mxu0
    %v2425 = vpop.f32.mrb[0].mxu0
    %v2426 = vadd.f32 0.0, %v2425
    %v2427 = vpop.f32.mrb[0].mxu0
    %2428 = vmatprep.mubr.bf16.mxu0 0
    %2429 = vmatmul.mubr.bf16.gmra.mrb[0].mxu0 %v2338
    %v2430 = vpop.f32.mrb[0].mxu0
    %v2431 = vadd.f32 0.0, %v2430
    %v2432 = vpop.f32.mrb[0].mxu0
    %v2433 = vpop.f32.mrb[0].mxu0
    %v2434 = vadd.f32 0.0, %v2433
    %v2435 = vpop.f32.mrb[0].mxu0
    %2436 = vdwg.mxu0
    %v2437 = vadd.f32 %v2286, %v2375
    %v2438 = vadd.f32 %v2287, %v2378
    %v2439 = vadd.f32 %v2288, %v2383
    %v2440 = vadd.f32 %v2289, %v2386
    %v2441 = vadd.f32 %v2290, %v2391
    %v2442 = vadd.f32 %v2291, %v2394
    %v2443 = vadd.f32 %v2292, %v2399
    %v2444 = vadd.f32 %v2293, %v2402
    %v2445 = vadd.f32 %v2294, %v2407
    %v2446 = vadd.f32 %v2295, %v2410
    %v2447 = vadd.f32 %v2296, %v2415
    %v2448 = vadd.f32 %v2297, %v2418
    %v2449 = vadd.f32 %v2298, %v2423
    %v2450 = vadd.f32 %v2299, %v2426
    %v2451 = vadd.f32 %v2300, %v2431
    %v2452 = vadd.f32 %v2301, %v2434
    %v2453 = vsel %vm1872, 1, 0
    %v2454 = vsel %vm1873, 1, 0
    %v2455 = vsel %vm1874, 1, 0
    %v2456 = vsel %vm1875, 1, 0
    %v2457 = vsel %vm1876, 1, 0
    %v2458 = vsel %vm1877, 1, 0
    %v2459 = vsel %vm1878, 1, 0
    %v2460 = vsel %vm1879, 1, 0
    %v2461 = vsel %vm1880, 1, 0
    %v2462 = vsel %vm1881, 1, 0
    %v2463 = vsel %vm1882, 1, 0
    %v2464 = vsel %vm1883, 1, 0
    %v2465 = vsel %vm1884, 1, 0
    %v2466 = vsel %vm1885, 1, 0
    %v2467 = vsel %vm1886, 1, 0
    %v2468 = vsel %vm1887, 1, 0
    %vm2469 = vcmp.eq.s32.totalorder %v2453, 1
    %vm2470 = vcmp.eq.s32.totalorder %v2454, 1
    %vm2471 = vcmp.eq.s32.totalorder %v2455, 1
    %vm2472 = vcmp.eq.s32.totalorder %v2456, 1
    %vm2473 = vcmp.eq.s32.totalorder %v2457, 1
    %vm2474 = vcmp.eq.s32.totalorder %v2458, 1
    %vm2475 = vcmp.eq.s32.totalorder %v2459, 1
    %vm2476 = vcmp.eq.s32.totalorder %v2460, 1
    %vm2477 = vcmp.eq.s32.totalorder %v2461, 1
    %vm2478 = vcmp.eq.s32.totalorder %v2462, 1
    %vm2479 = vcmp.eq.s32.totalorder %v2463, 1
    %vm2480 = vcmp.eq.s32.totalorder %v2464, 1
    %vm2481 = vcmp.eq.s32.totalorder %v2465, 1
    %vm2482 = vcmp.eq.s32.totalorder %v2466, 1
    %vm2483 = vcmp.eq.s32.totalorder %v2467, 1
    %vm2484 = vcmp.eq.s32.totalorder %v2468, 1
    %v2485 = vsel %vm2469, %v1870, 0.0
    %v2486 = vsel %vm2470, %v1869, 0.0
    %v2487 = vsel %vm2471, %v1868, 0.0
    %v2488 = vsel %vm2472, %v1867, 0.0
    %v2489 = vsel %vm2473, %v1866, 0.0
    %v2490 = vsel %vm2474, %v1865, 0.0
    %v2491 = vsel %vm2475, %v1864, 0.0
    %v2492 = vsel %vm2476, %v1863, 0.0
    %v2493 = vsel %vm2477, %v1862, 0.0
    %v2494 = vsel %vm2478, %v1861, 0.0
    %v2495 = vsel %vm2479, %v1860, 0.0
    %v2496 = vsel %vm2480, %v1859, 0.0
    %v2497 = vsel %vm2481, %v1858, 0.0
    %v2498 = vsel %vm2482, %v1857, 0.0
    %v2499 = vsel %vm2483, %v1856, 0.0
    %v2500 = vsel %vm2484, %v1871, 0.0
    %v2501 = vpack.c.bf16 %v2486, %v2485
    %v2502 = vpack.c.bf16 %v2488, %v2487
    %v2503 = vpack.c.bf16 %v2490, %v2489
    %v2504 = vpack.c.bf16 %v2492, %v2491
    %v2505 = vpack.c.bf16 %v2494, %v2493
    %v2506 = vpack.c.bf16 %v2496, %v2495
    %v2507 = vpack.c.bf16 %v2498, %v2497
    %v2508 = vpack.c.bf16 %v2500, %v2499
    %v2509 = vld [vmem:[%s5 + $0xa0] sm:$0xff]
    %v2510 = vld [vmem:[%s5 + $0xa8] sm:$0xff]
    %v2511 = vld [vmem:[%s5 + $0xb0] sm:$0xff]
    %v2512 = vld [vmem:[%s5 + $0xb8] sm:$0xff]
    %v2513 = vpack.c.bf16 %v2510, %v2509
    %v2514 = vpack.c.bf16 %v2512, %v2511
    %v2516 = vsel %vm280, %v2501, 0
    %v2519 = vsel %vm280, %v2502, 0
    %v2522 = vsel %vm280, %v2503, 0
    %v2525 = vsel %vm280, %v2504, 0
    %v2528 = vsel %vm280, %v2505, 0
    %v2531 = vsel %vm280, %v2506, 0
    %v2534 = vsel %vm280, %v2507, 0
    %v2537 = vsel %vm280, %v2508, 0
    %2539 = vmatprep.subr.bf16.mxu0 0
    %2540 = vmatpush1.bf16.msra.mxu0 %v2513
    %2541 = vmatprep.subr.bf16.mxu0 0
    %2542 = vmatpush1.bf16.msra.mxu0 %v2514
    %2543 = vmatprep.subr.bf16.mxu0 0
    %2544 = vmatpush1.bf16.msra.mxu0 0
    %2545 = vmatprep.subr.bf16.mxu0 0
    %2546 = vmatpush1.bf16.msra.mxu0 0
    %2547 = vmatprep.subr.bf16.mxu0 0
    %2548 = vmatpush1.bf16.msra.mxu0 0
    %2549 = vmatprep.subr.bf16.mxu0 0
    %2550 = vmatpush1.bf16.msra.mxu0 0
    %2551 = vmatprep.subr.bf16.mxu0 0
    %2552 = vmatpush1.bf16.msra.mxu0 0
    %2553 = vmatprep.subr.bf16.mxu0 0
    %2554 = vmatpush1.bf16.msra.mxu0 0
    %2555 = vmatprep.subr.bf16.mxu0 0
    %2556 = vmatpush1.bf16.msra.mxu0 0
    %2557 = vmatprep.subr.bf16.mxu0 0
    %2558 = vmatpush1.bf16.msra.mxu0 0
    %2559 = vmatprep.subr.bf16.mxu0 0
    %2560 = vmatpush1.bf16.msra.mxu0 0
    %2561 = vmatprep.subr.bf16.mxu0 0
    %2562 = vmatpush1.bf16.msra.mxu0 0
    %2563 = vmatprep.subr.bf16.mxu0 0
    %2564 = vmatpush1.bf16.msra.mxu0 0
    %2565 = vmatprep.subr.bf16.mxu0 0
    %2566 = vmatpush1.bf16.msra.mxu0 0
    %2567 = vmatprep.subr.bf16.mxu0 0
    %2568 = vmatpush1.bf16.msra.mxu0 0
    %2569 = vmatprep.subr.bf16.mxu0 0
    %2570 = vmatpush1.bf16.msra.mxu0 0
    %2571 = vmatprep.mubr.bf16.mxu0 0
    %2572 = vmatmul.mubr.bf16.gmra.mrb[0].mxu0 %v2516
    %v2573 = vpop.f32.mrb[0].mxu0
    %v2574 = vadd.f32 0.0, %v2573
    %v2575 = vpop.f32.mrb[0].mxu0
    %v2576 = vpop.f32.mrb[0].mxu0
    %v2577 = vadd.f32 0.0, %v2576
    %v2578 = vpop.f32.mrb[0].mxu0
    %2579 = vmatprep.mubr.bf16.mxu0 0
    %2580 = vmatmul.mubr.bf16.gmra.mrb[0].mxu0 %v2519
    %v2581 = vpop.f32.mrb[0].mxu0
    %v2582 = vadd.f32 0.0, %v2581
    %v2583 = vpop.f32.mrb[0].mxu0
    %v2584 = vpop.f32.mrb[0].mxu0
    %v2585 = vadd.f32 0.0, %v2584
    %v2586 = vpop.f32.mrb[0].mxu0
    %2587 = vmatprep.mubr.bf16.mxu0 0
    %2588 = vmatmul.mubr.bf16.gmra.mrb[0].mxu0 %v2522
    %v2589 = vpop.f32.mrb[0].mxu0
    %v2590 = vadd.f32 0.0, %v2589
    %v2591 = vpop.f32.mrb[0].mxu0
    %v2592 = vpop.f32.mrb[0].mxu0
    %v2593 = vadd.f32 0.0, %v2592
    %v2594 = vpop.f32.mrb[0].mxu0
    %2595 = vmatprep.mubr.bf16.mxu0 0
    %2596 = vmatmul.mubr.bf16.gmra.mrb[0].mxu0 %v2525
    %v2597 = vpop.f32.mrb[0].mxu0
    %v2598 = vadd.f32 0.0, %v2597
    %v2599 = vpop.f32.mrb[0].mxu0
    %v2600 = vpop.f32.mrb[0].mxu0
    %v2601 = vadd.f32 0.0, %v2600
    %v2602 = vpop.f32.mrb[0].mxu0
    %2603 = vmatprep.mubr.bf16.mxu0 0
    %2604 = vmatmul.mubr.bf16.gmra.mrb[0].mxu0 %v2528
    %v2605 = vpop.f32.mrb[0].mxu0
    %v2606 = vadd.f32 0.0, %v2605
    %v2607 = vpop.f32.mrb[0].mxu0
    %v2608 = vpop.f32.mrb[0].mxu0
    %v2609 = vadd.f32 0.0, %v2608
    %v2610 = vpop.f32.mrb[0].mxu0
    %2611 = vmatprep.mubr.bf16.mxu0 0
    %2612 = vmatmul.mubr.bf16.gmra.mrb[0].mxu0 %v2531
    %v2613 = vpop.f32.mrb[0].mxu0
    %v2614 = vadd.f32 0.0, %v2613
    %v2615 = vpop.f32.mrb[0].mxu0
    %v2616 = vpop.f32.mrb[0].mxu0
    %v2617 = vadd.f32 0.0, %v2616
    %v2618 = vpop.f32.mrb[0].mxu0
    %2619 = vmatprep.mubr.bf16.mxu0 0
    %2620 = vmatmul.mubr.bf16.gmra.mrb[0].mxu0 %v2534
    %v2621 = vpop.f32.mrb[0].mxu0
    %v2622 = vadd.f32 0.0, %v2621
    %v2623 = vpop.f32.mrb[0].mxu0
    %v2624 = vpop.f32.mrb[0].mxu0
    %v2625 = vadd.f32 0.0, %v2624
    %v2626 = vpop.f32.mrb[0].mxu0
    %2627 = vmatprep.mubr.bf16.mxu0 0
    %2628 = vmatmul.mubr.bf16.gmra.mrb[0].mxu0 %v2537
    %v2629 = vpop.f32.mrb[0].mxu0
    %v2630 = vadd.f32 0.0, %v2629
    %v2631 = vpop.f32.mrb[0].mxu0
    %v2632 = vpop.f32.mrb[0].mxu0
    %v2633 = vadd.f32 0.0, %v2632
    %v2634 = vpop.f32.mrb[0].mxu0
    %2635 = vdwg.mxu0
    %v2636 = vadd.f32 %v2437, %v2574
    %v2637 = vadd.f32 %v2438, %v2577
    %v2638 = vadd.f32 %v2439, %v2582
    %v2639 = vadd.f32 %v2440, %v2585
    %v2640 = vadd.f32 %v2441, %v2590
    %v2641 = vadd.f32 %v2442, %v2593
    %v2642 = vadd.f32 %v2443, %v2598
    %v2643 = vadd.f32 %v2444, %v2601
    %v2644 = vadd.f32 %v2445, %v2606
    %v2645 = vadd.f32 %v2446, %v2609
    %v2646 = vadd.f32 %v2447, %v2614
    %v2647 = vadd.f32 %v2448, %v2617
    %v2648 = vadd.f32 %v2449, %v2622
    %v2649 = vadd.f32 %v2450, %v2625
    %v2650 = vadd.f32 %v2451, %v2630
    %v2651 = vadd.f32 %v2452, %v2633
    %vm2652 = vcmp.lt.s32.totalorder %v248, 56
    %vm2653 = vcmp.lt.s32.totalorder %v249, 56
    %vm2654 = vcmp.lt.s32.totalorder %v250, 56
    %vm2655 = vcmp.lt.s32.totalorder %v251, 56
    %vm2656 = vcmp.lt.s32.totalorder %v252, 56
    %vm2657 = vcmp.lt.s32.totalorder %v253, 56
    %vm2658 = vcmp.lt.s32.totalorder %v254, 56
    %vm2659 = vcmp.lt.s32.totalorder %v255, 56
    %vm2660 = vcmp.lt.s32.totalorder %v256, 56
    %vm2661 = vcmp.lt.s32.totalorder %v257, 56
    %vm2662 = vcmp.lt.s32.totalorder %v258, 56
    %vm2663 = vcmp.lt.s32.totalorder %v259, 56
    %vm2664 = vcmp.lt.s32.totalorder %v260, 56
    %vm2665 = vcmp.lt.s32.totalorder %v261, 56
    %vm2666 = vcmp.lt.s32.totalorder %v262, 56
    %vm2667 = vcmp.lt.s32.totalorder %v263, 56
    %vm2668 = vmand %vm2652, %vm1441
    %vm2669 = vmand %vm2653, %vm1442
    %vm2670 = vmand %vm2654, %vm1443
    %vm2671 = vmand %vm2655, %vm1444
    %vm2672 = vmand %vm2656, %vm1445
    %vm2673 = vmand %vm2657, %vm1446
    %vm2674 = vmand %vm2658, %vm1447
    %vm2675 = vmand %vm2659, %vm1448
    %vm2676 = vmand %vm2660, %vm1449
    %vm2677 = vmand %vm2661, %vm1450
    %vm2678 = vmand %vm2662, %vm1451
    %vm2679 = vmand %vm2663, %vm1452
    %vm2680 = vmand %vm2664, %vm1453
    %vm2681 = vmand %vm2665, %vm1454
    %vm2682 = vmand %vm2666, %vm1455
    %vm2683 = vmand %vm2667, %vm1456
    %v2684 = vsel %vm2668, 1, 0
    %v2685 = vsel %vm2669, 1, 0
    %v2686 = vsel %vm2670, 1, 0
    %v2687 = vsel %vm2671, 1, 0
    %v2688 = vsel %vm2672, 1, 0
    %v2689 = vsel %vm2673, 1, 0
    %v2690 = vsel %vm2674, 1, 0
    %v2691 = vsel %vm2675, 1, 0
    %v2692 = vsel %vm2676, 1, 0
    %v2693 = vsel %vm2677, 1, 0
    %v2694 = vsel %vm2678, 1, 0
    %v2695 = vsel %vm2679, 1, 0
    %v2696 = vsel %vm2680, 1, 0
    %v2697 = vsel %vm2681, 1, 0
    %v2698 = vsel %vm2682, 1, 0
    %v2699 = vsel %vm2683, 1, 0
    %vm2700 = vcmp.eq.s32.totalorder %v2684, 1
    %vm2701 = vcmp.eq.s32.totalorder %v2685, 1
    %vm2702 = vcmp.eq.s32.totalorder %v2686, 1
    %vm2703 = vcmp.eq.s32.totalorder %v2687, 1
    %vm2704 = vcmp.eq.s32.totalorder %v2688, 1
    %vm2705 = vcmp.eq.s32.totalorder %v2689, 1
    %vm2706 = vcmp.eq.s32.totalorder %v2690, 1
    %vm2707 = vcmp.eq.s32.totalorder %v2691, 1
    %vm2708 = vcmp.eq.s32.totalorder %v2692, 1
    %vm2709 = vcmp.eq.s32.totalorder %v2693, 1
    %vm2710 = vcmp.eq.s32.totalorder %v2694, 1
    %vm2711 = vcmp.eq.s32.totalorder %v2695, 1
    %vm2712 = vcmp.eq.s32.totalorder %v2696, 1
    %vm2713 = vcmp.eq.s32.totalorder %v2697, 1
    %vm2714 = vcmp.eq.s32.totalorder %v2698, 1
    %vm2715 = vcmp.eq.s32.totalorder %v2699, 1
    %v2716 = vsel %vm2700, %v1231, 0.0
    %v2717 = vsel %vm2701, %v1230, 0.0
    %v2718 = vsel %vm2702, %v1229, 0.0
    %v2719 = vsel %vm2703, %v1228, 0.0
    %v2720 = vsel %vm2704, %v1227, 0.0
    %v2721 = vsel %vm2705, %v1226, 0.0
    %v2722 = vsel %vm2706, %v1225, 0.0
    %v2723 = vsel %vm2707, %v1224, 0.0
    %v2724 = vsel %vm2708, %v1223, 0.0
    %v2725 = vsel %vm2709, %v1222, 0.0
    %v2726 = vsel %vm2710, %v1221, 0.0
    %v2727 = vsel %vm2711, %v1220, 0.0
    %v2728 = vsel %vm2712, %v1219, 0.0
    %v2729 = vsel %vm2713, %v1218, 0.0
    %v2730 = vsel %vm2714, %v1217, 0.0
    %v2731 = vsel %vm2715, %v1232, 0.0
    %v2732 = vpack.c.bf16 %v2717, %v2716
    %v2733 = vpack.c.bf16 %v2719, %v2718
    %v2734 = vpack.c.bf16 %v2721, %v2720
    %v2735 = vpack.c.bf16 %v2723, %v2722
    %v2736 = vpack.c.bf16 %v2725, %v2724
    %v2737 = vpack.c.bf16 %v2727, %v2726
    %v2738 = vpack.c.bf16 %v2729, %v2728
    %v2739 = vpack.c.bf16 %v2731, %v2730
    %v2740 = vld [vmem:[%s5 + $0xc0] sm:$0xff]
    %v2741 = vld [vmem:[%s5 + $0xc8] sm:$0xff]
    %v2742 = vld [vmem:[%s5 + $0xd0] sm:$0xff]
    %v2743 = vld [vmem:[%s5 + $0xd8] sm:$0xff]
    %v2744 = vpack.c.bf16 %v2741, %v2740
    %v2745 = vpack.c.bf16 %v2743, %v2742
    %v2747 = vsel %vm280, %v2732, 0
    %v2750 = vsel %vm280, %v2733, 0
    %v2753 = vsel %vm280, %v2734, 0
    %v2756 = vsel %vm280, %v2735, 0
    %v2759 = vsel %vm280, %v2736, 0
    %v2762 = vsel %vm280, %v2737, 0
    %v2765 = vsel %vm280, %v2738, 0
    %v2768 = vsel %vm280, %v2739, 0
    %2770 = vmatprep.subr.bf16.mxu0 0
    %2771 = vmatpush1.bf16.msra.mxu0 %v2744
    %2772 = vmatprep.subr.bf16.mxu0 0
    %2773 = vmatpush1.bf16.msra.mxu0 %v2745
    %2774 = vmatprep.subr.bf16.mxu0 0
    %2775 = vmatpush1.bf16.msra.mxu0 0
    %2776 = vmatprep.subr.bf16.mxu0 0
    %2777 = vmatpush1.bf16.msra.mxu0 0
    %2778 = vmatprep.subr.bf16.mxu0 0
    %2779 = vmatpush1.bf16.msra.mxu0 0
    %2780 = vmatprep.subr.bf16.mxu0 0
    %2781 = vmatpush1.bf16.msra.mxu0 0
    %2782 = vmatprep.subr.bf16.mxu0 0
    %2783 = vmatpush1.bf16.msra.mxu0 0
    %2784 = vmatprep.subr.bf16.mxu0 0
    %2785 = vmatpush1.bf16.msra.mxu0 0
    %2786 = vmatprep.subr.bf16.mxu0 0
    %2787 = vmatpush1.bf16.msra.mxu0 0
    %2788 = vmatprep.subr.bf16.mxu0 0
    %2789 = vmatpush1.bf16.msra.mxu0 0
    %2790 = vmatprep.subr.bf16.mxu0 0
    %2791 = vmatpush1.bf16.msra.mxu0 0
    %2792 = vmatprep.subr.bf16.mxu0 0
    %2793 = vmatpush1.bf16.msra.mxu0 0
    %2794 = vmatprep.subr.bf16.mxu0 0
    %2795 = vmatpush1.bf16.msra.mxu0 0
    %2796 = vmatprep.subr.bf16.mxu0 0
    %2797 = vmatpush1.bf16.msra.mxu0 0
    %2798 = vmatprep.subr.bf16.mxu0 0
    %2799 = vmatpush1.bf16.msra.mxu0 0
    %2800 = vmatprep.subr.bf16.mxu0 0
    %2801 = vmatpush1.bf16.msra.mxu0 0
    %2802 = vmatprep.mubr.bf16.mxu0 0
    %2803 = vmatmul.mubr.bf16.gmra.mrb[0].mxu0 %v2747
    %v2804 = vpop.f32.mrb[0].mxu0
    %v2805 = vadd.f32 0.0, %v2804
    %v2806 = vpop.f32.mrb[0].mxu0
    %v2807 = vpop.f32.mrb[0].mxu0
    %v2808 = vadd.f32 0.0, %v2807
    %v2809 = vpop.f32.mrb[0].mxu0
    %2810 = vmatprep.mubr.bf16.mxu0 0
    %2811 = vmatmul.mubr.bf16.gmra.mrb[0].mxu0 %v2750
    %v2812 = vpop.f32.mrb[0].mxu0
    %v2813 = vadd.f32 0.0, %v2812
    %v2814 = vpop.f32.mrb[0].mxu0
    %v2815 = vpop.f32.mrb[0].mxu0
    %v2816 = vadd.f32 0.0, %v2815
    %v2817 = vpop.f32.mrb[0].mxu0
    %2818 = vmatprep.mubr.bf16.mxu0 0
    %2819 = vmatmul.mubr.bf16.gmra.mrb[0].mxu0 %v2753
    %v2820 = vpop.f32.mrb[0].mxu0
    %v2821 = vadd.f32 0.0, %v2820
    %v2822 = vpop.f32.mrb[0].mxu0
    %v2823 = vpop.f32.mrb[0].mxu0
    %v2824 = vadd.f32 0.0, %v2823
    %v2825 = vpop.f32.mrb[0].mxu0
    %2826 = vmatprep.mubr.bf16.mxu0 0
    %2827 = vmatmul.mubr.bf16.gmra.mrb[0].mxu0 %v2756
    %v2828 = vpop.f32.mrb[0].mxu0
    %v2829 = vadd.f32 0.0, %v2828
    %v2830 = vpop.f32.mrb[0].mxu0
    %v2831 = vpop.f32.mrb[0].mxu0
    %v2832 = vadd.f32 0.0, %v2831
    %v2833 = vpop.f32.mrb[0].mxu0
    %2834 = vmatprep.mubr.bf16.mxu0 0
    %2835 = vmatmul.mubr.bf16.gmra.mrb[0].mxu0 %v2759
    %v2836 = vpop.f32.mrb[0].mxu0
    %v2837 = vadd.f32 0.0, %v2836
    %v2838 = vpop.f32.mrb[0].mxu0
    %v2839 = vpop.f32.mrb[0].mxu0
    %v2840 = vadd.f32 0.0, %v2839
    %v2841 = vpop.f32.mrb[0].mxu0
    %2842 = vmatprep.mubr.bf16.mxu0 0
    %2843 = vmatmul.mubr.bf16.gmra.mrb[0].mxu0 %v2762
    %v2844 = vpop.f32.mrb[0].mxu0
    %v2845 = vadd.f32 0.0, %v2844
    %v2846 = vpop.f32.mrb[0].mxu0
    %v2847 = vpop.f32.mrb[0].mxu0
    %v2848 = vadd.f32 0.0, %v2847
    %v2849 = vpop.f32.mrb[0].mxu0
    %2850 = vmatprep.mubr.bf16.mxu0 0
    %2851 = vmatmul.mubr.bf16.gmra.mrb[0].mxu0 %v2765
    %v2852 = vpop.f32.mrb[0].mxu0
    %v2853 = vadd.f32 0.0, %v2852
    %v2854 = vpop.f32.mrb[0].mxu0
    %v2855 = vpop.f32.mrb[0].mxu0
    %v2856 = vadd.f32 0.0, %v2855
    %v2857 = vpop.f32.mrb[0].mxu0
    %2858 = vmatprep.mubr.bf16.mxu0 0
    %2859 = vmatmul.mubr.bf16.gmra.mrb[0].mxu0 %v2768
    %v2860 = vpop.f32.mrb[0].mxu0
    %v2861 = vadd.f32 0.0, %v2860
    %v2862 = vpop.f32.mrb[0].mxu0
    %v2863 = vpop.f32.mrb[0].mxu0
    %v2864 = vadd.f32 0.0, %v2863
    %v2865 = vpop.f32.mrb[0].mxu0
    %2866 = vdwg.mxu0
    %v2867 = vadd.f32 %v2636, %v2805
    %v2868 = vadd.f32 %v2637, %v2808
    %v2869 = vadd.f32 %v2638, %v2813
    %v2870 = vadd.f32 %v2639, %v2816
    %v2871 = vadd.f32 %v2640, %v2821
    %v2872 = vadd.f32 %v2641, %v2824
    %v2873 = vadd.f32 %v2642, %v2829
    %v2874 = vadd.f32 %v2643, %v2832
    %v2875 = vadd.f32 %v2644, %v2837
    %v2876 = vadd.f32 %v2645, %v2840
    %v2877 = vadd.f32 %v2646, %v2845
    %v2878 = vadd.f32 %v2647, %v2848
    %v2879 = vadd.f32 %v2648, %v2853
    %v2880 = vadd.f32 %v2649, %v2856
    %v2881 = vadd.f32 %v2650, %v2861
    %v2882 = vadd.f32 %v2651, %v2864
    %v2883 = vsel %vm2652, 1, 0
    %v2884 = vsel %vm2653, 1, 0
    %v2885 = vsel %vm2654, 1, 0
    %v2886 = vsel %vm2655, 1, 0
    %v2887 = vsel %vm2656, 1, 0
    %v2888 = vsel %vm2657, 1, 0
    %v2889 = vsel %vm2658, 1, 0
    %v2890 = vsel %vm2659, 1, 0
    %v2891 = vsel %vm2660, 1, 0
    %v2892 = vsel %vm2661, 1, 0
    %v2893 = vsel %vm2662, 1, 0
    %v2894 = vsel %vm2663, 1, 0
    %v2895 = vsel %vm2664, 1, 0
    %v2896 = vsel %vm2665, 1, 0
    %v2897 = vsel %vm2666, 1, 0
    %v2898 = vsel %vm2667, 1, 0
    %vm2899 = vcmp.eq.s32.totalorder %v2883, 1
    %vm2900 = vcmp.eq.s32.totalorder %v2884, 1
    %vm2901 = vcmp.eq.s32.totalorder %v2885, 1
    %vm2902 = vcmp.eq.s32.totalorder %v2886, 1
    %vm2903 = vcmp.eq.s32.totalorder %v2887, 1
    %vm2904 = vcmp.eq.s32.totalorder %v2888, 1
    %vm2905 = vcmp.eq.s32.totalorder %v2889, 1
    %vm2906 = vcmp.eq.s32.totalorder %v2890, 1
    %vm2907 = vcmp.eq.s32.totalorder %v2891, 1
    %vm2908 = vcmp.eq.s32.totalorder %v2892, 1
    %vm2909 = vcmp.eq.s32.totalorder %v2893, 1
    %vm2910 = vcmp.eq.s32.totalorder %v2894, 1
    %vm2911 = vcmp.eq.s32.totalorder %v2895, 1
    %vm2912 = vcmp.eq.s32.totalorder %v2896, 1
    %vm2913 = vcmp.eq.s32.totalorder %v2897, 1
    %vm2914 = vcmp.eq.s32.totalorder %v2898, 1
    %v2915 = vsel %vm2899, %v1083, 0.0
    %v2916 = vsel %vm2900, %v1084, 0.0
    %v2917 = vsel %vm2901, %v1085, 0.0
    %v2918 = vsel %vm2902, %v1086, 0.0
    %v2919 = vsel %vm2903, %v1087, 0.0
    %v2920 = vsel %vm2904, %v1088, 0.0
    %v2921 = vsel %vm2905, %v1089, 0.0
    %v2922 = vsel %vm2906, %v1192, 0.0
    %v2923 = vsel %vm2907, %v1193, 0.0
    %v2924 = vsel %vm2908, %v1194, 0.0
    %v2925 = vsel %vm2909, %v1195, 0.0
    %v2926 = vsel %vm2910, %v1196, 0.0
    %v2927 = vsel %vm2911, %v1197, 0.0
    %v2928 = vsel %vm2912, %v1198, 0.0
    %v2929 = vsel %vm2913, %v1199, 0.0
    %v2930 = vsel %vm2914, %v1082, 0.0
    %v2931 = vpack.c.bf16 %v2916, %v2915
    %v2932 = vpack.c.bf16 %v2918, %v2917
    %v2933 = vpack.c.bf16 %v2920, %v2919
    %v2934 = vpack.c.bf16 %v2922, %v2921
    %v2935 = vpack.c.bf16 %v2924, %v2923
    %v2936 = vpack.c.bf16 %v2926, %v2925
    %v2937 = vpack.c.bf16 %v2928, %v2927
    %v2938 = vpack.c.bf16 %v2930, %v2929
    %v2939 = vld [vmem:[%s5 + $0xe0] sm:$0xff]
    %v2940 = vld [vmem:[%s5 + $0xe8] sm:$0xff]
    %v2941 = vld [vmem:[%s5 + $0xf0] sm:$0xff]
    %v2942 = vld [vmem:[%s5 + $0xf8] sm:$0xff]
    %v2943 = vpack.c.bf16 %v2940, %v2939
    %v2944 = vpack.c.bf16 %v2942, %v2941
    %v2946 = vsel %vm280, %v2931, 0
    %v2949 = vsel %vm280, %v2932, 0
    %v2952 = vsel %vm280, %v2933, 0
    %v2955 = vsel %vm280, %v2934, 0
    %v2958 = vsel %vm280, %v2935, 0
    %v2961 = vsel %vm280, %v2936, 0
    %v2964 = vsel %vm280, %v2937, 0
    %v2967 = vsel %vm280, %v2938, 0
    %2969 = vmatprep.subr.bf16.mxu0 0
    %2970 = vmatpush1.bf16.msra.mxu0 %v2943
    %2971 = vmatprep.subr.bf16.mxu0 0
    %2972 = vmatpush1.bf16.msra.mxu0 %v2944
    %2973 = vmatprep.subr.bf16.mxu0 0
    %2974 = vmatpush1.bf16.msra.mxu0 0
    %2975 = vmatprep.subr.bf16.mxu0 0
    %2976 = vmatpush1.bf16.msra.mxu0 0
    %2977 = vmatprep.subr.bf16.mxu0 0
    %2978 = vmatpush1.bf16.msra.mxu0 0
    %2979 = vmatprep.subr.bf16.mxu0 0
    %2980 = vmatpush1.bf16.msra.mxu0 0
    %2981 = vmatprep.subr.bf16.mxu0 0
    %2982 = vmatpush1.bf16.msra.mxu0 0
    %2983 = vmatprep.subr.bf16.mxu0 0
    %2984 = vmatpush1.bf16.msra.mxu0 0
    %2985 = vmatprep.subr.bf16.mxu0 0
    %2986 = vmatpush1.bf16.msra.mxu0 0
    %2987 = vmatprep.subr.bf16.mxu0 0
    %2988 = vmatpush1.bf16.msra.mxu0 0
    %2989 = vmatprep.subr.bf16.mxu0 0
    %2990 = vmatpush1.bf16.msra.mxu0 0
    %2991 = vmatprep.subr.bf16.mxu0 0
    %2992 = vmatpush1.bf16.msra.mxu0 0
    %2993 = vmatprep.subr.bf16.mxu0 0
    %2994 = vmatpush1.bf16.msra.mxu0 0
    %2995 = vmatprep.subr.bf16.mxu0 0
    %2996 = vmatpush1.bf16.msra.mxu0 0
    %2997 = vmatprep.subr.bf16.mxu0 0
    %2998 = vmatpush1.bf16.msra.mxu0 0
    %2999 = vmatprep.subr.bf16.mxu0 0
    %3000 = vmatpush1.bf16.msra.mxu0 0
    %3001 = vmatprep.mubr.bf16.mxu0 0
    %3002 = vmatmul.mubr.bf16.gmra.mrb[0].mxu0 %v2946
    %v3003 = vpop.f32.mrb[0].mxu0
    %v3004 = vadd.f32 0.0, %v3003
    %v3005 = vpop.f32.mrb[0].mxu0
    %v3006 = vpop.f32.mrb[0].mxu0
    %v3007 = vadd.f32 0.0, %v3006
    %v3008 = vpop.f32.mrb[0].mxu0
    %3009 = vmatprep.mubr.bf16.mxu0 0
    %3010 = vmatmul.mubr.bf16.gmra.mrb[0].mxu0 %v2949
    %v3011 = vpop.f32.mrb[0].mxu0
    %v3012 = vadd.f32 0.0, %v3011
    %v3013 = vpop.f32.mrb[0].mxu0
    %v3014 = vpop.f32.mrb[0].mxu0
    %v3015 = vadd.f32 0.0, %v3014
    %v3016 = vpop.f32.mrb[0].mxu0
    %3017 = vmatprep.mubr.bf16.mxu0 0
    %3018 = vmatmul.mubr.bf16.gmra.mrb[0].mxu0 %v2952
    %v3019 = vpop.f32.mrb[0].mxu0
    %v3020 = vadd.f32 0.0, %v3019
    %v3021 = vpop.f32.mrb[0].mxu0
    %v3022 = vpop.f32.mrb[0].mxu0
    %v3023 = vadd.f32 0.0, %v3022
    %v3024 = vpop.f32.mrb[0].mxu0
    %3025 = vmatprep.mubr.bf16.mxu0 0
    %3026 = vmatmul.mubr.bf16.gmra.mrb[0].mxu0 %v2955
    %v3027 = vpop.f32.mrb[0].mxu0
    %v3028 = vadd.f32 0.0, %v3027
    %v3029 = vpop.f32.mrb[0].mxu0
    %v3030 = vpop.f32.mrb[0].mxu0
    %v3031 = vadd.f32 0.0, %v3030
    %v3032 = vpop.f32.mrb[0].mxu0
    %3033 = vmatprep.mubr.bf16.mxu0 0
    %3034 = vmatmul.mubr.bf16.gmra.mrb[0].mxu0 %v2958
    %v3035 = vpop.f32.mrb[0].mxu0
    %v3036 = vadd.f32 0.0, %v3035
    %v3037 = vpop.f32.mrb[0].mxu0
    %v3038 = vpop.f32.mrb[0].mxu0
    %v3039 = vadd.f32 0.0, %v3038
    %v3040 = vpop.f32.mrb[0].mxu0
    %3041 = vmatprep.mubr.bf16.mxu0 0
    %3042 = vmatmul.mubr.bf16.gmra.mrb[0].mxu0 %v2961
    %v3043 = vpop.f32.mrb[0].mxu0
    %v3044 = vadd.f32 0.0, %v3043
    %v3045 = vpop.f32.mrb[0].mxu0
    %v3046 = vpop.f32.mrb[0].mxu0
    %v3047 = vadd.f32 0.0, %v3046
    %v3048 = vpop.f32.mrb[0].mxu0
    %3049 = vmatprep.mubr.bf16.mxu0 0
    %3050 = vmatmul.mubr.bf16.gmra.mrb[0].mxu0 %v2964
    %v3051 = vpop.f32.mrb[0].mxu0
    %v3052 = vadd.f32 0.0, %v3051
    %v3053 = vpop.f32.mrb[0].mxu0
    %v3054 = vpop.f32.mrb[0].mxu0
    %v3055 = vadd.f32 0.0, %v3054
    %v3056 = vpop.f32.mrb[0].mxu0
    %3057 = vmatprep.mubr.bf16.mxu0 0
    %3058 = vmatmul.mubr.bf16.gmra.mrb[0].mxu0 %v2967
    %v3059 = vpop.f32.mrb[0].mxu0
    %v3060 = vadd.f32 0.0, %v3059
    %v3061 = vpop.f32.mrb[0].mxu0
    %v3062 = vpop.f32.mrb[0].mxu0
    %v3063 = vadd.f32 0.0, %v3062
    %v3064 = vpop.f32.mrb[0].mxu0
    %3065 = vdwg.mxu0
    %v3066 = vadd.f32 %v2867, %v3004
    %v3067 = vadd.f32 %v2868, %v3007
    %v3068 = vadd.f32 %v2869, %v3012
    %v3069 = vadd.f32 %v2870, %v3015
    %v3070 = vadd.f32 %v2871, %v3020
    %v3071 = vadd.f32 %v2872, %v3023
    %v3072 = vadd.f32 %v2873, %v3028
    %v3073 = vadd.f32 %v2874, %v3031
    %v3074 = vadd.f32 %v2875, %v3036
    %v3075 = vadd.f32 %v2876, %v3039
    %v3076 = vadd.f32 %v2877, %v3044
    %v3077 = vadd.f32 %v2878, %v3047
    %v3078 = vadd.f32 %v2879, %v3052
    %v3079 = vadd.f32 %v2880, %v3055
    %v3080 = vadd.f32 %v2881, %v3060
    %v3081 = vadd.f32 %v2882, %v3063
    %vm3082 = vmand %vm2652, %vm1872
    %vm3083 = vmand %vm2653, %vm1873
    %vm3084 = vmand %vm2654, %vm1874
    %vm3085 = vmand %vm2655, %vm1875
    %vm3086 = vmand %vm2656, %vm1876
    %vm3087 = vmand %vm2657, %vm1877
    %vm3088 = vmand %vm2658, %vm1878
    %vm3089 = vmand %vm2659, %vm1879
    %vm3090 = vmand %vm2660, %vm1880
    %vm3091 = vmand %vm2661, %vm1881
    %vm3092 = vmand %vm2662, %vm1882
    %vm3093 = vmand %vm2663, %vm1883
    %vm3094 = vmand %vm2664, %vm1884
    %vm3095 = vmand %vm2665, %vm1885
    %vm3096 = vmand %vm2666, %vm1886
    %vm3097 = vmand %vm2667, %vm1887
    %v3098 = vsel %vm3082, 1, 0
    %v3099 = vsel %vm3083, 1, 0
    %v3100 = vsel %vm3084, 1, 0
    %v3101 = vsel %vm3085, 1, 0
    %v3102 = vsel %vm3086, 1, 0
    %v3103 = vsel %vm3087, 1, 0
    %v3104 = vsel %vm3088, 1, 0
    %v3105 = vsel %vm3089, 1, 0
    %v3106 = vsel %vm3090, 1, 0
    %v3107 = vsel %vm3091, 1, 0
    %v3108 = vsel %vm3092, 1, 0
    %v3109 = vsel %vm3093, 1, 0
    %v3110 = vsel %vm3094, 1, 0
    %v3111 = vsel %vm3095, 1, 0
    %v3112 = vsel %vm3096, 1, 0
    %v3113 = vsel %vm3097, 1, 0
    %vm3114 = vcmp.eq.s32.totalorder %v3098, 1
    %vm3115 = vcmp.eq.s32.totalorder %v3099, 1
    %vm3116 = vcmp.eq.s32.totalorder %v3100, 1
    %vm3117 = vcmp.eq.s32.totalorder %v3101, 1
    %vm3118 = vcmp.eq.s32.totalorder %v3102, 1
    %vm3119 = vcmp.eq.s32.totalorder %v3103, 1
    %vm3120 = vcmp.eq.s32.totalorder %v3104, 1
    %vm3121 = vcmp.eq.s32.totalorder %v3105, 1
    %vm3122 = vcmp.eq.s32.totalorder %v3106, 1
    %vm3123 = vcmp.eq.s32.totalorder %v3107, 1
    %vm3124 = vcmp.eq.s32.totalorder %v3108, 1
    %vm3125 = vcmp.eq.s32.totalorder %v3109, 1
    %vm3126 = vcmp.eq.s32.totalorder %v3110, 1
    %vm3127 = vcmp.eq.s32.totalorder %v3111, 1
    %vm3128 = vcmp.eq.s32.totalorder %v3112, 1
    %vm3129 = vcmp.eq.s32.totalorder %v3113, 1
    %v3130 = vsel %vm3114, %v1869, 0.0
    %v3131 = vsel %vm3115, %v1868, 0.0
    %v3132 = vsel %vm3116, %v1867, 0.0
    %v3133 = vsel %vm3117, %v1866, 0.0
    %v3134 = vsel %vm3118, %v1865, 0.0
    %v3135 = vsel %vm3119, %v1864, 0.0
    %v3136 = vsel %vm3120, %v1863, 0.0
    %v3137 = vsel %vm3121, %v1862, 0.0
    %v3138 = vsel %vm3122, %v1861, 0.0
    %v3139 = vsel %vm3123, %v1860, 0.0
    %v3140 = vsel %vm3124, %v1859, 0.0
    %v3141 = vsel %vm3125, %v1858, 0.0
    %v3142 = vsel %vm3126, %v1857, 0.0
    %v3143 = vsel %vm3127, %v1856, 0.0
    %v3144 = vsel %vm3128, %v1871, 0.0
    %v3145 = vsel %vm3129, %v1870, 0.0
    %v3146 = vpack.c.bf16 %v3131, %v3130
    %v3147 = vpack.c.bf16 %v3133, %v3132
    %v3148 = vpack.c.bf16 %v3135, %v3134
    %v3149 = vpack.c.bf16 %v3137, %v3136
    %v3150 = vpack.c.bf16 %v3139, %v3138
    %v3151 = vpack.c.bf16 %v3141, %v3140
    %v3152 = vpack.c.bf16 %v3143, %v3142
    %v3153 = vpack.c.bf16 %v3145, %v3144
    %v3154 = vld [vmem:[%s5 + $0x100] sm:$0xff]
    %v3155 = vld [vmem:[%s5 + $0x108] sm:$0xff]
    %v3156 = vld [vmem:[%s5 + $0x110] sm:$0xff]
    %v3157 = vld [vmem:[%s5 + $0x118] sm:$0xff]
    %v3158 = vpack.c.bf16 %v3155, %v3154
    %v3159 = vpack.c.bf16 %v3157, %v3156
    %v3161 = vsel %vm280, %v3146, 0
    %v3164 = vsel %vm280, %v3147, 0
    %v3167 = vsel %vm280, %v3148, 0
    %v3170 = vsel %vm280, %v3149, 0
    %v3173 = vsel %vm280, %v3150, 0
    %v3176 = vsel %vm280, %v3151, 0
    %v3179 = vsel %vm280, %v3152, 0
    %v3182 = vsel %vm280, %v3153, 0
    %3184 = vmatprep.subr.bf16.mxu0 0
    %3185 = vmatpush1.bf16.msra.mxu0 %v3158
    %3186 = vmatprep.subr.bf16.mxu0 0
    %3187 = vmatpush1.bf16.msra.mxu0 %v3159
    %3188 = vmatprep.subr.bf16.mxu0 0
    %3189 = vmatpush1.bf16.msra.mxu0 0
    %3190 = vmatprep.subr.bf16.mxu0 0
    %3191 = vmatpush1.bf16.msra.mxu0 0
    %3192 = vmatprep.subr.bf16.mxu0 0
    %3193 = vmatpush1.bf16.msra.mxu0 0
    %3194 = vmatprep.subr.bf16.mxu0 0
    %3195 = vmatpush1.bf16.msra.mxu0 0
    %3196 = vmatprep.subr.bf16.mxu0 0
    %3197 = vmatpush1.bf16.msra.mxu0 0
    %3198 = vmatprep.subr.bf16.mxu0 0
    %3199 = vmatpush1.bf16.msra.mxu0 0
    %3200 = vmatprep.subr.bf16.mxu0 0
    %3201 = vmatpush1.bf16.msra.mxu0 0
    %3202 = vmatprep.subr.bf16.mxu0 0
    %3203 = vmatpush1.bf16.msra.mxu0 0
    %3204 = vmatprep.subr.bf16.mxu0 0
    %3205 = vmatpush1.bf16.msra.mxu0 0
    %3206 = vmatprep.subr.bf16.mxu0 0
    %3207 = vmatpush1.bf16.msra.mxu0 0
    %3208 = vmatprep.subr.bf16.mxu0 0
    %3209 = vmatpush1.bf16.msra.mxu0 0
    %3210 = vmatprep.subr.bf16.mxu0 0
    %3211 = vmatpush1.bf16.msra.mxu0 0
    %3212 = vmatprep.subr.bf16.mxu0 0
    %3213 = vmatpush1.bf16.msra.mxu0 0
    %3214 = vmatprep.subr.bf16.mxu0 0
    %3215 = vmatpush1.bf16.msra.mxu0 0
    %3216 = vmatprep.mubr.bf16.mxu0 0
    %3217 = vmatmul.mubr.bf16.gmra.mrb[0].mxu0 %v3161
    %v3218 = vpop.f32.mrb[0].mxu0
    %v3219 = vadd.f32 0.0, %v3218
    %v3220 = vpop.f32.mrb[0].mxu0
    %v3221 = vpop.f32.mrb[0].mxu0
    %v3222 = vadd.f32 0.0, %v3221
    %v3223 = vpop.f32.mrb[0].mxu0
    %3224 = vmatprep.mubr.bf16.mxu0 0
    %3225 = vmatmul.mubr.bf16.gmra.mrb[0].mxu0 %v3164
    %v3226 = vpop.f32.mrb[0].mxu0
    %v3227 = vadd.f32 0.0, %v3226
    %v3228 = vpop.f32.mrb[0].mxu0
    %v3229 = vpop.f32.mrb[0].mxu0
    %v3230 = vadd.f32 0.0, %v3229
    %v3231 = vpop.f32.mrb[0].mxu0
    %3232 = vmatprep.mubr.bf16.mxu0 0
    %3233 = vmatmul.mubr.bf16.gmra.mrb[0].mxu0 %v3167
    %v3234 = vpop.f32.mrb[0].mxu0
    %v3235 = vadd.f32 0.0, %v3234
    %v3236 = vpop.f32.mrb[0].mxu0
    %v3237 = vpop.f32.mrb[0].mxu0
    %v3238 = vadd.f32 0.0, %v3237
    %v3239 = vpop.f32.mrb[0].mxu0
    %3240 = vmatprep.mubr.bf16.mxu0 0
    %3241 = vmatmul.mubr.bf16.gmra.mrb[0].mxu0 %v3170
    %v3242 = vpop.f32.mrb[0].mxu0
    %v3243 = vadd.f32 0.0, %v3242
    %v3244 = vpop.f32.mrb[0].mxu0
    %v3245 = vpop.f32.mrb[0].mxu0
    %v3246 = vadd.f32 0.0, %v3245
    %v3247 = vpop.f32.mrb[0].mxu0
    %3248 = vmatprep.mubr.bf16.mxu0 0
    %3249 = vmatmul.mubr.bf16.gmra.mrb[0].mxu0 %v3173
    %v3250 = vpop.f32.mrb[0].mxu0
    %v3251 = vadd.f32 0.0, %v3250
    %v3252 = vpop.f32.mrb[0].mxu0
    %v3253 = vpop.f32.mrb[0].mxu0
    %v3254 = vadd.f32 0.0, %v3253
    %v3255 = vpop.f32.mrb[0].mxu0
    %3256 = vmatprep.mubr.bf16.mxu0 0
    %3257 = vmatmul.mubr.bf16.gmra.mrb[0].mxu0 %v3176
    %v3258 = vpop.f32.mrb[0].mxu0
    %v3259 = vadd.f32 0.0, %v3258
    %v3260 = vpop.f32.mrb[0].mxu0
    %v3261 = vpop.f32.mrb[0].mxu0
    %v3262 = vadd.f32 0.0, %v3261
    %v3263 = vpop.f32.mrb[0].mxu0
    %3264 = vmatprep.mubr.bf16.mxu0 0
    %3265 = vmatmul.mubr.bf16.gmra.mrb[0].mxu0 %v3179
    %v3266 = vpop.f32.mrb[0].mxu0
    %v3267 = vadd.f32 0.0, %v3266
    %v3268 = vpop.f32.mrb[0].mxu0
    %v3269 = vpop.f32.mrb[0].mxu0
    %v3270 = vadd.f32 0.0, %v3269
    %v3271 = vpop.f32.mrb[0].mxu0
    %3272 = vmatprep.mubr.bf16.mxu0 0
    %3273 = vmatmul.mubr.bf16.gmra.mrb[0].mxu0 %v3182
    %v3274 = vpop.f32.mrb[0].mxu0
    %v3275 = vadd.f32 0.0, %v3274
    %v3276 = vpop.f32.mrb[0].mxu0
    %v3277 = vpop.f32.mrb[0].mxu0
    %v3278 = vadd.f32 0.0, %v3277
    %v3279 = vpop.f32.mrb[0].mxu0
    %3280 = vdwg.mxu0
    %v3281 = vadd.f32 %v3066, %v3219
    %v3282 = vadd.f32 %v3067, %v3222
    %v3283 = vadd.f32 %v3068, %v3227
    %v3284 = vadd.f32 %v3069, %v3230
    %v3285 = vadd.f32 %v3070, %v3235
    %v3286 = vadd.f32 %v3071, %v3238
    %v3287 = vadd.f32 %v3072, %v3243
    %v3288 = vadd.f32 %v3073, %v3246
    %v3289 = vadd.f32 %v3074, %v3251
    %v3290 = vadd.f32 %v3075, %v3254
    %v3291 = vadd.f32 %v3076, %v3259
    %v3292 = vadd.f32 %v3077, %v3262
    %v3293 = vadd.f32 %v3078, %v3267
    %v3294 = vadd.f32 %v3079, %v3270
    %v3295 = vadd.f32 %v3080, %v3275
    %v3296 = vadd.f32 %v3081, %v3278
    %v3297 = vld [vmem:[%s5 + $0x120] sm:$0x1]
    %v3298 = vlaneseq
    %v3299 = vshrl.u32 %v3298, 7
    %v3300 = vsub.s32 0, %v3299
    %v3301 = vrot.slane %v3297, %v3300
    %v3302 = vadd.f32 %v3281, %v3301
    %v3303 = vadd.f32 %v3282, %v3301
    %v3304 = vadd.f32 %v3283, %v3301
    %v3305 = vadd.f32 %v3284, %v3301
    %v3306 = vadd.f32 %v3285, %v3301
    %v3307 = vadd.f32 %v3286, %v3301
    %v3308 = vadd.f32 %v3287, %v3301
    %v3309 = vadd.f32 %v3288, %v3301
    %v3310 = vadd.f32 %v3289, %v3301
    %v3311 = vadd.f32 %v3290, %v3301
    %v3312 = vadd.f32 %v3291, %v3301
    %v3313 = vadd.f32 %v3292, %v3301
    %v3314 = vadd.f32 %v3293, %v3301
    %v3315 = vadd.f32 %v3294, %v3301
    %v3316 = vadd.f32 %v3295, %v3301
    %v3317 = vadd.f32 %v3296, %v3301
    %v3318 = vmax.f32 %v3302, 0.0
    %v3319 = vmax.f32 %v3303, 0.0
    %v3320 = vmax.f32 %v3304, 0.0
    %v3321 = vmax.f32 %v3305, 0.0
    %v3322 = vmax.f32 %v3306, 0.0
    %v3323 = vmax.f32 %v3307, 0.0
    %v3324 = vmax.f32 %v3308, 0.0
    %v3325 = vmax.f32 %v3309, 0.0
    %v3326 = vmax.f32 %v3310, 0.0
    %v3327 = vmax.f32 %v3311, 0.0
    %v3328 = vmax.f32 %v3312, 0.0
    %v3329 = vmax.f32 %v3313, 0.0
    %v3330 = vmax.f32 %v3314, 0.0
    %v3331 = vmax.f32 %v3315, 0.0
    %v3332 = vmax.f32 %v3316, 0.0
    %v3333 = vmax.f32 %v3317, 0.0
    %v3334 = vmax.f32 %v553, 0.0
    %v3335 = vmax.f32 %v597, 0.0
    %v3336 = vmin.f32 %v3334, 1.0
    %v3337 = vmin.f32 %v3335, 1.0
    %v3338 = vsub.f32 1.0, %v3336
    %v3339 = vsub.f32 1.0, %v3337
    %v3340 = vsel %vm280, %v3318, 0.0
    %v3341 = vsel %vm280, %v3319, 0.0
    %v3342 = vadd.f32 %v3340, %v3341
    %v3343 = vsel %vm280, %v3320, 0.0
    %v3344 = vadd.f32 %v3342, %v3343
    %v3345 = vsel %vm280, %v3321, 0.0
    %v3346 = vadd.f32 %v3344, %v3345
    %v3347 = vsel %vm280, %v3322, 0.0
    %v3348 = vadd.f32 %v3346, %v3347
    %v3349 = vsel %vm280, %v3323, 0.0
    %v3350 = vadd.f32 %v3348, %v3349
    %v3351 = vsel %vm280, %v3324, 0.0
    %v3352 = vadd.f32 %v3350, %v3351
    %v3353 = vsel %vm280, %v3325, 0.0
    %v3354 = vadd.f32 %v3352, %v3353
    %v3355 = vrot.slane %v3354, 4
    %v3356 = vadd.f32 %v3354, %v3355
    %v3357 = vrot.slane %v3356, 2
    %v3358 = vadd.f32 %v3356, %v3357
    %v3359 = vrot.slane %v3358, 1
    %v3360 = vadd.f32 %v3358, %v3359
    %v3361 = vmul.f32 %v3360, %v302
    %v3362 = vsel %vm280, %v3326, 0.0
    %v3363 = vsel %vm280, %v3327, 0.0
    %v3364 = vadd.f32 %v3362, %v3363
    %v3365 = vsel %vm280, %v3328, 0.0
    %v3366 = vadd.f32 %v3364, %v3365
    %v3367 = vsel %vm280, %v3329, 0.0
    %v3368 = vadd.f32 %v3366, %v3367
    %v3369 = vsel %vm280, %v3330, 0.0
    %v3370 = vadd.f32 %v3368, %v3369
    %v3371 = vsel %vm280, %v3331, 0.0
    %v3372 = vadd.f32 %v3370, %v3371
    %v3373 = vsel %vm280, %v3332, 0.0
    %v3374 = vadd.f32 %v3372, %v3373
    %v3375 = vsel %vm280, %v3333, 0.0
    %v3376 = vadd.f32 %v3374, %v3375
    %v3377 = vrot.slane %v3376, 4
    %v3378 = vadd.f32 %v3376, %v3377
    %v3379 = vrot.slane %v3378, 2
    %v3380 = vadd.f32 %v3378, %v3379
    %v3381 = vrot.slane %v3380, 1
    %v3382 = vadd.f32 %v3380, %v3381
    %v3383 = vmul.f32 %v3382, %v302
    %3385 = vset.pattern.permute.xlu0 0
    %3386 = vperm.xlu0 %3385, %v3338
    %v3387 = vpop.permute.xlu0 %3386
    %3390 = vset.pattern.permute.xlu0 0
    %3391 = vperm.xlu0 %3390, %v3339
    %v3392 = vpop.permute.xlu0 %3391
    %v3394 = vmul.f32 %v27, %v3387
    %v3395 = vmul.f32 %v28, %v3392
    %3398 = vrot.lane.b32.xlu0 %v3394, 32
    %v3399 = vpop.permute.xlu0 %3398
    %3400 = vrot.lane.b32.xlu0 %v3395, 32
    %v3401 = vpop.permute.xlu0 %3400
    %v3404 = vsel %vm280, %v3361, %v3399
    %v3405 = vsel %vm280, %v3383, %v3401
    %s3406 = scalar_lea.vmem %s4, 184
    %v3407 = vld [vmem:[%s3406] sm:$0xff]
    %v3408 = vld [vmem:[%s3406 + $0x8] sm:$0xff]
    %v3409 = vld [vmem:[%s3406 + $0x10] sm:$0xff]
    %v3410 = vld [vmem:[%s3406 + $0x18] sm:$0xff]
    %v3411 = vld [vmem:[%s3406 + $0x20] sm:$0xff]
    %v3412 = vld [vmem:[%s3406 + $0x28] sm:$0xff]
    %v3413 = vld [vmem:[%s3406 + $0x30] sm:$0xff]
    %v3414 = vld [vmem:[%s3406 + $0x38] sm:$0xff]
    %v3415 = vld [vmem:[%s3406 + $0x40] sm:$0x1]
    %v3416 = vlaneseq
    %v3417 = vshrl.u32 %v3416, 7
    %v3418 = vsub.s32 0, %v3417
    %v3419 = vrot.slane %v3415, %v3418
    %v3421 = vsel %vm349, %v3404, 0
    %v3424 = vsel %vm349, %v3405, 0
    %3426 = vmatprep.subr.mxu0 0.0
    %3427 = vmatpush1.msra.mxu0 %v3407
    %3428 = vmatprep.subr.mxu0 0.0
    %3429 = vmatpush1.msra.mxu0 %v3408
    %3430 = vmatprep.subr.mxu0 0.0
    %3431 = vmatpush1.msra.mxu0 %v3409
    %3432 = vmatprep.subr.mxu0 0.0
    %3433 = vmatpush1.msra.mxu0 %v3410
    %3434 = vmatprep.subr.mxu0 0.0
    %3435 = vmatpush1.msra.mxu0 %v3411
    %3436 = vmatprep.subr.mxu0 0.0
    %3437 = vmatpush1.msra.mxu0 %v3412
    %3438 = vmatprep.subr.mxu0 0.0
    %3439 = vmatpush1.msra.mxu0 %v3413
    %3440 = vmatprep.subr.mxu0 0.0
    %3441 = vmatpush1.msra.mxu0 %v3414
    %3442 = vmatprep.subr.mxu0 0.0
    %3443 = vmatpush1.msra.mxu0 0.0
    %3444 = vmatprep.subr.mxu0 0.0
    %3445 = vmatpush1.msra.mxu0 0.0
    %3446 = vmatprep.subr.mxu0 0.0
    %3447 = vmatpush1.msra.mxu0 0.0
    %3448 = vmatprep.subr.mxu0 0.0
    %3449 = vmatpush1.msra.mxu0 0.0
    %3450 = vmatprep.subr.mxu0 0.0
    %3451 = vmatpush1.msra.mxu0 0.0
    %3452 = vmatprep.subr.mxu0 0.0
    %3453 = vmatpush1.msra.mxu0 0.0
    %3454 = vmatprep.subr.mxu0 0.0
    %3455 = vmatpush1.msra.mxu0 0.0
    %3456 = vmatprep.subr.mxu0 0.0
    %3457 = vmatpush1.msra.mxu0 0.0
    %3458 = vmatprep.subr.mxu0 0.0
    %3459 = vmatpush1.msra.mxu0 0.0
    %3460 = vmatprep.subr.mxu0 0.0
    %3461 = vmatpush1.msra.mxu0 0.0
    %3462 = vmatprep.subr.mxu0 0.0
    %3463 = vmatpush1.msra.mxu0 0.0
    %3464 = vmatprep.subr.mxu0 0.0
    %3465 = vmatpush1.msra.mxu0 0.0
    %3466 = vmatprep.subr.mxu0 0.0
    %3467 = vmatpush1.msra.mxu0 0.0
    %3468 = vmatprep.subr.mxu0 0.0
    %3469 = vmatpush1.msra.mxu0 0.0
    %3470 = vmatprep.subr.mxu0 0.0
    %3471 = vmatpush1.msra.mxu0 0.0
    %3472 = vmatprep.subr.mxu0 0.0
    %3473 = vmatpush1.msra.mxu0 0.0
    %3474 = vmatprep.subr.mxu0 0.0
    %3475 = vmatpush1.msra.mxu0 0.0
    %3476 = vmatprep.subr.mxu0 0.0
    %3477 = vmatpush1.msra.mxu0 0.0
    %3478 = vmatprep.subr.mxu0 0.0
    %3479 = vmatpush1.msra.mxu0 0.0
    %3480 = vmatprep.subr.mxu0 0.0
    %3481 = vmatpush1.msra.mxu0 0.0
    %3482 = vmatprep.subr.mxu0 0.0
    %3483 = vmatpush1.msra.mxu0 0.0
    %3484 = vmatprep.subr.mxu0 0.0
    %3485 = vmatpush1.msra.mxu0 0.0
    %3486 = vmatprep.subr.mxu0 0.0
    %3487 = vmatpush1.msra.mxu0 0.0
    %3488 = vmatprep.subr.mxu0 0.0
    %3489 = vmatpush1.msra.mxu0 0.0
    %3490 = vmatprep.mubr.f32.mxu0 0.0
    %3491 = vmatmul.mubr.f32.gmra.mrb[0].mxu0 %v3421
    %v3492 = vpop.f32.mrb[0].mxu0
    %v3493 = vadd.f32 %v3419, %v3492
    %v3494 = vpop.f32.mrb[0].mxu0
    %3495 = vmatprep.mubr.f32.mxu0 0.0
    %3496 = vmatmul.mubr.f32.gmra.mrb[0].mxu0 %v3424
    %v3497 = vpop.f32.mrb[0].mxu0
    %v3498 = vadd.f32 %v3419, %v3497
    %v3499 = vpop.f32.mrb[0].mxu0
    %3500 = vdwg.mxu0
    %v3501 = vtanh.pop %v3493
    %v3502 = vtanh.pop %v3498
    %v3503 = vld [vmem:[%s3406 + $0x48] sm:$0xff]
    %v3504 = vld [vmem:[%s3406 + $0x50] sm:$0xff]
    %v3505 = vld [vmem:[%s3406 + $0x58] sm:$0x1]
    %v3506 = vlaneseq
    %v3507 = vshrl.u32 %v3506, 7
    %v3508 = vsub.s32 0, %v3507
    %v3509 = vrot.slane %v3505, %v3508
    %v3511 = vsel %vm440, %v3501, 0
    %v3514 = vsel %vm440, %v3502, 0
    %3516 = vmatprep.subr.mxu0 0.0
    %3517 = vmatpush1.msra.mxu0 %v3503
    %3518 = vmatprep.subr.mxu0 0.0
    %3519 = vmatpush1.msra.mxu0 %v3504
    %3520 = vmatprep.subr.mxu0 0.0
    %3521 = vmatpush1.msra.mxu0 0.0
    %3522 = vmatprep.subr.mxu0 0.0
    %3523 = vmatpush1.msra.mxu0 0.0
    %3524 = vmatprep.subr.mxu0 0.0
    %3525 = vmatpush1.msra.mxu0 0.0
    %3526 = vmatprep.subr.mxu0 0.0
    %3527 = vmatpush1.msra.mxu0 0.0
    %3528 = vmatprep.subr.mxu0 0.0
    %3529 = vmatpush1.msra.mxu0 0.0
    %3530 = vmatprep.subr.mxu0 0.0
    %3531 = vmatpush1.msra.mxu0 0.0
    %3532 = vmatprep.subr.mxu0 0.0
    %3533 = vmatpush1.msra.mxu0 0.0
    %3534 = vmatprep.subr.mxu0 0.0
    %3535 = vmatpush1.msra.mxu0 0.0
    %3536 = vmatprep.subr.mxu0 0.0
    %3537 = vmatpush1.msra.mxu0 0.0
    %3538 = vmatprep.subr.mxu0 0.0
    %3539 = vmatpush1.msra.mxu0 0.0
    %3540 = vmatprep.subr.mxu0 0.0
    %3541 = vmatpush1.msra.mxu0 0.0
    %3542 = vmatprep.subr.mxu0 0.0
    %3543 = vmatpush1.msra.mxu0 0.0
    %3544 = vmatprep.subr.mxu0 0.0
    %3545 = vmatpush1.msra.mxu0 0.0
    %3546 = vmatprep.subr.mxu0 0.0
    %3547 = vmatpush1.msra.mxu0 0.0
    %3548 = vmatprep.subr.mxu0 0.0
    %3549 = vmatpush1.msra.mxu0 0.0
    %3550 = vmatprep.subr.mxu0 0.0
    %3551 = vmatpush1.msra.mxu0 0.0
    %3552 = vmatprep.subr.mxu0 0.0
    %3553 = vmatpush1.msra.mxu0 0.0
    %3554 = vmatprep.subr.mxu0 0.0
    %3555 = vmatpush1.msra.mxu0 0.0
    %3556 = vmatprep.subr.mxu0 0.0
    %3557 = vmatpush1.msra.mxu0 0.0
    %3558 = vmatprep.subr.mxu0 0.0
    %3559 = vmatpush1.msra.mxu0 0.0
    %3560 = vmatprep.subr.mxu0 0.0
    %3561 = vmatpush1.msra.mxu0 0.0
    %3562 = vmatprep.subr.mxu0 0.0
    %3563 = vmatpush1.msra.mxu0 0.0
    %3564 = vmatprep.subr.mxu0 0.0
    %3565 = vmatpush1.msra.mxu0 0.0
    %3566 = vmatprep.subr.mxu0 0.0
    %3567 = vmatpush1.msra.mxu0 0.0
    %3568 = vmatprep.subr.mxu0 0.0
    %3569 = vmatpush1.msra.mxu0 0.0
    %3570 = vmatprep.subr.mxu0 0.0
    %3571 = vmatpush1.msra.mxu0 0.0
    %3572 = vmatprep.subr.mxu0 0.0
    %3573 = vmatpush1.msra.mxu0 0.0
    %3574 = vmatprep.subr.mxu0 0.0
    %3575 = vmatpush1.msra.mxu0 0.0
    %3576 = vmatprep.subr.mxu0 0.0
    %3577 = vmatpush1.msra.mxu0 0.0
    %3578 = vmatprep.subr.mxu0 0.0
    %3579 = vmatpush1.msra.mxu0 0.0
    %3580 = vmatprep.mubr.f32.mxu0 0.0
    %3581 = vmatmul.mubr.f32.gmra.mrb[0].mxu0 %v3511
    %v3582 = vpop.f32.mrb[0].mxu0
    %v3583 = vadd.f32 %v3509, %v3582
    %v3584 = vpop.f32.mrb[0].mxu0
    %3585 = vmatprep.mubr.f32.mxu0 0.0
    %3586 = vmatmul.mubr.f32.gmra.mrb[0].mxu0 %v3514
    %v3587 = vpop.f32.mrb[0].mxu0
    %v3588 = vadd.f32 %v3509, %v3587
    %v3589 = vpop.f32.mrb[0].mxu0
    %3590 = vdwg.mxu0
    %v3591 = vmul.f32 %v3583, 10.0
    %v3592 = vsel %vm523, %v3591, -inf
    %v3593 = vrot.slane %v3592, 4
    %v3594 = vmax.f32 %v3592, %v3593
    %v3595 = vrot.slane %v3594, 2
    %v3596 = vmax.f32 %v3594, %v3595
    %v3597 = vrot.slane %v3596, 1
    %v3598 = vmax.f32 %v3596, %v3597
    %v3599 = vsub.f32 %v3591, %v3598
    %v3600 = vmul.f32 %v3599, 1.442695
    %v3601 = vpow.pop %v3600
    %v3602 = vsel %vm523, %v3601, 0.0
    %v3603 = vrot.slane %v3602, 4
    %v3604 = vadd.f32 %v3602, %v3603
    %v3605 = vrot.slane %v3604, 2
    %v3606 = vadd.f32 %v3604, %v3605
    %v3607 = vrot.slane %v3606, 1
    %v3608 = vadd.f32 %v3606, %v3607
    %v3609 = vrcp.pop %v3608
    %v3610 = vmul.f32 %v3601, %v3609
    %v3611 = vmul.f32 %v3610, %v29
    %v3612 = vsel %vm523, %v3611, 0.0
    %v3613 = vrot.slane %v3612, 4
    %v3614 = vadd.f32 %v3612, %v3613
    %v3615 = vrot.slane %v3614, 2
    %v3616 = vadd.f32 %v3614, %v3615
    %v3617 = vrot.slane %v3616, 1
    %v3618 = vadd.f32 %v3616, %v3617
    %v3619 = vadd.f32 %v3618, 1e-08
    %v3620 = vrcp.pop %v3619
    %v3621 = vmul.f32 %v3611, %v3620
    %3623 = vset.pattern.permute.xlu0 0
    %3624 = vperm.xlu0 %3623, %v3621
    %v3625 = vpop.permute.xlu0 %3624
    %v3627 = vmul.f32 %v27, %v3625
    %v3628 = vsel %vm280, %v3627, 0.0
    %v3629 = vrot.slane %v3628, 4
    %v3630 = vadd.f32 %v3628, %v3629
    %v3631 = vrot.slane %v3630, 2
    %v3632 = vadd.f32 %v3630, %v3631
    %v3633 = vrot.slane %v3632, 1
    %v3634 = vadd.f32 %v3632, %v3633
    %v3635 = vmul.f32 %v3588, 10.0
    %v3636 = vsel %vm523, %v3635, -inf
    %v3637 = vrot.slane %v3636, 4
    %v3638 = vmax.f32 %v3636, %v3637
    %v3639 = vrot.slane %v3638, 2
    %v3640 = vmax.f32 %v3638, %v3639
    %v3641 = vrot.slane %v3640, 1
    %v3642 = vmax.f32 %v3640, %v3641
    %v3643 = vsub.f32 %v3635, %v3642
    %v3644 = vmul.f32 %v3643, 1.442695
    %v3645 = vpow.pop %v3644
    %v3646 = vsel %vm523, %v3645, 0.0
    %v3647 = vrot.slane %v3646, 4
    %v3648 = vadd.f32 %v3646, %v3647
    %v3649 = vrot.slane %v3648, 2
    %v3650 = vadd.f32 %v3648, %v3649
    %v3651 = vrot.slane %v3650, 1
    %v3652 = vadd.f32 %v3650, %v3651
    %v3653 = vrcp.pop %v3652
    %v3654 = vmul.f32 %v3645, %v3653
    %v3655 = vmul.f32 %v3654, %v30
    %v3656 = vsel %vm523, %v3655, 0.0
    %v3657 = vrot.slane %v3656, 4
    %v3658 = vadd.f32 %v3656, %v3657
    %v3659 = vrot.slane %v3658, 2
    %v3660 = vadd.f32 %v3658, %v3659
    %v3661 = vrot.slane %v3660, 1
    %v3662 = vadd.f32 %v3660, %v3661
    %v3663 = vadd.f32 %v3662, 1e-08
    %v3664 = vrcp.pop %v3663
    %v3665 = vmul.f32 %v3655, %v3664
    %3667 = vset.pattern.permute.xlu0 0
    %3668 = vperm.xlu0 %3667, %v3665
    %v3669 = vpop.permute.xlu0 %3668
    %v3671 = vmul.f32 %v28, %v3669
    %v3672 = vsel %vm280, %v3671, 0.0
    %v3673 = vrot.slane %v3672, 4
    %v3674 = vadd.f32 %v3672, %v3673
    %v3675 = vrot.slane %v3674, 2
    %v3676 = vadd.f32 %v3674, %v3675
    %v3677 = vrot.slane %v3676, 1
    %v3678 = vadd.f32 %v3676, %v3677
    %v3679 = vsel %vm611, %v3634, %v3678
    %v3680 = vld [vmem:[%s3406 + $0x60] sm:$0xff]
    %v3681 = vld [vmem:[%s3406 + $0x68] sm:$0xff]
    %v3682 = vld [vmem:[%s3406 + $0x70] sm:$0xff]
    %v3683 = vld [vmem:[%s3406 + $0x78] sm:$0xff]
    %v3684 = vld [vmem:[%s3406 + $0x80] sm:$0x1]
    %v3685 = vlaneseq
    %v3686 = vshrl.u32 %v3685, 7
    %v3687 = vsub.s32 0, %v3686
    %v3688 = vrot.slane %v3684, %v3687
    %v3690 = vsel %vm280, %v3679, 0
    %3692 = vmatprep.subr.mxu0 0.0
    %3693 = vmatpush1.msra.mxu0 %v3680
    %3694 = vmatprep.subr.mxu0 0.0
    %3695 = vmatpush1.msra.mxu0 %v3681
    %3696 = vmatprep.subr.mxu0 0.0
    %3697 = vmatpush1.msra.mxu0 %v3682
    %3698 = vmatprep.subr.mxu0 0.0
    %3699 = vmatpush1.msra.mxu0 %v3683
    %3700 = vmatprep.subr.mxu0 0.0
    %3701 = vmatpush1.msra.mxu0 0.0
    %3702 = vmatprep.subr.mxu0 0.0
    %3703 = vmatpush1.msra.mxu0 0.0
    %3704 = vmatprep.subr.mxu0 0.0
    %3705 = vmatpush1.msra.mxu0 0.0
    %3706 = vmatprep.subr.mxu0 0.0
    %3707 = vmatpush1.msra.mxu0 0.0
    %3708 = vmatprep.subr.mxu0 0.0
    %3709 = vmatpush1.msra.mxu0 0.0
    %3710 = vmatprep.subr.mxu0 0.0
    %3711 = vmatpush1.msra.mxu0 0.0
    %3712 = vmatprep.subr.mxu0 0.0
    %3713 = vmatpush1.msra.mxu0 0.0
    %3714 = vmatprep.subr.mxu0 0.0
    %3715 = vmatpush1.msra.mxu0 0.0
    %3716 = vmatprep.subr.mxu0 0.0
    %3717 = vmatpush1.msra.mxu0 0.0
    %3718 = vmatprep.subr.mxu0 0.0
    %3719 = vmatpush1.msra.mxu0 0.0
    %3720 = vmatprep.subr.mxu0 0.0
    %3721 = vmatpush1.msra.mxu0 0.0
    %3722 = vmatprep.subr.mxu0 0.0
    %3723 = vmatpush1.msra.mxu0 0.0
    %3724 = vmatprep.subr.mxu0 0.0
    %3725 = vmatpush1.msra.mxu0 0.0
    %3726 = vmatprep.subr.mxu0 0.0
    %3727 = vmatpush1.msra.mxu0 0.0
    %3728 = vmatprep.subr.mxu0 0.0
    %3729 = vmatpush1.msra.mxu0 0.0
    %3730 = vmatprep.subr.mxu0 0.0
    %3731 = vmatpush1.msra.mxu0 0.0
    %3732 = vmatprep.subr.mxu0 0.0
    %3733 = vmatpush1.msra.mxu0 0.0
    %3734 = vmatprep.subr.mxu0 0.0
    %3735 = vmatpush1.msra.mxu0 0.0
    %3736 = vmatprep.subr.mxu0 0.0
    %3737 = vmatpush1.msra.mxu0 0.0
    %3738 = vmatprep.subr.mxu0 0.0
    %3739 = vmatpush1.msra.mxu0 0.0
    %3740 = vmatprep.subr.mxu0 0.0
    %3741 = vmatpush1.msra.mxu0 0.0
    %3742 = vmatprep.subr.mxu0 0.0
    %3743 = vmatpush1.msra.mxu0 0.0
    %3744 = vmatprep.subr.mxu0 0.0
    %3745 = vmatpush1.msra.mxu0 0.0
    %3746 = vmatprep.subr.mxu0 0.0
    %3747 = vmatpush1.msra.mxu0 0.0
    %3748 = vmatprep.subr.mxu0 0.0
    %3749 = vmatpush1.msra.mxu0 0.0
    %3750 = vmatprep.subr.mxu0 0.0
    %3751 = vmatpush1.msra.mxu0 0.0
    %3752 = vmatprep.subr.mxu0 0.0
    %3753 = vmatpush1.msra.mxu0 0.0
    %3754 = vmatprep.subr.mxu0 0.0
    %3755 = vmatpush1.msra.mxu0 0.0
    %3756 = vmatprep.mubr.f32.mxu0 0.0
    %3757 = vmatmul.mubr.f32.gmra.mrb[0].mxu0 %v3690
    %v3758 = vpop.f32.mrb[0].mxu0
    %v3759 = vadd.f32 %v3688, %v3758
    %v3760 = vpop.f32.mrb[0].mxu0
    %3761 = vdwg.mxu0
    %v3762 = vtanh.pop %v3759
    %v3763 = vpack.c.bf16 %v3319, %v3318
    %v3764 = vpack.c.bf16 %v3321, %v3320
    %v3765 = vpack.c.bf16 %v3323, %v3322
    %v3766 = vpack.c.bf16 %v3325, %v3324
    %v3767 = vpack.c.bf16 %v3327, %v3326
    %v3768 = vpack.c.bf16 %v3329, %v3328
    %v3769 = vpack.c.bf16 %v3331, %v3330
    %v3770 = vpack.c.bf16 %v3333, %v3332
    %v3771 = vld [vmem:[%s3406 + $0x88] sm:$0xff]
    %v3772 = vld [vmem:[%s3406 + $0x90] sm:$0xff]
    %v3773 = vld [vmem:[%s3406 + $0x98] sm:$0xff]
    %v3774 = vld [vmem:[%s3406 + $0xa0] sm:$0xff]
    %v3775 = vpack.c.bf16 %v3772, %v3771
    %v3776 = vpack.c.bf16 %v3774, %v3773
    %v3777 = vld [vmem:[%s3406 + $0xa8] sm:$0xff]
    %v3778 = vpack.c.bf16 %v3777, %v3777
    %v3780 = vsel %vm737, %v3778, 0
    %3782 = vmatprep.subr.bf16.mxu0 0
    %3783 = vmatpush1.bf16.msra.mxu0 %v3780
    %3784 = vmatprep.subr.bf16.mxu0 0
    %3785 = vmatpush1.bf16.msra.mxu0 0
    %3786 = vmatprep.subr.bf16.mxu0 0
    %3787 = vmatpush1.bf16.msra.mxu0 0
    %3788 = vmatprep.subr.bf16.mxu0 0
    %3789 = vmatpush1.bf16.msra.mxu0 0
    %3790 = vmatprep.subr.bf16.mxu0 0
    %3791 = vmatpush1.bf16.msra.mxu0 0
    %3792 = vmatprep.subr.bf16.mxu0 0
    %3793 = vmatpush1.bf16.msra.mxu0 0
    %3794 = vmatprep.subr.bf16.mxu0 0
    %3795 = vmatpush1.bf16.msra.mxu0 0
    %3796 = vmatprep.subr.bf16.mxu0 0
    %3797 = vmatpush1.bf16.msra.mxu0 0
    %3798 = vmatprep.subr.bf16.mxu0 0
    %3799 = vmatpush1.bf16.msra.mxu0 0
    %3800 = vmatprep.subr.bf16.mxu0 0
    %3801 = vmatpush1.bf16.msra.mxu0 0
    %3802 = vmatprep.subr.bf16.mxu0 0
    %3803 = vmatpush1.bf16.msra.mxu0 0
    %3804 = vmatprep.subr.bf16.mxu0 0
    %3805 = vmatpush1.bf16.msra.mxu0 0
    %3806 = vmatprep.subr.bf16.mxu0 0
    %3807 = vmatpush1.bf16.msra.mxu0 0
    %3808 = vmatprep.subr.bf16.mxu0 0
    %3809 = vmatpush1.bf16.msra.mxu0 0
    %3810 = vmatprep.subr.bf16.mxu0 0
    %3811 = vmatpush1.bf16.msra.mxu0 0
    %3812 = vmatprep.subr.bf16.mxu0 0
    %3813 = vmatpush1.bf16.msra.mxu0 0
    %3814 = vmatprep.mubr.bf16.mxu0 0
    %3815 = vmatmul.mubr.bf16.gmra.mrb[0].mxu0 %v714
    %v3816 = vpop.f32.mrb[0].mxu0
    %v3817 = vadd.f32 0.0, %v3816
    %v3818 = vpop.f32.mrb[0].mxu0
    %v3819 = vpop.f32.mrb[0].mxu0
    %v3820 = vadd.f32 0.0, %v3819
    %v3821 = vpop.f32.mrb[0].mxu0
    %3822 = vmatprep.mubr.bf16.mxu0 0
    %3823 = vmatmul.mubr.bf16.gmra.mrb[0].mxu0 %v717
    %v3824 = vpop.f32.mrb[0].mxu0
    %v3825 = vadd.f32 0.0, %v3824
    %v3826 = vpop.f32.mrb[0].mxu0
    %v3827 = vpop.f32.mrb[0].mxu0
    %v3828 = vadd.f32 0.0, %v3827
    %v3829 = vpop.f32.mrb[0].mxu0
    %3830 = vmatprep.mubr.bf16.mxu0 0
    %3831 = vmatmul.mubr.bf16.gmra.mrb[0].mxu0 %v720
    %v3832 = vpop.f32.mrb[0].mxu0
    %v3833 = vadd.f32 0.0, %v3832
    %v3834 = vpop.f32.mrb[0].mxu0
    %v3835 = vpop.f32.mrb[0].mxu0
    %v3836 = vadd.f32 0.0, %v3835
    %v3837 = vpop.f32.mrb[0].mxu0
    %3838 = vmatprep.mubr.bf16.mxu0 0
    %3839 = vmatmul.mubr.bf16.gmra.mrb[0].mxu0 %v723
    %v3840 = vpop.f32.mrb[0].mxu0
    %v3841 = vadd.f32 0.0, %v3840
    %v3842 = vpop.f32.mrb[0].mxu0
    %v3843 = vpop.f32.mrb[0].mxu0
    %v3844 = vadd.f32 0.0, %v3843
    %v3845 = vpop.f32.mrb[0].mxu0
    %3846 = vmatprep.mubr.bf16.mxu0 0
    %3847 = vmatmul.mubr.bf16.gmra.mrb[0].mxu0 %v726
    %v3848 = vpop.f32.mrb[0].mxu0
    %v3849 = vadd.f32 0.0, %v3848
    %v3850 = vpop.f32.mrb[0].mxu0
    %v3851 = vpop.f32.mrb[0].mxu0
    %v3852 = vadd.f32 0.0, %v3851
    %v3853 = vpop.f32.mrb[0].mxu0
    %3854 = vmatprep.mubr.bf16.mxu0 0
    %3855 = vmatmul.mubr.bf16.gmra.mrb[0].mxu0 %v729
    %v3856 = vpop.f32.mrb[0].mxu0
    %v3857 = vadd.f32 0.0, %v3856
    %v3858 = vpop.f32.mrb[0].mxu0
    %v3859 = vpop.f32.mrb[0].mxu0
    %v3860 = vadd.f32 0.0, %v3859
    %v3861 = vpop.f32.mrb[0].mxu0
    %3862 = vmatprep.mubr.bf16.mxu0 0
    %3863 = vmatmul.mubr.bf16.gmra.mrb[0].mxu0 %v732
    %v3864 = vpop.f32.mrb[0].mxu0
    %v3865 = vadd.f32 0.0, %v3864
    %v3866 = vpop.f32.mrb[0].mxu0
    %v3867 = vpop.f32.mrb[0].mxu0
    %v3868 = vadd.f32 0.0, %v3867
    %v3869 = vpop.f32.mrb[0].mxu0
    %3870 = vmatprep.mubr.bf16.mxu0 0
    %3871 = vmatmul.mubr.bf16.gmra.mrb[0].mxu0 %v735
    %v3872 = vpop.f32.mrb[0].mxu0
    %v3873 = vadd.f32 0.0, %v3872
    %v3874 = vpop.f32.mrb[0].mxu0
    %v3875 = vpop.f32.mrb[0].mxu0
    %v3876 = vadd.f32 0.0, %v3875
    %v3877 = vpop.f32.mrb[0].mxu0
    %3878 = vdwg.mxu0
    %v3880 = vsel %vm280, %v3763, 0
    %v3883 = vsel %vm280, %v3764, 0
    %v3886 = vsel %vm280, %v3765, 0
    %v3889 = vsel %vm280, %v3766, 0
    %v3892 = vsel %vm280, %v3767, 0
    %v3895 = vsel %vm280, %v3768, 0
    %v3898 = vsel %vm280, %v3769, 0
    %v3901 = vsel %vm280, %v3770, 0
    %3903 = vmatprep.subr.bf16.mxu0 0
    %3904 = vmatpush1.bf16.msra.mxu0 %v3775
    %3905 = vmatprep.subr.bf16.mxu0 0
    %3906 = vmatpush1.bf16.msra.mxu0 %v3776
    %3907 = vmatprep.subr.bf16.mxu0 0
    %3908 = vmatpush1.bf16.msra.mxu0 0
    %3909 = vmatprep.subr.bf16.mxu0 0
    %3910 = vmatpush1.bf16.msra.mxu0 0
    %3911 = vmatprep.subr.bf16.mxu0 0
    %3912 = vmatpush1.bf16.msra.mxu0 0
    %3913 = vmatprep.subr.bf16.mxu0 0
    %3914 = vmatpush1.bf16.msra.mxu0 0
    %3915 = vmatprep.subr.bf16.mxu0 0
    %3916 = vmatpush1.bf16.msra.mxu0 0
    %3917 = vmatprep.subr.bf16.mxu0 0
    %3918 = vmatpush1.bf16.msra.mxu0 0
    %3919 = vmatprep.subr.bf16.mxu0 0
    %3920 = vmatpush1.bf16.msra.mxu0 0
    %3921 = vmatprep.subr.bf16.mxu0 0
    %3922 = vmatpush1.bf16.msra.mxu0 0
    %3923 = vmatprep.subr.bf16.mxu0 0
    %3924 = vmatpush1.bf16.msra.mxu0 0
    %3925 = vmatprep.subr.bf16.mxu0 0
    %3926 = vmatpush1.bf16.msra.mxu0 0
    %3927 = vmatprep.subr.bf16.mxu0 0
    %3928 = vmatpush1.bf16.msra.mxu0 0
    %3929 = vmatprep.subr.bf16.mxu0 0
    %3930 = vmatpush1.bf16.msra.mxu0 0
    %3931 = vmatprep.subr.bf16.mxu0 0
    %3932 = vmatpush1.bf16.msra.mxu0 0
    %3933 = vmatprep.subr.bf16.mxu0 0
    %3934 = vmatpush1.bf16.msra.mxu0 0
    %3935 = vmatprep.mubr.bf16.mxu0 0
    %3936 = vmatmul.mubr.bf16.gmra.mrb[0].mxu0 %v3880
    %v3937 = vpop.f32.mrb[0].mxu0
    %v3938 = vadd.f32 %v3817, %v3937
    %v3939 = vpop.f32.mrb[0].mxu0
    %v3940 = vpop.f32.mrb[0].mxu0
    %v3941 = vadd.f32 %v3820, %v3940
    %v3942 = vpop.f32.mrb[0].mxu0
    %3943 = vmatprep.mubr.bf16.mxu0 0
    %3944 = vmatmul.mubr.bf16.gmra.mrb[0].mxu0 %v3883
    %v3945 = vpop.f32.mrb[0].mxu0
    %v3946 = vadd.f32 %v3825, %v3945
    %v3947 = vpop.f32.mrb[0].mxu0
    %v3948 = vpop.f32.mrb[0].mxu0
    %v3949 = vadd.f32 %v3828, %v3948
    %v3950 = vpop.f32.mrb[0].mxu0
    %3951 = vmatprep.mubr.bf16.mxu0 0
    %3952 = vmatmul.mubr.bf16.gmra.mrb[0].mxu0 %v3886
    %v3953 = vpop.f32.mrb[0].mxu0
    %v3954 = vadd.f32 %v3833, %v3953
    %v3955 = vpop.f32.mrb[0].mxu0
    %v3956 = vpop.f32.mrb[0].mxu0
    %v3957 = vadd.f32 %v3836, %v3956
    %v3958 = vpop.f32.mrb[0].mxu0
    %3959 = vmatprep.mubr.bf16.mxu0 0
    %3960 = vmatmul.mubr.bf16.gmra.mrb[0].mxu0 %v3889
    %v3961 = vpop.f32.mrb[0].mxu0
    %v3962 = vadd.f32 %v3841, %v3961
    %v3963 = vpop.f32.mrb[0].mxu0
    %v3964 = vpop.f32.mrb[0].mxu0
    %v3965 = vadd.f32 %v3844, %v3964
    %v3966 = vpop.f32.mrb[0].mxu0
    %3967 = vmatprep.mubr.bf16.mxu0 0
    %3968 = vmatmul.mubr.bf16.gmra.mrb[0].mxu0 %v3892
    %v3969 = vpop.f32.mrb[0].mxu0
    %v3970 = vadd.f32 %v3849, %v3969
    %v3971 = vpop.f32.mrb[0].mxu0
    %v3972 = vpop.f32.mrb[0].mxu0
    %v3973 = vadd.f32 %v3852, %v3972
    %v3974 = vpop.f32.mrb[0].mxu0
    %3975 = vmatprep.mubr.bf16.mxu0 0
    %3976 = vmatmul.mubr.bf16.gmra.mrb[0].mxu0 %v3895
    %v3977 = vpop.f32.mrb[0].mxu0
    %v3978 = vadd.f32 %v3857, %v3977
    %v3979 = vpop.f32.mrb[0].mxu0
    %v3980 = vpop.f32.mrb[0].mxu0
    %v3981 = vadd.f32 %v3860, %v3980
    %v3982 = vpop.f32.mrb[0].mxu0
    %3983 = vmatprep.mubr.bf16.mxu0 0
    %3984 = vmatmul.mubr.bf16.gmra.mrb[0].mxu0 %v3898
    %v3985 = vpop.f32.mrb[0].mxu0
    %v3986 = vadd.f32 %v3865, %v3985
    %v3987 = vpop.f32.mrb[0].mxu0
    %v3988 = vpop.f32.mrb[0].mxu0
    %v3989 = vadd.f32 %v3868, %v3988
    %v3990 = vpop.f32.mrb[0].mxu0
    %3991 = vmatprep.mubr.bf16.mxu0 0
    %3992 = vmatmul.mubr.bf16.gmra.mrb[0].mxu0 %v3901
    %v3993 = vpop.f32.mrb[0].mxu0
    %v3994 = vadd.f32 %v3873, %v3993
    %v3995 = vpop.f32.mrb[0].mxu0
    %v3996 = vpop.f32.mrb[0].mxu0
    %v3997 = vadd.f32 %v3876, %v3996
    %v3998 = vpop.f32.mrb[0].mxu0
    %3999 = vdwg.mxu0
    %v4000 = vld [vmem:[%s3406 + $0xb0] sm:$0x1]
    %v4001 = vlaneseq
    %v4002 = vshrl.u32 %v4001, 7
    %v4003 = vsub.s32 0, %v4002
    %v4004 = vrot.slane %v4000, %v4003
    %v4005 = vadd.f32 %v3938, %v4004
    %v4006 = vadd.f32 %v3941, %v4004
    %v4007 = vadd.f32 %v3946, %v4004
    %v4008 = vadd.f32 %v3949, %v4004
    %v4009 = vadd.f32 %v3954, %v4004
    %v4010 = vadd.f32 %v3957, %v4004
    %v4011 = vadd.f32 %v3962, %v4004
    %v4012 = vadd.f32 %v3965, %v4004
    %v4013 = vadd.f32 %v3970, %v4004
    %v4014 = vadd.f32 %v3973, %v4004
    %v4015 = vadd.f32 %v3978, %v4004
    %v4016 = vadd.f32 %v3981, %v4004
    %v4017 = vadd.f32 %v3986, %v4004
    %v4018 = vadd.f32 %v3989, %v4004
    %v4019 = vadd.f32 %v3994, %v4004
    %v4020 = vadd.f32 %v3997, %v4004
    %v4021 = vsel %vm280, %v4005, 0.0
    %v4022 = vsel %vm280, %v4006, 0.0
    %v4023 = vadd.f32 %v4021, %v4022
    %v4024 = vsel %vm280, %v4007, 0.0
    %v4025 = vadd.f32 %v4023, %v4024
    %v4026 = vsel %vm280, %v4008, 0.0
    %v4027 = vadd.f32 %v4025, %v4026
    %v4028 = vsel %vm280, %v4009, 0.0
    %v4029 = vadd.f32 %v4027, %v4028
    %v4030 = vsel %vm280, %v4010, 0.0
    %v4031 = vadd.f32 %v4029, %v4030
    %v4032 = vsel %vm280, %v4011, 0.0
    %v4033 = vadd.f32 %v4031, %v4032
    %v4034 = vsel %vm280, %v4012, 0.0
    %v4035 = vadd.f32 %v4033, %v4034
    %v4036 = vrot.slane %v4035, 4
    %v4037 = vadd.f32 %v4035, %v4036
    %v4038 = vrot.slane %v4037, 2
    %v4039 = vadd.f32 %v4037, %v4038
    %v4040 = vrot.slane %v4039, 1
    %v4041 = vadd.f32 %v4039, %v4040
    %v4042 = vmul.f32 %v4041, %v302
    %v4043 = vsub.f32 %v4005, %v4042
    %v4044 = vsub.f32 %v4006, %v4042
    %v4045 = vsub.f32 %v4007, %v4042
    %v4046 = vsub.f32 %v4008, %v4042
    %v4047 = vsub.f32 %v4009, %v4042
    %v4048 = vsub.f32 %v4010, %v4042
    %v4049 = vsub.f32 %v4011, %v4042
    %v4050 = vsub.f32 %v4012, %v4042
    %v4051 = vmul.f32 %v4043, %v4043
    %v4052 = vmul.f32 %v4044, %v4044
    %v4053 = vmul.f32 %v4045, %v4045
    %v4054 = vmul.f32 %v4046, %v4046
    %v4055 = vmul.f32 %v4047, %v4047
    %v4056 = vmul.f32 %v4048, %v4048
    %v4057 = vmul.f32 %v4049, %v4049
    %v4058 = vmul.f32 %v4050, %v4050
    %v4059 = vsel %vm280, %v4051, 0.0
    %v4060 = vsel %vm280, %v4052, 0.0
    %v4061 = vadd.f32 %v4059, %v4060
    %v4062 = vsel %vm280, %v4053, 0.0
    %v4063 = vadd.f32 %v4061, %v4062
    %v4064 = vsel %vm280, %v4054, 0.0
    %v4065 = vadd.f32 %v4063, %v4064
    %v4066 = vsel %vm280, %v4055, 0.0
    %v4067 = vadd.f32 %v4065, %v4066
    %v4068 = vsel %vm280, %v4056, 0.0
    %v4069 = vadd.f32 %v4067, %v4068
    %v4070 = vsel %vm280, %v4057, 0.0
    %v4071 = vadd.f32 %v4069, %v4070
    %v4072 = vsel %vm280, %v4058, 0.0
    %v4073 = vadd.f32 %v4071, %v4072
    %v4074 = vrot.slane %v4073, 4
    %v4075 = vadd.f32 %v4073, %v4074
    %v4076 = vrot.slane %v4075, 2
    %v4077 = vadd.f32 %v4075, %v4076
    %v4078 = vrot.slane %v4077, 1
    %v4079 = vadd.f32 %v4077, %v4078
    %v4080 = vmul.f32 %v4079, %v302
    %v4081 = vadd.f32 %v4080, 1e-05
    %v4082 = vrsqrt.pop %v4081
    %v4083 = vmul.f32 %v4043, %v4082
    %v4084 = vmul.f32 %v4044, %v4082
    %v4085 = vmul.f32 %v4045, %v4082
    %v4086 = vmul.f32 %v4046, %v4082
    %v4087 = vmul.f32 %v4047, %v4082
    %v4088 = vmul.f32 %v4048, %v4082
    %v4089 = vmul.f32 %v4049, %v4082
    %v4090 = vmul.f32 %v4050, %v4082
    %v4091 = vlaneseq
    %v4092 = vshrl.u32 %v4091, 7
    %v4093 = vsub.s32 0, %v4092
    %v4094 = vrot.slane %v3762, %v4093
    %v4095 = vmul.f32 %v4094, %v4083
    %v4096 = vmul.f32 %v4094, %v4084
    %v4097 = vmul.f32 %v4094, %v4085
    %v4098 = vmul.f32 %v4094, %v4086
    %v4099 = vmul.f32 %v4094, %v4087
    %v4100 = vmul.f32 %v4094, %v4088
    %v4101 = vmul.f32 %v4094, %v4089
    %v4102 = vmul.f32 %v4094, %v4090
    %4104 = vrot.lane.b32.xlu0 %v4094, 96
    %v4105 = vpop.permute.xlu0 %4104
    %v4107 = vadd.f32 %v4095, %v4105
    %v4108 = vadd.f32 %v4096, %v4105
    %v4109 = vadd.f32 %v4097, %v4105
    %v4110 = vadd.f32 %v4098, %v4105
    %v4111 = vadd.f32 %v4099, %v4105
    %v4112 = vadd.f32 %v4100, %v4105
    %v4113 = vadd.f32 %v4101, %v4105
    %v4114 = vadd.f32 %v4102, %v4105
    %v4115 = vmax.f32 %v4107, 0.0
    %v4116 = vmax.f32 %v4108, 0.0
    %v4117 = vmax.f32 %v4109, 0.0
    %v4118 = vmax.f32 %v4110, 0.0
    %v4119 = vmax.f32 %v4111, 0.0
    %v4120 = vmax.f32 %v4112, 0.0
    %v4121 = vmax.f32 %v4113, 0.0
    %v4122 = vmax.f32 %v4114, 0.0
    %v4123 = vadd.f32 %v3318, %v4115
    %v4124 = vadd.f32 %v3319, %v4116
    %v4125 = vadd.f32 %v3320, %v4117
    %v4126 = vadd.f32 %v3321, %v4118
    %v4127 = vadd.f32 %v3322, %v4119
    %v4128 = vadd.f32 %v3323, %v4120
    %v4129 = vadd.f32 %v3324, %v4121
    %v4130 = vadd.f32 %v3325, %v4122
    %v4131 = vsel %vm280, %v4013, 0.0
    %v4132 = vsel %vm280, %v4014, 0.0
    %v4133 = vadd.f32 %v4131, %v4132
    %v4134 = vsel %vm280, %v4015, 0.0
    %v4135 = vadd.f32 %v4133, %v4134
    %v4136 = vsel %vm280, %v4016, 0.0
    %v4137 = vadd.f32 %v4135, %v4136
    %v4138 = vsel %vm280, %v4017, 0.0
    %v4139 = vadd.f32 %v4137, %v4138
    %v4140 = vsel %vm280, %v4018, 0.0
    %v4141 = vadd.f32 %v4139, %v4140
    %v4142 = vsel %vm280, %v4019, 0.0
    %v4143 = vadd.f32 %v4141, %v4142
    %v4144 = vsel %vm280, %v4020, 0.0
    %v4145 = vadd.f32 %v4143, %v4144
    %v4146 = vrot.slane %v4145, 4
    %v4147 = vadd.f32 %v4145, %v4146
    %v4148 = vrot.slane %v4147, 2
    %v4149 = vadd.f32 %v4147, %v4148
    %v4150 = vrot.slane %v4149, 1
    %v4151 = vadd.f32 %v4149, %v4150
    %v4152 = vmul.f32 %v4151, %v302
    %v4153 = vsub.f32 %v4013, %v4152
    %v4154 = vsub.f32 %v4014, %v4152
    %v4155 = vsub.f32 %v4015, %v4152
    %v4156 = vsub.f32 %v4016, %v4152
    %v4157 = vsub.f32 %v4017, %v4152
    %v4158 = vsub.f32 %v4018, %v4152
    %v4159 = vsub.f32 %v4019, %v4152
    %v4160 = vsub.f32 %v4020, %v4152
    %v4161 = vmul.f32 %v4153, %v4153
    %v4162 = vmul.f32 %v4154, %v4154
    %v4163 = vmul.f32 %v4155, %v4155
    %v4164 = vmul.f32 %v4156, %v4156
    %v4165 = vmul.f32 %v4157, %v4157
    %v4166 = vmul.f32 %v4158, %v4158
    %v4167 = vmul.f32 %v4159, %v4159
    %v4168 = vmul.f32 %v4160, %v4160
    %v4169 = vsel %vm280, %v4161, 0.0
    %v4170 = vsel %vm280, %v4162, 0.0
    %v4171 = vadd.f32 %v4169, %v4170
    %v4172 = vsel %vm280, %v4163, 0.0
    %v4173 = vadd.f32 %v4171, %v4172
    %v4174 = vsel %vm280, %v4164, 0.0
    %v4175 = vadd.f32 %v4173, %v4174
    %v4176 = vsel %vm280, %v4165, 0.0
    %v4177 = vadd.f32 %v4175, %v4176
    %v4178 = vsel %vm280, %v4166, 0.0
    %v4179 = vadd.f32 %v4177, %v4178
    %v4180 = vsel %vm280, %v4167, 0.0
    %v4181 = vadd.f32 %v4179, %v4180
    %v4182 = vsel %vm280, %v4168, 0.0
    %v4183 = vadd.f32 %v4181, %v4182
    %v4184 = vrot.slane %v4183, 4
    %v4185 = vadd.f32 %v4183, %v4184
    %v4186 = vrot.slane %v4185, 2
    %v4187 = vadd.f32 %v4185, %v4186
    %v4188 = vrot.slane %v4187, 1
    %v4189 = vadd.f32 %v4187, %v4188
    %v4190 = vmul.f32 %v4189, %v302
    %v4191 = vadd.f32 %v4190, 1e-05
    %v4192 = vrsqrt.pop %v4191
    %v4193 = vmul.f32 %v4153, %v4192
    %v4194 = vmul.f32 %v4154, %v4192
    %v4195 = vmul.f32 %v4155, %v4192
    %v4196 = vmul.f32 %v4156, %v4192
    %v4197 = vmul.f32 %v4157, %v4192
    %v4198 = vmul.f32 %v4158, %v4192
    %v4199 = vmul.f32 %v4159, %v4192
    %v4200 = vmul.f32 %v4160, %v4192
    %v4201 = vlaneseq
    %v4202 = vshrl.u32 %v4201, 7
    %v4203 = vsub.s32 1, %v4202
    %v4204 = vrot.slane %v3762, %v4203
    %v4205 = vmul.f32 %v4204, %v4193
    %v4206 = vmul.f32 %v4204, %v4194
    %v4207 = vmul.f32 %v4204, %v4195
    %v4208 = vmul.f32 %v4204, %v4196
    %v4209 = vmul.f32 %v4204, %v4197
    %v4210 = vmul.f32 %v4204, %v4198
    %v4211 = vmul.f32 %v4204, %v4199
    %v4212 = vmul.f32 %v4204, %v4200
    %4214 = vrot.lane.b32.xlu0 %v4204, 96
    %v4215 = vpop.permute.xlu0 %4214
    %v4217 = vadd.f32 %v4205, %v4215
    %v4218 = vadd.f32 %v4206, %v4215
    %v4219 = vadd.f32 %v4207, %v4215
    %v4220 = vadd.f32 %v4208, %v4215
    %v4221 = vadd.f32 %v4209, %v4215
    %v4222 = vadd.f32 %v4210, %v4215
    %v4223 = vadd.f32 %v4211, %v4215
    %v4224 = vadd.f32 %v4212, %v4215
    %v4225 = vmax.f32 %v4217, 0.0
    %v4226 = vmax.f32 %v4218, 0.0
    %v4227 = vmax.f32 %v4219, 0.0
    %v4228 = vmax.f32 %v4220, 0.0
    %v4229 = vmax.f32 %v4221, 0.0
    %v4230 = vmax.f32 %v4222, 0.0
    %v4231 = vmax.f32 %v4223, 0.0
    %v4232 = vmax.f32 %v4224, 0.0
    %v4233 = vadd.f32 %v3326, %v4225
    %v4234 = vadd.f32 %v3327, %v4226
    %v4235 = vadd.f32 %v3328, %v4227
    %v4236 = vadd.f32 %v3329, %v4228
    %v4237 = vadd.f32 %v3330, %v4229
    %v4238 = vadd.f32 %v3331, %v4230
    %v4239 = vadd.f32 %v3332, %v4231
    %v4240 = vadd.f32 %v3333, %v4232
    %4241 = vst.msk [vmem:[#allocation2] sm:$0xff] %vm280, %v4123
    %4242 = vst.msk [vmem:[#allocation2 + $0x8] sm:$0xff] %vm280, %v4124
    %4243 = vst.msk [vmem:[#allocation2 + $0x10] sm:$0xff] %vm280, %v4125
    %4244 = vst.msk [vmem:[#allocation2 + $0x18] sm:$0xff] %vm280, %v4126
    %4245 = vst.msk [vmem:[#allocation2 + $0x20] sm:$0xff] %vm280, %v4127
    %4246 = vst.msk [vmem:[#allocation2 + $0x28] sm:$0xff] %vm280, %v4128
    %4247 = vst.msk [vmem:[#allocation2 + $0x30] sm:$0xff] %vm280, %v4129
    %4248 = vst.msk [vmem:[#allocation2 + $0x38] sm:$0xff] %vm280, %v4130
    %4249 = vst.msk [vmem:[#allocation2 + $0x40] sm:$0xff] %vm280, %v4233
    %4250 = vst.msk [vmem:[#allocation2 + $0x48] sm:$0xff] %vm280, %v4234
    %4251 = vst.msk [vmem:[#allocation2 + $0x50] sm:$0xff] %vm280, %v4235
    %4252 = vst.msk [vmem:[#allocation2 + $0x58] sm:$0xff] %vm280, %v4236
    %4253 = vst.msk [vmem:[#allocation2 + $0x60] sm:$0xff] %vm280, %v4237
    %4254 = vst.msk [vmem:[#allocation2 + $0x68] sm:$0xff] %vm280, %v4238
    %4255 = vst.msk [vmem:[#allocation2 + $0x70] sm:$0xff] %vm280, %v4239
    %4256 = vst.msk [vmem:[#allocation2 + $0x78] sm:$0xff] %vm280, %v4240
    %4259 = vrot.lane.b32.xlu0 %v3583, 1
    %v4260 = vpop.permute.xlu0 %4259
    %4261 = vrot.lane.b32.xlu0 %v3588, 1
    %v4262 = vpop.permute.xlu0 %4261
    %v4265 = vsel %vm523, %v514, %v4260
    %v4266 = vsel %vm523, %v519, %v4262
    %vm4267 = vcmask 15360
    %4268 = vst.msk [vmem:[%s7] sm:$0xff] %vm4267, %v4265
    %4269 = vst.msk [vmem:[%s7 + $0x8] sm:$0xff] %vm4267, %v4266
    // Predicated region
    $region26: #{multihop_forward.1} parent=1 // pred_check
      _
    $region27: #{multihop_forward.1} parent=1 // pred_check_branch
      %4271 = sbr.rel (0) target = $region29
    $region28: #{multihop_forward.1} parent=1 // pred_region
      %s4273 = ssub.s32 2048, 2048
      %4274 = vsyncadd [#allocation3], %s4273
      %s4275 = sshll.u32 [#allocation2], 4
      %s4276 = int_to_ptr.vmem [resolvable:$true] %s4275
      %4281 = dma.vmem_to_hbm [thread:$0]  %s4276, 2048, %s6, [#allocation3], 128, 128, 8
    $region29: #{multihop_forward.1} parent=1 // pred_fallthru
      _
    // Predicated region
    $region30: #{multihop_forward.1} parent=1 // pred_check
      _
    $region31: #{multihop_forward.1} parent=1 // pred_check_branch
      %4283 = sbr.rel (0) target = $region33
    $region32: #{multihop_forward.1} parent=1 // pred_region
      _
    $region33: #{multihop_forward.1} parent=1 // pred_fallthru
      _
    // Predicated region
    $region34: #{multihop_forward.1} parent=1 // pred_check
      _
    $region35: #{multihop_forward.1} parent=1 // pred_check_branch
      %4285 = sbr.rel (0) target = $region37
    $region36: #{multihop_forward.1} parent=1 // pred_region
      %4286 = dma.done [#allocation3], 2048
    $region37: #{multihop_forward.1} parent=1 // pred_fallthru
      _
    // Predicated region
    $region38: #{multihop_forward.1} parent=1 // pred_check
      _
    $region39: #{multihop_forward.1} parent=1 // pred_check_branch
      %4288 = sbr.rel (0) target = $region41
    $region40: #{multihop_forward.1} parent=1 // pred_region
      _
    $region41: #{multihop_forward.1} parent=1 // pred_fallthru
      _
    %4289 = vsyncpa [#allocation3], 1

</llo_original>
